<compile_context>
chip_gen: v5e
topology: v5e:2x2
jax: 0.10.0
libtpu: 0.0.40
codegen_flags: <defaults>
</compile_context>

<pallas_src>
import functools

import jax
import jax.numpy as jnp
from jax import lax
from jax.experimental import pallas as pl
from jax.experimental.pallas import tpu as pltpu


# ----------------------------------------------------------------------------
# Device / tiling helpers
# ----------------------------------------------------------------------------
def _vmem_limit_bytes():
    """~75% of physical VMEM: 96 MiB-class on v5e/v6e, 48 MiB-class on v7x."""
    cap = None
    try:
        cap = getattr(pltpu.get_tpu_info(), "vmem_capacity_bytes", None)
    except Exception:
        cap = None
    if not cap:
        cap = 64 * 1024 * 1024  # conservative fallback (v7x per-core VMEM)
    return int(cap) * 3 // 4


def _min_sublane_tile(dtype):
    """Minimum useful second-to-last tile: 8 (f32), 16 (bf16), 32 (int8/fp8)."""
    itemsize = jnp.dtype(dtype).itemsize
    return max(8, 32 // max(itemsize, 1))


def _largest_divisor_tile(dim, max_tile, min_tile):
    """Largest power-of-two multiple of min_tile that divides dim, <= max_tile."""
    best = None
    t = min_tile
    while t <= min(dim, max_tile):
        if dim % t == 0:
            best = t
        t *= 2
    if best is not None:
        return best
    # TODO(synk): ragged dims would need pl.cdiv grid + remainder masking; the
    # full-extent fallback is only hit for awkward (non-multiple-of-min) dims.
    return dim


def _fit_tile(dim, cap, min_tile, fits):
    """Pick the largest legal tile <= cap, shrinking (by 2) until it fits VMEM."""
    t = _largest_divisor_tile(dim, cap, min_tile)
    while t > min_tile and t % (2 * min_tile) == 0 and not fits(t):
        t //= 2
    return t


def _resolve_mxu_dtype(in_dtype, mxu_dtype):
    """MXU operand dtype: requested dtype, but never upcast narrow inputs."""
    if mxu_dtype is None:
        return in_dtype
    if jnp.dtype(in_dtype).itemsize <= jnp.dtype(mxu_dtype).itemsize:
        return in_dtype
    return mxu_dtype


# ----------------------------------------------------------------------------
# Kernel 1: module-faithful (output, attn), tiled over Lq only.
# ----------------------------------------------------------------------------
def _attn_probs_kernel(q_ref, k_ref, v_ref, out_ref, attn_ref, *, inv_temp, mxu_dtype):
    # Scale q by 1/temperature in f32 (accuracy), then round operands to the
    # MXU dtype (bf16 by default): MXU peak is bf16 and f32 K/V doubles DMA.
    q = (q_ref[...].astype(jnp.float32) * inv_temp).astype(mxu_dtype)   # [tq, D]
    k = k_ref[...].astype(mxu_dtype)                                     # [Lk, D]

    # Contract D of q with D of k -- no explicit k.T (avoids an XLU transpose).
    s = lax.dot_general(q, k, (((1,), (1,)), ((), ())),
                        preferred_element_type=jnp.float32)              # [tq, Lk]

    # TODO(synk): mask path (masked_fill(mask == 0, -1e9)) not wired; only the
    # module's default mask=None path is implemented.

    # Numerically stable softmax; statistics in f32; exact reciprocal (the
    # [tq,1] EUP cost is negligible, approx only cost accuracy).
    m = jnp.max(s, axis=-1, keepdims=True)
    e = jnp.exp(s - m)
    denom = jnp.sum(e, axis=-1, keepdims=True)
    p = e * pl.reciprocal(denom)                                          # [tq, Lk]

    # TODO(synk): nn.Dropout(0.1) is identity in eval mode; training-mode
    # dropout (pltpu.prng_*) intentionally not applied.

    attn_ref[...] = p.astype(attn_ref.dtype)
    out_ref[...] = jnp.dot(p.astype(mxu_dtype), v_ref[...].astype(mxu_dtype),
                           preferred_element_type=jnp.float32).astype(out_ref.dtype)


def attention_with_probs(q, k, v, temperature, *,
                         mxu_dtype=jnp.bfloat16, attn_dtype=None):
    """q: [Lq, D], k: [Lk, D], v: [Lk, Dv] -> (output [Lq, Dv], attn [Lq, Lk]).

    attn_dtype defaults to q.dtype (module-faithful); pass jnp.bfloat16 to
    halve the O(Lq*Lk) attn HBM writeback when callers tolerate it.
    """
    Lq, D = q.shape
    Lk, Dk = k.shape
    assert D == Dk, "q and k must share feature dim"
    Dv = v.shape[1]

    out_dtype = q.dtype
    attn_dtype = jnp.dtype(attn_dtype) if attn_dtype is not None else jnp.dtype(q.dtype)
    mxu = _resolve_mxu_dtype(q.dtype, mxu_dtype)
    min_tile = _min_sublane_tile(q.dtype)
    in_bytes = jnp.dtype(q.dtype).itemsize
    budget = _vmem_limit_bytes()

    # >= 2 q-tiles when possible (v7x has 2 TensorCores), tq capped at 256 so
    # the [tq, Lk] f32 softmax intermediates don't spill the vreg file.
    cap = min(256, Lq // 2 if Lq >= 2 * min_tile else Lq)

    def fits(t):
        return (Lk * (D + Dv) * in_bytes                      # resident K/V (Buffered(1))
                + 2 * t * D * in_bytes                        # q (double-buffered)
                + 2 * t * Dv * jnp.dtype(out_dtype).itemsize  # out
                + 2 * t * Lk * attn_dtype.itemsize            # attn
                ) <= budget

    tq = _fit_tile(Lq, cap, min_tile, fits)

    kernel = functools.partial(_attn_probs_kernel,
                               inv_temp=1.0 / float(temperature), mxu_dtype=mxu)
    out_shapes = (
        jax.ShapeDtypeStruct((Lq, Dv), out_dtype),   # output
        jax.ShapeDtypeStruct((Lq, Lk), attn_dtype),  # attn
    )

    def call(kv_pipeline_mode):
        kv_kwargs = {} if kv_pipeline_mode is None else dict(pipeline_mode=kv_pipeline_mode)
        fn = pl.pallas_call(
            kernel,
            out_shape=out_shapes,
            grid=(Lq // tq,),
            in_specs=[
                pl.BlockSpec((tq, D), lambda i: (i, 0)),
                # K/V blocks are constant across the grid: fetched once,
                # single-buffered to halve VMEM residency (matters on v7x).
                pl.BlockSpec((Lk, D), lambda i: (0, 0), **kv_kwargs),
                pl.BlockSpec((Lk, Dv), lambda i: (0, 0), **kv_kwargs),
            ],
            out_specs=(
                pl.BlockSpec((tq, Dv), lambda i: (i, 0)),
                pl.BlockSpec((tq, Lk), lambda i: (i, 0)),
            ),
            compiler_params=pltpu.CompilerParams(
                dimension_semantics=("parallel",),      # megacore sharding on v7x
                vmem_limit_bytes=budget),
        )
        return fn(q, k, v)

    try:
        return call(pl.Buffered(1))
    except Exception:
        # Fallback if single-buffering constant blocks is rejected by this jax.
        return call(None)


# ----------------------------------------------------------------------------
# Kernel 2: flash-style (output only), tiled over (Lq, Lk) with online softmax.
# ----------------------------------------------------------------------------
def _flash_kernel(q_ref, k_ref, v_ref, out_ref, m_sc, l_sc, acc_sc, *,
                  inv_temp, mxu_dtype):
    ki = pl.program_id(1)

    @pl.when(ki == 0)
    def _():
        m_sc[...] = jnp.full_like(m_sc, -jnp.inf)
        l_sc[...] = jnp.zeros_like(l_sc)
        acc_sc[...] = jnp.zeros_like(acc_sc)

    q = (q_ref[...].astype(jnp.float32) * inv_temp).astype(mxu_dtype)    # [tq, D]
    k = k_ref[...].astype(mxu_dtype)                                      # [tk, D]
    s = lax.dot_general(q, k, (((1,), (1,)), ((), ())),
                        preferred_element_type=jnp.float32)               # [tq, tk]

    # TODO(synk): mask path not wired (mask=None default path only); with
    # masking, alpha = exp(-inf - -inf) would need a guard for fully-masked rows.

    m_prev = m_sc[...]
    m_new = jnp.maximum(m_prev, jnp.max(s, axis=-1, keepdims=True))
    alpha = jnp.exp(m_prev - m_new)
    p = jnp.exp(s - m_new)                                                 # f32 stats
    l_sc[...] = alpha * l_sc[...] + jnp.sum(p, axis=-1, keepdims=True)
    acc_sc[...] = alpha * acc_sc[...] + jnp.dot(
        p.astype(mxu_dtype), v_ref[...].astype(mxu_dtype),
        preferred_element_type=jnp.float32)
    m_sc[...] = m_new

    @pl.when(ki == pl.num_programs(1) - 1)
    def _():
        # Exact reciprocal: runs once per q block, cost negligible.
        out_ref[...] = (acc_sc[...] * pl.reciprocal(l_sc[...])).astype(out_ref.dtype)


def flash_attention(q, k, v, temperature, *, mxu_dtype=jnp.bfloat16):
    """q: [Lq, D], k: [Lk, D], v: [Lk, Dv] -> output [Lq, Dv] (no attn writeback)."""
    Lq, D = q.shape
    Lk, Dk = k.shape
    assert D == Dk, "q and k must share feature dim"
    Dv = v.shape[1]

    mxu = _resolve_mxu_dtype(q.dtype, mxu_dtype)
    min_tile = _min_sublane_tile(q.dtype)
    in_bytes = jnp.dtype(q.dtype).itemsize
    out_bytes = jnp.dtype(q.dtype).itemsize
    budget = _vmem_limit_bytes()

    # tk >= 256 preferred (256-wide MXU on v6e/v7x), capped at 512.
    tk = _largest_divisor_tile(Lk, 512, min_tile)

    # Maximize tq within the VMEM budget (K/V are re-streamed once per q tile),
    # subject to >= 2 q-tiles so v7x's second TensorCore gets work.
    cap = min(1024, Lq // 2 if Lq >= 2 * min_tile else Lq)

    def fits(t):
        return (2 * t * D * in_bytes                 # q (double-buffered)
                + 2 * tk * (D + Dv) * in_bytes       # K/V tiles (double-buffered)
                + 2 * t * Dv * out_bytes             # out
                + t * (Dv + 2) * 4                   # f32 scratch: acc + m + l
                ) <= budget

    tq = _fit_tile(Lq, cap, min_tile, fits)

    kernel = functools.partial(_flash_kernel,
                               inv_temp=1.0 / float(temperature), mxu_dtype=mxu)

    # TODO(synk): on v5e, raise K/V in_specs to pipeline_mode=pl.Buffered(3) if
    # xprof shows exposed DMA on the streaming path.
    return pl.pallas_call(
        kernel,
        out_shape=jax.ShapeDtypeStruct((Lq, Dv), q.dtype),
        grid=(Lq // tq, Lk // tk),
        in_specs=[
            pl.BlockSpec((tq, D), lambda i, j: (i, 0)),
            pl.BlockSpec((tk, D), lambda i, j: (j, 0)),
            pl.BlockSpec((tk, Dv), lambda i, j: (j, 0)),
        ],
        out_specs=pl.BlockSpec((tq, Dv), lambda i, j: (i, 0)),   # fixed across Lk axis
        scratch_shapes=[
            pltpu.VMEM((tq, 1), jnp.float32),    # running max
            pltpu.VMEM((tq, 1), jnp.float32),    # running denom
            pltpu.VMEM((tq, Dv), jnp.float32),   # output accumulator
        ],
        compiler_params=pltpu.CompilerParams(
            dimension_semantics=("parallel", "arbitrary"),
            vmem_limit_bytes=budget),
    )(q, k, v)


# ----------------------------------------------------------------------------
# Reference + test
# ----------------------------------------------------------------------------
def _reference(q, k, v, temperature):
    attn = jax.nn.softmax(
        jnp.matmul(q / temperature, k.T, precision=lax.Precision.HIGHEST), axis=-1)
    out = jnp.matmul(attn, v, precision=lax.Precision.HIGHEST)
    return out, attn


if __name__ == "__main__":
    # Lane-dense shapes (D, Dv multiples of 128); Lk=768 gives tk=256 and
    # 3 online-softmax steps; Lq=256 gives 2 q-tiles (parallel axis).
    Lq, Lk, D, Dv = 256, 768, 128, 128
    temperature = float(D) ** 0.5

    key = jax.random.PRNGKey(0)
    kq, kk, kv = jax.random.split(key, 3)
    q = jax.random.normal(kq, (Lq, D), dtype=jnp.float32)
    k = jax.random.normal(kk, (Lk, D), dtype=jnp.float32)
    v = jax.random.normal(kv, (Lk, Dv), dtype=jnp.float32)

    ref_out, ref_attn = _reference(q, k, v, temperature)

    # 1) Module-faithful path, exact f32 MXU operands: tight check.
    out, attn = attention_with_probs(q, k, v, temperature, mxu_dtype=jnp.float32)
    jax.block_until_ready((out, attn))
    assert jnp.allclose(out, ref_out, atol=1e-3, rtol=1e-3)
    assert jnp.allclose(attn, ref_attn, atol=1e-3, rtol=1e-3)

    # 2) Module-faithful path, default bf16 MXU operands (f32 stats/accumulate).
    out_b, attn_b = attention_with_probs(q, k, v, temperature)
    jax.block_until_ready((out_b, attn_b))
    assert jnp.allclose(out_b, ref_out, atol=4e-2, rtol=4e-2)
    assert jnp.allclose(attn_b, ref_attn, atol=4e-2, rtol=4e-2)

    # 3) Flash path (output only): exact then default bf16 MXU.
    out_f = flash_attention(q, k, v, temperature, mxu_dtype=jnp.float32)
    jax.block_until_ready(out_f)
    assert jnp.allclose(out_f, ref_out, atol=1e-3, rtol=1e-3)

    out_fb = flash_attention(q, k, v, temperature)
    jax.block_until_ready(out_fb)
    assert jnp.allclose(out_fb, ref_out, atol=4e-2, rtol=4e-2)

    # 4) Native bf16 inputs feed the MXU directly (no upcast); loose sanity bound.
    out_16 = flash_attention(q.astype(jnp.bfloat16), k.astype(jnp.bfloat16),
                             v.astype(jnp.bfloat16), temperature)
    jax.block_until_ready(out_16)
    assert float(jnp.max(jnp.abs(out_16.astype(jnp.float32) - ref_out))) < 0.2

    print("KERNEL_OK")
</pallas_src>

<mosaic_0001>
module attributes {stable_mosaic.version = 11 : i64} {
  func.func @_attn_probs_kernel(%arg0: i32, %arg1: memref<128x128xf32, #tpu.memory_space<vmem>>, %arg2: memref<768x128xf32, #tpu.memory_space<vmem>>, %arg3: memref<768x128xf32, #tpu.memory_space<vmem>>, %arg4: memref<128x128xf32, #tpu.memory_space<vmem>>, %arg5: memref<128x768xf32, #tpu.memory_space<vmem>>) attributes {dimension_semantics = [#tpu.dimension_semantics<parallel>], iteration_bounds = array<i64: 2>, scalar_prefetch = 0 : i64, scratch_operands = 0 : i64, tpu.core_type = #tpu.core_type<tc>, window_params = [{transform_indices = @transform_0, window_bounds = array<i64: 128, 128>}, {pipeline_mode = #tpu.pipeline_mode<synchronous>, transform_indices = @transform_1, window_bounds = array<i64: 768, 128>}, {pipeline_mode = #tpu.pipeline_mode<synchronous>, transform_indices = @transform_2, window_bounds = array<i64: 768, 128>}, {transform_indices = @transform_3, window_bounds = array<i64: 128, 128>}, {transform_indices = @transform_4, window_bounds = array<i64: 128, 768>}]} {
    %c0 = arith.constant 0 : index
    %c0_0 = arith.constant 0 : index
    %0 = vector.load %arg1[%c0, %c0_0] : memref<128x128xf32, #tpu.memory_space<vmem>>, vector<128x128xf32>
    %cst = arith.constant 0.0883883461 : f32
    %1 = vector.broadcast %cst : f32 to vector<128x128xf32>
    %2 = arith.mulf %0, %1 : vector<128x128xf32>
    %c0_1 = arith.constant 0 : index
    %c0_2 = arith.constant 0 : index
    %3 = vector.load %arg2[%c0_1, %c0_2] : memref<768x128xf32, #tpu.memory_space<vmem>>, vector<768x128xf32>
    %cst_3 = arith.constant dense<0.000000e+00> : vector<128x768xf32>
    %4 = tpu.matmul %2, %3, %cst_3 {dimension_numbers = #tpu.dot_dimension_numbers<[1], [1], [0], [0], [0, 0, 1, 0], [], []>} : vector<128x128xf32>, vector<768x128xf32>, vector<128x768xf32> -> vector<128x768xf32>
    %cst_4 = arith.constant dense<0xFF800000> : vector<128xf32>
    %5 = vector.multi_reduction <maximumf>, %4, %cst_4 [1] : vector<128x768xf32> to vector<128xf32>
    %6 = vector.shape_cast %5 : vector<128xf32> to vector<128x1xf32>
    %7 = vector.broadcast %6 : vector<128x1xf32> to vector<128x768xf32>
    %8 = arith.subf %4, %7 : vector<128x768xf32>
    %9 = math.exp %8 : vector<128x768xf32>
    %cst_5 = arith.constant dense<0.000000e+00> : vector<128xf32>
    %10 = vector.multi_reduction <add>, %9, %cst_5 [1] : vector<128x768xf32> to vector<128xf32>
    %11 = vector.shape_cast %10 : vector<128xf32> to vector<128x1xf32>
    %12 = tpu.reciprocal %11 : vector<128x1xf32> -> vector<128x1xf32>
    %13 = vector.broadcast %12 : vector<128x1xf32> to vector<128x768xf32>
    %14 = arith.mulf %9, %13 : vector<128x768xf32>
    %c0_6 = arith.constant 0 : index
    %c0_7 = arith.constant 0 : index
    %15 = vector.load %arg5[%c0_6, %c0_7] : memref<128x768xf32, #tpu.memory_space<vmem>>, vector<128x768xf32>
    tpu.vector_store %arg5[%c0_6, %c0_7], %14 {strides = array<i32>} : memref<128x768xf32, #tpu.memory_space<vmem>>, vector<128x768xf32>,
    %c0_8 = arith.constant 0 : index
    %c0_9 = arith.constant 0 : index
    %16 = vector.load %arg3[%c0_8, %c0_9] : memref<768x128xf32, #tpu.memory_space<vmem>>, vector<768x128xf32>
    %cst_10 = arith.constant dense<0.000000e+00> : vector<128x128xf32>
    %17 = tpu.matmul %14, %16, %cst_10 {dimension_numbers = #tpu.dot_dimension_numbers<[1], [0], [0], [1], [0, 0, 1, 1], [], []>} : vector<128x768xf32>, vector<768x128xf32>, vector<128x128xf32> -> vector<128x128xf32>
    %c0_11 = arith.constant 0 : index
    %c0_12 = arith.constant 0 : index
    %18 = vector.load %arg4[%c0_11, %c0_12] : memref<128x128xf32, #tpu.memory_space<vmem>>, vector<128x128xf32>
    tpu.vector_store %arg4[%c0_11, %c0_12], %17 {strides = array<i32>} : memref<128x128xf32, #tpu.memory_space<vmem>>, vector<128x128xf32>,
    return
  }
  func.func @transform_0(%arg0: i32) -> (i32, i32) {
    %c0_i32 = arith.constant 0 : i32
    %c0_i32_0 = arith.constant 0 : i32
    return %arg0, %c0_i32 : i32, i32
  }
  func.func @transform_1(%arg0: i32) -> (i32, i32) {
    %c0_i32 = arith.constant 0 : i32
    %c0_i32_0 = arith.constant 0 : i32
    %c0_i32_1 = arith.constant 0 : i32
    return %c0_i32, %c0_i32_0 : i32, i32
  }
  func.func @transform_2(%arg0: i32) -> (i32, i32) {
    %c0_i32 = arith.constant 0 : i32
    %c0_i32_0 = arith.constant 0 : i32
    %c0_i32_1 = arith.constant 0 : i32
    return %c0_i32, %c0_i32_0 : i32, i32
  }
  func.func @transform_3(%arg0: i32) -> (i32, i32) {
    %c0_i32 = arith.constant 0 : i32
    %c0_i32_0 = arith.constant 0 : i32
    return %arg0, %c0_i32 : i32, i32
  }
  func.func @transform_4(%arg0: i32) -> (i32, i32) {
    %c0_i32 = arith.constant 0 : i32
    %c0_i32_0 = arith.constant 0 : i32
    return %arg0, %c0_i32 : i32, i32
  }
}

module attributes {stable_mosaic.version = 11 : i64} {
  func.func @_attn_probs_kernel(%arg0: i32, %arg1: memref<128x128xf32, #tpu.memory_space<vmem>>, %arg2: memref<768x128xf32, #tpu.memory_space<vmem>>, %arg3: memref<768x128xf32, #tpu.memory_space<vmem>>, %arg4: memref<128x128xf32, #tpu.memory_space<vmem>>, %arg5: memref<128x768xf32, #tpu.memory_space<vmem>>) attributes {dimension_semantics = [#tpu.dimension_semantics<parallel>], iteration_bounds = array<i64: 2>, scalar_prefetch = 0 : i64, scratch_operands = 0 : i64, tpu.core_type = #tpu.core_type<tc>, window_params = [{transform_indices = @transform_0, window_bounds = array<i64: 128, 128>}, {pipeline_mode = #tpu.pipeline_mode<synchronous>, transform_indices = @transform_1, window_bounds = array<i64: 768, 128>}, {pipeline_mode = #tpu.pipeline_mode<synchronous>, transform_indices = @transform_2, window_bounds = array<i64: 768, 128>}, {transform_indices = @transform_3, window_bounds = array<i64: 128, 128>}, {transform_indices = @transform_4, window_bounds = array<i64: 128, 768>}]} {
    %c0 = arith.constant 0 : index
    %c0_0 = arith.constant 0 : index
    %0 = vector.load %arg1[%c0, %c0_0] : memref<128x128xf32, #tpu.memory_space<vmem>>, vector<128x128xf32>
    %cst = arith.constant 0.0883883461 : f32
    %1 = vector.broadcast %cst : f32 to vector<128x128xf32>
    %2 = arith.mulf %0, %1 : vector<128x128xf32>
    %c0_1 = arith.constant 0 : index
    %c0_2 = arith.constant 0 : index
    %3 = vector.load %arg2[%c0_1, %c0_2] : memref<768x128xf32, #tpu.memory_space<vmem>>, vector<768x128xf32>
    %cst_3 = arith.constant dense<0.000000e+00> : vector<128x768xf32>
    %4 = tpu.matmul %2, %3, %cst_3 {dimension_numbers = #tpu.dot_dimension_numbers<[1], [1], [0], [0], [0, 0, 1, 0], [], []>} : vector<128x128xf32>, vector<768x128xf32>, vector<128x768xf32> -> vector<128x768xf32>
    %cst_4 = arith.constant dense<0xFF800000> : vector<128xf32>
    %5 = vector.multi_reduction <maximumf>, %4, %cst_4 [1] : vector<128x768xf32> to vector<128xf32>
    %6 = vector.shape_cast %5 : vector<128xf32> to vector<128x1xf32>
    %7 = vector.broadcast %6 : vector<128x1xf32> to vector<128x768xf32>
    %8 = arith.subf %4, %7 : vector<128x768xf32>
    %9 = math.exp %8 : vector<128x768xf32>
    %cst_5 = arith.constant dense<0.000000e+00> : vector<128xf32>
    %10 = vector.multi_reduction <add>, %9, %cst_5 [1] : vector<128x768xf32> to vector<128xf32>
    %11 = vector.shape_cast %10 : vector<128xf32> to vector<128x1xf32>
    %12 = tpu.reciprocal %11 : vector<128x1xf32> -> vector<128x1xf32>
    %13 = vector.broadcast %12 : vector<128x1xf32> to vector<128x768xf32>
    %14 = arith.mulf %9, %13 : vector<128x768xf32>
    %c0_6 = arith.constant 0 : index
    %c0_7 = arith.constant 0 : index
    %15 = vector.load %arg5[%c0_6, %c0_7] : memref<128x768xf32, #tpu.memory_space<vmem>>, vector<128x768xf32>
    tpu.vector_store %arg5[%c0_6, %c0_7], %14 {strides = array<i32>} : memref<128x768xf32, #tpu.memory_space<vmem>>, vector<128x768xf32>,
    %c0_8 = arith.constant 0 : index
    %c0_9 = arith.constant 0 : index
    %16 = vector.load %arg3[%c0_8, %c0_9] : memref<768x128xf32, #tpu.memory_space<vmem>>, vector<768x128xf32>
    %cst_10 = arith.constant dense<0.000000e+00> : vector<128x128xf32>
    %17 = tpu.matmul %14, %16, %cst_10 {dimension_numbers = #tpu.dot_dimension_numbers<[1], [0], [0], [1], [0, 0, 1, 1], [], []>} : vector<128x768xf32>, vector<768x128xf32>, vector<128x128xf32> -> vector<128x128xf32>
    %c0_11 = arith.constant 0 : index
    %c0_12 = arith.constant 0 : index
    %18 = vector.load %arg4[%c0_11, %c0_12] : memref<128x128xf32, #tpu.memory_space<vmem>>, vector<128x128xf32>
    tpu.vector_store %arg4[%c0_11, %c0_12], %17 {strides = array<i32>} : memref<128x128xf32, #tpu.memory_space<vmem>>, vector<128x128xf32>,
    return
  }
  func.func @transform_0(%arg0: i32) -> (i32, i32) {
    %c0_i32 = arith.constant 0 : i32
    %c0_i32_0 = arith.constant 0 : i32
    return %arg0, %c0_i32 : i32, i32
  }
  func.func @transform_1(%arg0: i32) -> (i32, i32) {
    %c0_i32 = arith.constant 0 : i32
    %c0_i32_0 = arith.constant 0 : i32
    %c0_i32_1 = arith.constant 0 : i32
    return %c0_i32, %c0_i32_0 : i32, i32
  }
  func.func @transform_2(%arg0: i32) -> (i32, i32) {
    %c0_i32 = arith.constant 0 : i32
    %c0_i32_0 = arith.constant 0 : i32
    %c0_i32_1 = arith.constant 0 : i32
    return %c0_i32, %c0_i32_0 : i32, i32
  }
  func.func @transform_3(%arg0: i32) -> (i32, i32) {
    %c0_i32 = arith.constant 0 : i32
    %c0_i32_0 = arith.constant 0 : i32
    return %arg0, %c0_i32 : i32, i32
  }
  func.func @transform_4(%arg0: i32) -> (i32, i32) {
    %c0_i32 = arith.constant 0 : i32
    %c0_i32_0 = arith.constant 0 : i32
    return %arg0, %c0_i32 : i32, i32
  }
}

</mosaic_0001>

<llo_original>
// kernel: tpu_custom_call.1
$region0: #{tpu_custom_call.1}
  #allocation0 [shape = 'u32[]', space=smem, size = 0x4, offset = 0x4, fixed_abs, tag = 'smem constant byte address 0x4 - core index']
  #allocation1 [shape = 'u32[72,128]{1,0:T(1,128)}', space=vmem, size = 0x9000, scoped, tag = 'internal scratch']
  %s0 = inlined_call_operand.hbm [shape: f32[256,128], index: 0, kind: input, shape index: {}]
  %s1 = inlined_call_operand.hbm [shape: f32[768,128], index: 1, kind: input, shape index: {}]
  %s2 = inlined_call_operand.hbm [shape: f32[768,128], index: 2, kind: input, shape index: {}]
  %s3 = inlined_call_operand.hbm [shape: f32[256,128], index: 3, kind: output, shape index: {0}]
  %s4 = inlined_call_operand.hbm [shape: f32[256,768], index: 4, kind: output, shape index: {1}]
  %5 = xla_tuple %s3, %s4
  %s6 = sld [smem:[#allocation0]]
  $region65: #{tpu_custom_call.1} parent=0
    _
  %s8 = ssub.s32 1, %s6
  %s9 = scalar_select 0, %s8, %s6
  $region1: #{tpu_custom_call.1} parent=0
    #allocation2 [shape = 'u8[131072]{0}', space=vmem, size = 0x20000, scoped, tag = 'input window, operand 0']
    #allocation3 [shape = 's32[2]{0}', space=sflag, size = 0x8, scoped, tag = 'scoped memory for tpu_custom_call.1']
    #allocation4 [shape = 's32[2]{0}', space=sflag, size = 0x8, scoped, tag = 'scoped memory for tpu_custom_call.1']
    #allocation5 [shape = 'u8[393216]{0}', space=vmem, size = 0x60000, scoped, tag = 'input window, operand 1, single buffered']
    #allocation6 [shape = 's32[1]{0}', space=sflag, size = 0x4, scoped, tag = 'scoped memory for tpu_custom_call.1']
    #allocation7 [shape = 'u8[393216]{0}', space=vmem, size = 0x60000, scoped, tag = 'input window, operand 2, single buffered']
    #allocation8 [shape = 'u8[131072]{0}', space=vmem, size = 0x20000, scoped, tag = 'output window, operand 0']
    #allocation9 [shape = 'u8[786432]{0}', space=vmem, size = 0xc0000, scoped, tag = 'output window, operand 1']
    #allocation10 [shape = 's32[2]{0}', space=sflag, size = 0x8, scoped, tag = 'scoped memory for tpu_custom_call.1']
    %10 = vsyncpa [#allocation3], 0
    %s11 = scalar_lea.sflag [#allocation3], 1
    %12 = vsyncpa %s11, 0
    %13 = vsyncpa [#allocation6], 0
    %14 = vsyncpa [#allocation4], 0
    %s15 = scalar_lea.sflag [#allocation4], 1
    %16 = vsyncpa %s15, 0
    %17 = vsyncpa [#allocation10], 0
    %s18 = scalar_lea.sflag [#allocation10], 1
    %19 = vsyncpa %s18, 0
    loop: start=0, step=1, limit=4
    $region2: #{tpu_custom_call.1} parent=1 // loop_pre_header
      _
    $region3: #{tpu_custom_call.1} parent=1 // loop_header
      %s21 = sphi 0, %s25
      %p22 = scmp.ge.s32.totalorder %s21, 4
      %s31 = sphi 0, %s33
      %s34 = sphi 0, %s31
      %s35 = sphi 0, %s34
      %s51 = sphi 0, %s35
      %s55 = sphi 0, %s55
      %s57 = sphi 0, %s55
      %s58 = sphi 0, %s57
      %s72 = sphi 0, %s58
      %s76 = sphi 0, %s76
      %s78 = sphi 0, %s76
      %s79 = sphi 0, %s78
      %s93 = sphi 0, %s79
      %s99 = sphi 0, %s101
      %s102 = sphi 0, %s99
      %s103 = sphi 0, %s102
      %s119 = sphi 0, %s103
      %s125 = sphi 0, %s127
      %s128 = sphi 0, %s125
      %s129 = sphi 0, %s128
      %s145 = sphi 0, %s129
    $region4: #{tpu_custom_call.1} parent=1 // loop_header_branch
      %24 = sbr.rel (%p22) target = $region8
    $region5: #{tpu_custom_call.1} parent=1 // loop_body
      %s26 = ssub.s32 %s21, 1
      %s27 = ssub.s32 %s21, 2
      %s28 = sadd.s32 %s21, 1
      %s29 = ssub.s32 %s21, %s28
      %p30 = scmp.eq.s32.totalorder %s29, 0
      %s32 = sadd.s32 %s31, 1
      %s33 = scalar_select %p30, %s31, %s32
      %p36 = pneg %p30
      %p37 = scmp.eq.s32.totalorder %s21, 1
      %p38 = por %p36, %p37
      %p39 = scmp.ne.s32.totalorder %s31, %s34
      %p40 = scmp.eq.s32.totalorder %s21, 0
      %p41 = por %p39, %p40
      %p42 = scmp.ne.s32.totalorder %s31, %s34
      %p43 = scmp.eq.s32.totalorder %s26, 1
      %p44 = por %p42, %p43
      %p45 = scmp.ne.s32.totalorder %s34, %s35
      %p46 = scmp.eq.s32.totalorder %s26, 0
      %p47 = por %p45, %p46
      %p48 = scmp.ne.s32.totalorder %s34, %s35
      %p49 = scmp.eq.s32.totalorder %s27, 1
      %p50 = por %p48, %p49
      %p52 = scmp.ne.s32.totalorder %s35, %s51
      %p53 = scmp.eq.s32.totalorder %s27, 0
      %p54 = por %p52, %p53
      %s56 = sadd.s32 %s55, 1
      %p59 = scmp.eq.s32.totalorder %s21, 1
      %p60 = scmp.ne.s32.totalorder %s55, %s57
      %p61 = scmp.eq.s32.totalorder %s21, 0
      %p62 = por %p60, %p61
      %p63 = scmp.ne.s32.totalorder %s55, %s57
      %p64 = scmp.eq.s32.totalorder %s26, 1
      %p65 = por %p63, %p64
      %p66 = scmp.ne.s32.totalorder %s57, %s58
      %p67 = scmp.eq.s32.totalorder %s26, 0
      %p68 = por %p66, %p67
      %p69 = scmp.ne.s32.totalorder %s57, %s58
      %p70 = scmp.eq.s32.totalorder %s27, 1
      %p71 = por %p69, %p70
      %p73 = scmp.ne.s32.totalorder %s58, %s72
      %p74 = scmp.eq.s32.totalorder %s27, 0
      %p75 = por %p73, %p74
      %s77 = sadd.s32 %s76, 1
      %p80 = scmp.eq.s32.totalorder %s21, 1
      %p81 = scmp.ne.s32.totalorder %s76, %s78
      %p82 = scmp.eq.s32.totalorder %s21, 0
      %p83 = por %p81, %p82
      %p84 = scmp.ne.s32.totalorder %s76, %s78
      %p85 = scmp.eq.s32.totalorder %s26, 1
      %p86 = por %p84, %p85
      %p87 = scmp.ne.s32.totalorder %s78, %s79
      %p88 = scmp.eq.s32.totalorder %s26, 0
      %p89 = por %p87, %p88
      %p90 = scmp.ne.s32.totalorder %s78, %s79
      %p91 = scmp.eq.s32.totalorder %s27, 1
      %p92 = por %p90, %p91
      %p94 = scmp.ne.s32.totalorder %s79, %s93
      %p95 = scmp.eq.s32.totalorder %s27, 0
      %p96 = por %p94, %p95
      %s97 = ssub.s32 %s21, %s28
      %p98 = scmp.eq.s32.totalorder %s97, 0
      %s100 = sadd.s32 %s99, 1
      %s101 = scalar_select %p98, %s99, %s100
      %p104 = pneg %p98
      %p105 = scmp.eq.s32.totalorder %s21, 1
      %p106 = por %p104, %p105
      %p107 = scmp.ne.s32.totalorder %s99, %s102
      %p108 = scmp.eq.s32.totalorder %s21, 0
      %p109 = por %p107, %p108
      %p110 = scmp.ne.s32.totalorder %s99, %s102
      %p111 = scmp.eq.s32.totalorder %s26, 1
      %p112 = por %p110, %p111
      %p113 = scmp.ne.s32.totalorder %s102, %s103
      %p114 = scmp.eq.s32.totalorder %s26, 0
      %p115 = por %p113, %p114
      %p116 = scmp.ne.s32.totalorder %s102, %s103
      %p117 = scmp.eq.s32.totalorder %s27, 1
      %p118 = por %p116, %p117
      %p120 = scmp.ne.s32.totalorder %s103, %s119
      %p121 = scmp.eq.s32.totalorder %s27, 0
      %p122 = por %p120, %p121
      %s123 = ssub.s32 %s21, %s28
      %p124 = scmp.eq.s32.totalorder %s123, 0
      %s126 = sadd.s32 %s125, 1
      %s127 = scalar_select %p124, %s125, %s126
      %p130 = pneg %p124
      %p131 = scmp.eq.s32.totalorder %s21, 1
      %p132 = por %p130, %p131
      %p133 = scmp.ne.s32.totalorder %s125, %s128
      %p134 = scmp.eq.s32.totalorder %s21, 0
      %p135 = por %p133, %p134
      %p136 = scmp.ne.s32.totalorder %s125, %s128
      %p137 = scmp.eq.s32.totalorder %s26, 1
      %p138 = por %p136, %p137
      %p139 = scmp.ne.s32.totalorder %s128, %s129
      %p140 = scmp.eq.s32.totalorder %s26, 0
      %p141 = por %p139, %p140
      %p142 = scmp.ne.s32.totalorder %s128, %s129
      %p143 = scmp.eq.s32.totalorder %s27, 1
      %p144 = por %p142, %p143
      %p146 = scmp.ne.s32.totalorder %s129, %s145
      %p147 = scmp.eq.s32.totalorder %s27, 0
      %p148 = por %p146, %p147
      %p149 = scmp.le.s32.totalorder 1, %s21
      %p150 = scmp.lt.s32.totalorder %s21, 3
      %p151 = pnand %p149, %p150
      %p152 = pneg %p151
      // Predicated region
      $region9: #{tpu_custom_call.1} parent=5 // pred_check
        _
      $region10: #{tpu_custom_call.1} parent=5 // pred_check_branch
        %154 = sbr.rel (%p151) target = $region12
      $region11: #{tpu_custom_call.1} parent=5 // pred_region
        %s155 = ssub.s32 %s21, 1
        // Predicated region
        $region13: #{tpu_custom_call.1} parent=11 // pred_check
          %p156 = pneg %p68
        $region14: #{tpu_custom_call.1} parent=11 // pred_check_branch
          %158 = sbr.rel (%p156) target = $region16
        $region15: #{tpu_custom_call.1} parent=11 // pred_region
          %160 = vsyncadd [#allocation6], 0
          %s161 = sshll.u32 %s1, 4
          %s162 = int_to_ptr.hbm [resolvable:$true] %s161
          %s163 = sshll.u32 [#allocation5], 4
          %s164 = int_to_ptr.vmem [resolvable:$true] %s163
          %169 = dma.hbm_to_vmem [thread:$0]  %s162, 12288, %s164, [#allocation6], 128, 128, 8
        $region16: #{tpu_custom_call.1} parent=11 // pred_fallthru
          _
        // Predicated region
        $region17: #{tpu_custom_call.1} parent=11 // pred_check
          %p170 = pneg %p89
        $region18: #{tpu_custom_call.1} parent=11 // pred_check_branch
          %172 = sbr.rel (%p170) target = $region20
        $region19: #{tpu_custom_call.1} parent=11 // pred_region
          %174 = vsyncadd [#allocation6], 0
          %s175 = sshll.u32 %s2, 4
          %s176 = int_to_ptr.hbm [resolvable:$true] %s175
          %s177 = sshll.u32 [#allocation7], 4
          %s178 = int_to_ptr.vmem [resolvable:$true] %s177
          %183 = dma.hbm_to_vmem [thread:$0]  %s176, 12288, %s178, [#allocation6], 128, 128, 8
        $region20: #{tpu_custom_call.1} parent=11 // pred_fallthru
          _
      $region12: #{tpu_custom_call.1} parent=5 // pred_fallthru
        _
      %p184 = scmp.lt.s32.totalorder %s21, 2
      // Predicated region
      $region21: #{tpu_custom_call.1} parent=5 // pred_check
        %p185 = pneg %p184
      $region22: #{tpu_custom_call.1} parent=5 // pred_check_branch
        %187 = sbr.rel (%p185) target = $region24
      $region23: #{tpu_custom_call.1} parent=5 // pred_region
        // Predicated region
        $region25: #{tpu_custom_call.1} parent=23 // pred_check
          %p188 = pneg %p41
        $region26: #{tpu_custom_call.1} parent=23 // pred_check_branch
          %190 = sbr.rel (%p188) target = $region28
        $region27: #{tpu_custom_call.1} parent=23 // pred_region
          %s191 = sand.u32 %s31, 1
          %s192 = scalar_lea.sflag [#allocation3], %s191
          %s193 = sand.u32 %s31, 1
          %s194 = smul.addr %s193, 128
          %s195 = scalar_lea.vmem [#allocation2], %s194
          %s196 = smul.u32 16, %s21
          %198 = vsyncadd %s192, 0
          %s199 = smul.addr %s196, 8
          %s200 = scalar_lea.hbm %s0, %s199
          %s201 = sshll.u32 %s200, 4
          %s202 = int_to_ptr.hbm [resolvable:$true] %s201
          %s203 = sshll.u32 %s195, 4
          %s204 = int_to_ptr.vmem [resolvable:$true] %s203
          %209 = dma.hbm_to_vmem [thread:$0]  %s202, 2048, %s204, %s192, 128, 128, 8
        $region28: #{tpu_custom_call.1} parent=23 // pred_fallthru
          _
      $region24: #{tpu_custom_call.1} parent=5 // pred_fallthru
        _
      %p210 = scmp.le.s32.totalorder 1, %s21
      %p211 = scmp.lt.s32.totalorder %s21, 3
      %p212 = pnand %p210, %p211
      %p213 = pneg %p212
      // Predicated region
      $region29: #{tpu_custom_call.1} parent=5 // pred_check
        _
      $region30: #{tpu_custom_call.1} parent=5 // pred_check_branch
        %215 = sbr.rel (%p212) target = $region32
      $region31: #{tpu_custom_call.1} parent=5 // pred_region
        %s216 = ssub.s32 %s21, 1
        %s217 = sand.u32 %s34, 1
        %s218 = scalar_lea.sflag [#allocation3], %s217
        %s219 = sand.u32 %s34, 1
        %s220 = smul.addr %s219, 128
        %s221 = scalar_lea.vmem [#allocation2], %s220
        // Predicated region
        $region33: #{tpu_custom_call.1} parent=31 // pred_check
          %p222 = pneg %p47
        $region34: #{tpu_custom_call.1} parent=31 // pred_check_branch
          %224 = sbr.rel (%p222) target = $region36
        $region35: #{tpu_custom_call.1} parent=31 // pred_region
          %226 = dma.done %s218, 2048
        $region36: #{tpu_custom_call.1} parent=31 // pred_fallthru
          _
        // Predicated region
        $region37: #{tpu_custom_call.1} parent=31 // pred_check
          %p227 = pneg %p68
        $region38: #{tpu_custom_call.1} parent=31 // pred_check_branch
          %229 = sbr.rel (%p227) target = $region40
        $region39: #{tpu_custom_call.1} parent=31 // pred_region
          %231 = dma.done [#allocation6], 12288
        $region40: #{tpu_custom_call.1} parent=31 // pred_fallthru
          _
        // Predicated region
        $region41: #{tpu_custom_call.1} parent=31 // pred_check
          %p232 = pneg %p89
        $region42: #{tpu_custom_call.1} parent=31 // pred_check_branch
          %234 = sbr.rel (%p232) target = $region44
        $region43: #{tpu_custom_call.1} parent=31 // pred_region
          %236 = dma.done [#allocation6], 12288
        $region44: #{tpu_custom_call.1} parent=31 // pred_fallthru
          _
        %s237 = sand.u32 %s34, 1
        %s238 = scalar_lea.sflag [#allocation3], %s237
        %s239 = sand.u32 %s34, 1
        %s240 = smul.addr %s239, 128
        %s241 = scalar_lea.vmem [#allocation2], %s240
        %p242 = pneg %p47
        %p243 = pneg %p44
        %p244 = pneg %p68
        %p245 = pneg %p65
        %p246 = pneg %p89
        %p247 = pneg %p86
        %p248 = pneg %p115
        %p249 = pneg %p112
        %s250 = sand.u32 %s102, 1
        %s251 = scalar_lea.sflag [#allocation4], %s250
        %s252 = sand.u32 %s102, 1
        %s253 = smul.addr %s252, 128
        %s254 = scalar_lea.vmem [#allocation8], %s253
        %p255 = pneg %p141
        %p256 = pneg %p138
        %s257 = sand.u32 %s128, 1
        %s258 = scalar_lea.sflag [#allocation10], %s257
        %s259 = sand.u32 %s128, 1
        %s260 = smul.addr %s259, 768
        %s261 = scalar_lea.vmem [#allocation9], %s260
        %s262 = smul.u32 16, %s26
        %s263 = smul.u32 16, %s26
        %s264 = smul.u32 16, %s26
        %v265 = vld [vmem:[%s221] sm:$0xff]
        %v266 = vld [vmem:[%s221 + $0x8] sm:$0xff]
        %v267 = vld [vmem:[%s221 + $0x10] sm:$0xff]
        %v268 = vld [vmem:[%s221 + $0x18] sm:$0xff]
        %v269 = vld [vmem:[%s221 + $0x20] sm:$0xff]
        %v270 = vld [vmem:[%s221 + $0x28] sm:$0xff]
        %v271 = vld [vmem:[%s221 + $0x30] sm:$0xff]
        %v272 = vld [vmem:[%s221 + $0x38] sm:$0xff]
        %v273 = vld [vmem:[%s221 + $0x40] sm:$0xff]
        %v274 = vld [vmem:[%s221 + $0x48] sm:$0xff]
        %v275 = vld [vmem:[%s221 + $0x50] sm:$0xff]
        %v276 = vld [vmem:[%s221 + $0x58] sm:$0xff]
        %v277 = vld [vmem:[%s221 + $0x60] sm:$0xff]
        %v278 = vld [vmem:[%s221 + $0x68] sm:$0xff]
        %v279 = vld [vmem:[%s221 + $0x70] sm:$0xff]
        %v280 = vld [vmem:[%s221 + $0x78] sm:$0xff]
        %v281 = vmul.f32 %v265, 0.088388346
        %v282 = vmul.f32 %v266, 0.088388346
        %v283 = vmul.f32 %v267, 0.088388346
        %v284 = vmul.f32 %v268, 0.088388346
        %v285 = vmul.f32 %v269, 0.088388346
        %v286 = vmul.f32 %v270, 0.088388346
        %v287 = vmul.f32 %v271, 0.088388346
        %v288 = vmul.f32 %v272, 0.088388346
        %v289 = vmul.f32 %v273, 0.088388346
        %v290 = vmul.f32 %v274, 0.088388346
        %v291 = vmul.f32 %v275, 0.088388346
        %v292 = vmul.f32 %v276, 0.088388346
        %v293 = vmul.f32 %v277, 0.088388346
        %v294 = vmul.f32 %v278, 0.088388346
        %v295 = vmul.f32 %v279, 0.088388346
        %v296 = vmul.f32 %v280, 0.088388346
        %v297 = vld [vmem:[#allocation5] sm:$0xff]
        %v298 = vld [vmem:[#allocation5 + $0x8] sm:$0xff]
        %v299 = vld [vmem:[#allocation5 + $0x10] sm:$0xff]
        %v300 = vld [vmem:[#allocation5 + $0x18] sm:$0xff]
        %v301 = vld [vmem:[#allocation5 + $0x20] sm:$0xff]
        %v302 = vld [vmem:[#allocation5 + $0x28] sm:$0xff]
        %v303 = vld [vmem:[#allocation5 + $0x30] sm:$0xff]
        %v304 = vld [vmem:[#allocation5 + $0x38] sm:$0xff]
        %v305 = vld [vmem:[#allocation5 + $0x40] sm:$0xff]
        %v306 = vld [vmem:[#allocation5 + $0x48] sm:$0xff]
        %v307 = vld [vmem:[#allocation5 + $0x50] sm:$0xff]
        %v308 = vld [vmem:[#allocation5 + $0x58] sm:$0xff]
        %v309 = vld [vmem:[#allocation5 + $0x60] sm:$0xff]
        %v310 = vld [vmem:[#allocation5 + $0x68] sm:$0xff]
        %v311 = vld [vmem:[#allocation5 + $0x70] sm:$0xff]
        %v312 = vld [vmem:[#allocation5 + $0x78] sm:$0xff]
        %v313 = vld [vmem:[#allocation5 + $0x80] sm:$0xff]
        %v314 = vld [vmem:[#allocation5 + $0x88] sm:$0xff]
        %v315 = vld [vmem:[#allocation5 + $0x90] sm:$0xff]
        %v316 = vld [vmem:[#allocation5 + $0x98] sm:$0xff]
        %v317 = vld [vmem:[#allocation5 + $0xa0] sm:$0xff]
        %v318 = vld [vmem:[#allocation5 + $0xa8] sm:$0xff]
        %v319 = vld [vmem:[#allocation5 + $0xb0] sm:$0xff]
        %v320 = vld [vmem:[#allocation5 + $0xb8] sm:$0xff]
        %v321 = vld [vmem:[#allocation5 + $0xc0] sm:$0xff]
        %v322 = vld [vmem:[#allocation5 + $0xc8] sm:$0xff]
        %v323 = vld [vmem:[#allocation5 + $0xd0] sm:$0xff]
        %v324 = vld [vmem:[#allocation5 + $0xd8] sm:$0xff]
        %v325 = vld [vmem:[#allocation5 + $0xe0] sm:$0xff]
        %v326 = vld [vmem:[#allocation5 + $0xe8] sm:$0xff]
        %v327 = vld [vmem:[#allocation5 + $0xf0] sm:$0xff]
        %v328 = vld [vmem:[#allocation5 + $0xf8] sm:$0xff]
        %v329 = vld [vmem:[#allocation5 + $0x100] sm:$0xff]
        %v330 = vld [vmem:[#allocation5 + $0x108] sm:$0xff]
        %v331 = vld [vmem:[#allocation5 + $0x110] sm:$0xff]
        %v332 = vld [vmem:[#allocation5 + $0x118] sm:$0xff]
        %v333 = vld [vmem:[#allocation5 + $0x120] sm:$0xff]
        %v334 = vld [vmem:[#allocation5 + $0x128] sm:$0xff]
        %v335 = vld [vmem:[#allocation5 + $0x130] sm:$0xff]
        %v336 = vld [vmem:[#allocation5 + $0x138] sm:$0xff]
        %v337 = vld [vmem:[#allocation5 + $0x140] sm:$0xff]
        %v338 = vld [vmem:[#allocation5 + $0x148] sm:$0xff]
        %v339 = vld [vmem:[#allocation5 + $0x150] sm:$0xff]
        %v340 = vld [vmem:[#allocation5 + $0x158] sm:$0xff]
        %v341 = vld [vmem:[#allocation5 + $0x160] sm:$0xff]
        %v342 = vld [vmem:[#allocation5 + $0x168] sm:$0xff]
        %v343 = vld [vmem:[#allocation5 + $0x170] sm:$0xff]
        %v344 = vld [vmem:[#allocation5 + $0x178] sm:$0xff]
        %v345 = vld [vmem:[#allocation5 + $0x180] sm:$0xff]
        %v346 = vld [vmem:[#allocation5 + $0x188] sm:$0xff]
        %v347 = vld [vmem:[#allocation5 + $0x190] sm:$0xff]
        %v348 = vld [vmem:[#allocation5 + $0x198] sm:$0xff]
        %v349 = vld [vmem:[#allocation5 + $0x1a0] sm:$0xff]
        %v350 = vld [vmem:[#allocation5 + $0x1a8] sm:$0xff]
        %v351 = vld [vmem:[#allocation5 + $0x1b0] sm:$0xff]
        %v352 = vld [vmem:[#allocation5 + $0x1b8] sm:$0xff]
        %v353 = vld [vmem:[#allocation5 + $0x1c0] sm:$0xff]
        %v354 = vld [vmem:[#allocation5 + $0x1c8] sm:$0xff]
        %v355 = vld [vmem:[#allocation5 + $0x1d0] sm:$0xff]
        %v356 = vld [vmem:[#allocation5 + $0x1d8] sm:$0xff]
        %v357 = vld [vmem:[#allocation5 + $0x1e0] sm:$0xff]
        %v358 = vld [vmem:[#allocation5 + $0x1e8] sm:$0xff]
        %v359 = vld [vmem:[#allocation5 + $0x1f0] sm:$0xff]
        %v360 = vld [vmem:[#allocation5 + $0x1f8] sm:$0xff]
        %v361 = vld [vmem:[#allocation5 + $0x200] sm:$0xff]
        %v362 = vld [vmem:[#allocation5 + $0x208] sm:$0xff]
        %v363 = vld [vmem:[#allocation5 + $0x210] sm:$0xff]
        %v364 = vld [vmem:[#allocation5 + $0x218] sm:$0xff]
        %v365 = vld [vmem:[#allocation5 + $0x220] sm:$0xff]
        %v366 = vld [vmem:[#allocation5 + $0x228] sm:$0xff]
        %v367 = vld [vmem:[#allocation5 + $0x230] sm:$0xff]
        %v368 = vld [vmem:[#allocation5 + $0x238] sm:$0xff]
        %v369 = vld [vmem:[#allocation5 + $0x240] sm:$0xff]
        %v370 = vld [vmem:[#allocation5 + $0x248] sm:$0xff]
        %v371 = vld [vmem:[#allocation5 + $0x250] sm:$0xff]
        %v372 = vld [vmem:[#allocation5 + $0x258] sm:$0xff]
        %v373 = vld [vmem:[#allocation5 + $0x260] sm:$0xff]
        %v374 = vld [vmem:[#allocation5 + $0x268] sm:$0xff]
        %v375 = vld [vmem:[#allocation5 + $0x270] sm:$0xff]
        %v376 = vld [vmem:[#allocation5 + $0x278] sm:$0xff]
        %v377 = vld [vmem:[#allocation5 + $0x280] sm:$0xff]
        %v378 = vld [vmem:[#allocation5 + $0x288] sm:$0xff]
        %v379 = vld [vmem:[#allocation5 + $0x290] sm:$0xff]
        %v380 = vld [vmem:[#allocation5 + $0x298] sm:$0xff]
        %v381 = vld [vmem:[#allocation5 + $0x2a0] sm:$0xff]
        %v382 = vld [vmem:[#allocation5 + $0x2a8] sm:$0xff]
        %v383 = vld [vmem:[#allocation5 + $0x2b0] sm:$0xff]
        %v384 = vld [vmem:[#allocation5 + $0x2b8] sm:$0xff]
        %v385 = vld [vmem:[#allocation5 + $0x2c0] sm:$0xff]
        %v386 = vld [vmem:[#allocation5 + $0x2c8] sm:$0xff]
        %v387 = vld [vmem:[#allocation5 + $0x2d0] sm:$0xff]
        %v388 = vld [vmem:[#allocation5 + $0x2d8] sm:$0xff]
        %v389 = vld [vmem:[#allocation5 + $0x2e0] sm:$0xff]
        %v390 = vld [vmem:[#allocation5 + $0x2e8] sm:$0xff]
        %v391 = vld [vmem:[#allocation5 + $0x2f0] sm:$0xff]
        %v392 = vld [vmem:[#allocation5 + $0x2f8] sm:$0xff]
        %393 = vmatpush.xpose.msra.mxu0 %v312
        %394 = vmatpush.xpose.msra.mxu0 %v311
        %395 = vmatpush.xpose.msra.mxu0 %v310
        %396 = vmatpush.xpose.msra.mxu0 %v309
        %397 = vmatpush.xpose.msra.mxu0 %v308
        %398 = vmatpush.xpose.msra.mxu0 %v307
        %399 = vmatpush.xpose.msra.mxu0 %v306
        %400 = vmatpush.xpose.msra.mxu0 %v305
        %401 = vmatpush.xpose.msra.mxu0 %v304
        %402 = vmatpush.xpose.msra.mxu0 %v303
        %403 = vmatpush.xpose.msra.mxu0 %v302
        %404 = vmatpush.xpose.msra.mxu0 %v301
        %405 = vmatpush.xpose.msra.mxu0 %v300
        %406 = vmatpush.xpose.msra.mxu0 %v299
        %407 = vmatpush.xpose.msra.mxu0 %v298
        %408 = vmatpush.xpose.msra.mxu0 %v297
        %409 = vmatmul.f32.gmra.mxu0 %v281
        %v410 = vpop.f32.mrf.mxu0
        %v411 = vadd.f32 0.0, %v410
        %412 = vmatmul.f32.gmra.mxu0 %v282
        %v413 = vpop.f32.mrf.mxu0
        %v414 = vadd.f32 0.0, %v413
        %415 = vmatmul.f32.gmra.mxu0 %v283
        %v416 = vpop.f32.mrf.mxu0
        %v417 = vadd.f32 0.0, %v416
        %418 = vmatmul.f32.gmra.mxu0 %v284
        %v419 = vpop.f32.mrf.mxu0
        %v420 = vadd.f32 0.0, %v419
        %421 = vmatmul.f32.gmra.mxu0 %v285
        %v422 = vpop.f32.mrf.mxu0
        %v423 = vadd.f32 0.0, %v422
        %424 = vmatmul.f32.gmra.mxu0 %v286
        %v425 = vpop.f32.mrf.mxu0
        %v426 = vadd.f32 0.0, %v425
        %427 = vmatmul.f32.gmra.mxu0 %v287
        %v428 = vpop.f32.mrf.mxu0
        %v429 = vadd.f32 0.0, %v428
        %430 = vmatmul.f32.gmra.mxu0 %v288
        %v431 = vpop.f32.mrf.mxu0
        %v432 = vadd.f32 0.0, %v431
        %433 = vmatmul.f32.gmra.mxu0 %v289
        %v434 = vpop.f32.mrf.mxu0
        %v435 = vadd.f32 0.0, %v434
        %436 = vmatmul.f32.gmra.mxu0 %v290
        %v437 = vpop.f32.mrf.mxu0
        %v438 = vadd.f32 0.0, %v437
        %439 = vmatmul.f32.gmra.mxu0 %v291
        %v440 = vpop.f32.mrf.mxu0
        %v441 = vadd.f32 0.0, %v440
        %442 = vmatmul.f32.gmra.mxu0 %v292
        %v443 = vpop.f32.mrf.mxu0
        %v444 = vadd.f32 0.0, %v443
        %445 = vmatmul.f32.gmra.mxu0 %v293
        %v446 = vpop.f32.mrf.mxu0
        %v447 = vadd.f32 0.0, %v446
        %448 = vmatmul.f32.gmra.mxu0 %v294
        %v449 = vpop.f32.mrf.mxu0
        %v450 = vadd.f32 0.0, %v449
        %451 = vmatmul.f32.gmra.mxu0 %v295
        %v452 = vpop.f32.mrf.mxu0
        %v453 = vadd.f32 0.0, %v452
        %454 = vmatmul.f32.gmra.mxu0 %v296
        %v455 = vpop.f32.mrf.mxu0
        %v456 = vadd.f32 0.0, %v455
        %457 = vdwg.mxu0
        %458 = vmatpush.xpose.msra.mxu0 %v328
        %459 = vmatpush.xpose.msra.mxu0 %v327
        %460 = vmatpush.xpose.msra.mxu0 %v326
        %461 = vmatpush.xpose.msra.mxu0 %v325
        %462 = vmatpush.xpose.msra.mxu0 %v324
        %463 = vmatpush.xpose.msra.mxu0 %v323
        %464 = vmatpush.xpose.msra.mxu0 %v322
        %465 = vmatpush.xpose.msra.mxu0 %v321
        %466 = vmatpush.xpose.msra.mxu0 %v320
        %467 = vmatpush.xpose.msra.mxu0 %v319
        %468 = vmatpush.xpose.msra.mxu0 %v318
        %469 = vmatpush.xpose.msra.mxu0 %v317
        %470 = vmatpush.xpose.msra.mxu0 %v316
        %471 = vmatpush.xpose.msra.mxu0 %v315
        %472 = vmatpush.xpose.msra.mxu0 %v314
        %473 = vmatpush.xpose.msra.mxu0 %v313
        %474 = vmatmul.f32.gmra.mxu0 %v281
        %v475 = vpop.f32.mrf.mxu0
        %v476 = vadd.f32 0.0, %v475
        %477 = vmatmul.f32.gmra.mxu0 %v282
        %v478 = vpop.f32.mrf.mxu0
        %v479 = vadd.f32 0.0, %v478
        %480 = vmatmul.f32.gmra.mxu0 %v283
        %v481 = vpop.f32.mrf.mxu0
        %v482 = vadd.f32 0.0, %v481
        %483 = vmatmul.f32.gmra.mxu0 %v284
        %v484 = vpop.f32.mrf.mxu0
        %v485 = vadd.f32 0.0, %v484
        %486 = vmatmul.f32.gmra.mxu0 %v285
        %v487 = vpop.f32.mrf.mxu0
        %v488 = vadd.f32 0.0, %v487
        %489 = vmatmul.f32.gmra.mxu0 %v286
        %v490 = vpop.f32.mrf.mxu0
        %v491 = vadd.f32 0.0, %v490
        %492 = vmatmul.f32.gmra.mxu0 %v287
        %v493 = vpop.f32.mrf.mxu0
        %v494 = vadd.f32 0.0, %v493
        %495 = vmatmul.f32.gmra.mxu0 %v288
        %v496 = vpop.f32.mrf.mxu0
        %v497 = vadd.f32 0.0, %v496
        %498 = vmatmul.f32.gmra.mxu0 %v289
        %v499 = vpop.f32.mrf.mxu0
        %v500 = vadd.f32 0.0, %v499
        %501 = vmatmul.f32.gmra.mxu0 %v290
        %v502 = vpop.f32.mrf.mxu0
        %v503 = vadd.f32 0.0, %v502
        %504 = vmatmul.f32.gmra.mxu0 %v291
        %v505 = vpop.f32.mrf.mxu0
        %v506 = vadd.f32 0.0, %v505
        %507 = vmatmul.f32.gmra.mxu0 %v292
        %v508 = vpop.f32.mrf.mxu0
        %v509 = vadd.f32 0.0, %v508
        %510 = vmatmul.f32.gmra.mxu0 %v293
        %v511 = vpop.f32.mrf.mxu0
        %v512 = vadd.f32 0.0, %v511
        %513 = vmatmul.f32.gmra.mxu0 %v294
        %v514 = vpop.f32.mrf.mxu0
        %v515 = vadd.f32 0.0, %v514
        %516 = vmatmul.f32.gmra.mxu0 %v295
        %v517 = vpop.f32.mrf.mxu0
        %v518 = vadd.f32 0.0, %v517
        %519 = vmatmul.f32.gmra.mxu0 %v296
        %v520 = vpop.f32.mrf.mxu0
        %v521 = vadd.f32 0.0, %v520
        %522 = vdwg.mxu0
        %523 = vmatpush.xpose.msra.mxu0 %v344
        %524 = vmatpush.xpose.msra.mxu0 %v343
        %525 = vmatpush.xpose.msra.mxu0 %v342
        %526 = vmatpush.xpose.msra.mxu0 %v341
        %527 = vmatpush.xpose.msra.mxu0 %v340
        %528 = vmatpush.xpose.msra.mxu0 %v339
        %529 = vmatpush.xpose.msra.mxu0 %v338
        %530 = vmatpush.xpose.msra.mxu0 %v337
        %531 = vmatpush.xpose.msra.mxu0 %v336
        %532 = vmatpush.xpose.msra.mxu0 %v335
        %533 = vmatpush.xpose.msra.mxu0 %v334
        %534 = vmatpush.xpose.msra.mxu0 %v333
        %535 = vmatpush.xpose.msra.mxu0 %v332
        %536 = vmatpush.xpose.msra.mxu0 %v331
        %537 = vmatpush.xpose.msra.mxu0 %v330
        %538 = vmatpush.xpose.msra.mxu0 %v329
        %539 = vmatmul.f32.gmra.mxu0 %v281
        %v540 = vpop.f32.mrf.mxu0
        %v541 = vadd.f32 0.0, %v540
        %542 = vmatmul.f32.gmra.mxu0 %v282
        %v543 = vpop.f32.mrf.mxu0
        %v544 = vadd.f32 0.0, %v543
        %545 = vmatmul.f32.gmra.mxu0 %v283
        %v546 = vpop.f32.mrf.mxu0
        %v547 = vadd.f32 0.0, %v546
        %548 = vmatmul.f32.gmra.mxu0 %v284
        %v549 = vpop.f32.mrf.mxu0
        %v550 = vadd.f32 0.0, %v549
        %551 = vmatmul.f32.gmra.mxu0 %v285
        %v552 = vpop.f32.mrf.mxu0
        %v553 = vadd.f32 0.0, %v552
        %554 = vmatmul.f32.gmra.mxu0 %v286
        %v555 = vpop.f32.mrf.mxu0
        %v556 = vadd.f32 0.0, %v555
        %557 = vmatmul.f32.gmra.mxu0 %v287
        %v558 = vpop.f32.mrf.mxu0
        %v559 = vadd.f32 0.0, %v558
        %560 = vmatmul.f32.gmra.mxu0 %v288
        %v561 = vpop.f32.mrf.mxu0
        %v562 = vadd.f32 0.0, %v561
        %563 = vmatmul.f32.gmra.mxu0 %v289
        %v564 = vpop.f32.mrf.mxu0
        %v565 = vadd.f32 0.0, %v564
        %566 = vmatmul.f32.gmra.mxu0 %v290
        %v567 = vpop.f32.mrf.mxu0
        %v568 = vadd.f32 0.0, %v567
        %569 = vmatmul.f32.gmra.mxu0 %v291
        %v570 = vpop.f32.mrf.mxu0
        %v571 = vadd.f32 0.0, %v570
        %572 = vmatmul.f32.gmra.mxu0 %v292
        %v573 = vpop.f32.mrf.mxu0
        %v574 = vadd.f32 0.0, %v573
        %575 = vmatmul.f32.gmra.mxu0 %v293
        %v576 = vpop.f32.mrf.mxu0
        %v577 = vadd.f32 0.0, %v576
        %578 = vmatmul.f32.gmra.mxu0 %v294
        %v579 = vpop.f32.mrf.mxu0
        %v580 = vadd.f32 0.0, %v579
        %581 = vmatmul.f32.gmra.mxu0 %v295
        %v582 = vpop.f32.mrf.mxu0
        %v583 = vadd.f32 0.0, %v582
        %584 = vmatmul.f32.gmra.mxu0 %v296
        %v585 = vpop.f32.mrf.mxu0
        %v586 = vadd.f32 0.0, %v585
        %587 = vdwg.mxu0
        %588 = vmatpush.xpose.msra.mxu0 %v360
        %589 = vmatpush.xpose.msra.mxu0 %v359
        %590 = vmatpush.xpose.msra.mxu0 %v358
        %591 = vmatpush.xpose.msra.mxu0 %v357
        %592 = vmatpush.xpose.msra.mxu0 %v356
        %593 = vmatpush.xpose.msra.mxu0 %v355
        %594 = vmatpush.xpose.msra.mxu0 %v354
        %595 = vmatpush.xpose.msra.mxu0 %v353
        %596 = vmatpush.xpose.msra.mxu0 %v352
        %597 = vmatpush.xpose.msra.mxu0 %v351
        %598 = vmatpush.xpose.msra.mxu0 %v350
        %599 = vmatpush.xpose.msra.mxu0 %v349
        %600 = vmatpush.xpose.msra.mxu0 %v348
        %601 = vmatpush.xpose.msra.mxu0 %v347
        %602 = vmatpush.xpose.msra.mxu0 %v346
        %603 = vmatpush.xpose.msra.mxu0 %v345
        %604 = vmatmul.f32.gmra.mxu0 %v281
        %v605 = vpop.f32.mrf.mxu0
        %v606 = vadd.f32 0.0, %v605
        %607 = vmatmul.f32.gmra.mxu0 %v282
        %v608 = vpop.f32.mrf.mxu0
        %v609 = vadd.f32 0.0, %v608
        %610 = vmatmul.f32.gmra.mxu0 %v283
        %v611 = vpop.f32.mrf.mxu0
        %v612 = vadd.f32 0.0, %v611
        %613 = vmatmul.f32.gmra.mxu0 %v284
        %v614 = vpop.f32.mrf.mxu0
        %v615 = vadd.f32 0.0, %v614
        %616 = vmatmul.f32.gmra.mxu0 %v285
        %v617 = vpop.f32.mrf.mxu0
        %v618 = vadd.f32 0.0, %v617
        %619 = vmatmul.f32.gmra.mxu0 %v286
        %v620 = vpop.f32.mrf.mxu0
        %v621 = vadd.f32 0.0, %v620
        %622 = vmatmul.f32.gmra.mxu0 %v287
        %v623 = vpop.f32.mrf.mxu0
        %v624 = vadd.f32 0.0, %v623
        %625 = vmatmul.f32.gmra.mxu0 %v288
        %v626 = vpop.f32.mrf.mxu0
        %v627 = vadd.f32 0.0, %v626
        %628 = vmatmul.f32.gmra.mxu0 %v289
        %v629 = vpop.f32.mrf.mxu0
        %v630 = vadd.f32 0.0, %v629
        %631 = vmatmul.f32.gmra.mxu0 %v290
        %v632 = vpop.f32.mrf.mxu0
        %v633 = vadd.f32 0.0, %v632
        %634 = vmatmul.f32.gmra.mxu0 %v291
        %v635 = vpop.f32.mrf.mxu0
        %v636 = vadd.f32 0.0, %v635
        %637 = vmatmul.f32.gmra.mxu0 %v292
        %v638 = vpop.f32.mrf.mxu0
        %v639 = vadd.f32 0.0, %v638
        %640 = vmatmul.f32.gmra.mxu0 %v293
        %v641 = vpop.f32.mrf.mxu0
        %v642 = vadd.f32 0.0, %v641
        %643 = vmatmul.f32.gmra.mxu0 %v294
        %v644 = vpop.f32.mrf.mxu0
        %v645 = vadd.f32 0.0, %v644
        %646 = vmatmul.f32.gmra.mxu0 %v295
        %v647 = vpop.f32.mrf.mxu0
        %v648 = vadd.f32 0.0, %v647
        %649 = vmatmul.f32.gmra.mxu0 %v296
        %v650 = vpop.f32.mrf.mxu0
        %v651 = vadd.f32 0.0, %v650
        %652 = vdwg.mxu0
        %653 = vmatpush.xpose.msra.mxu0 %v376
        %654 = vmatpush.xpose.msra.mxu0 %v375
        %655 = vmatpush.xpose.msra.mxu0 %v374
        %656 = vmatpush.xpose.msra.mxu0 %v373
        %657 = vmatpush.xpose.msra.mxu0 %v372
        %658 = vmatpush.xpose.msra.mxu0 %v371
        %659 = vmatpush.xpose.msra.mxu0 %v370
        %660 = vmatpush.xpose.msra.mxu0 %v369
        %661 = vmatpush.xpose.msra.mxu0 %v368
        %662 = vmatpush.xpose.msra.mxu0 %v367
        %663 = vmatpush.xpose.msra.mxu0 %v366
        %664 = vmatpush.xpose.msra.mxu0 %v365
        %665 = vmatpush.xpose.msra.mxu0 %v364
        %666 = vmatpush.xpose.msra.mxu0 %v363
        %667 = vmatpush.xpose.msra.mxu0 %v362
        %668 = vmatpush.xpose.msra.mxu0 %v361
        %669 = vmatmul.f32.gmra.mxu0 %v281
        %v670 = vpop.f32.mrf.mxu0
        %v671 = vadd.f32 0.0, %v670
        %672 = vmatmul.f32.gmra.mxu0 %v282
        %v673 = vpop.f32.mrf.mxu0
        %v674 = vadd.f32 0.0, %v673
        %675 = vmatmul.f32.gmra.mxu0 %v283
        %v676 = vpop.f32.mrf.mxu0
        %v677 = vadd.f32 0.0, %v676
        %678 = vmatmul.f32.gmra.mxu0 %v284
        %v679 = vpop.f32.mrf.mxu0
        %v680 = vadd.f32 0.0, %v679
        %681 = vmatmul.f32.gmra.mxu0 %v285
        %v682 = vpop.f32.mrf.mxu0
        %v683 = vadd.f32 0.0, %v682
        %684 = vmatmul.f32.gmra.mxu0 %v286
        %v685 = vpop.f32.mrf.mxu0
        %v686 = vadd.f32 0.0, %v685
        %687 = vmatmul.f32.gmra.mxu0 %v287
        %v688 = vpop.f32.mrf.mxu0
        %v689 = vadd.f32 0.0, %v688
        %690 = vmatmul.f32.gmra.mxu0 %v288
        %v691 = vpop.f32.mrf.mxu0
        %v692 = vadd.f32 0.0, %v691
        %693 = vmatmul.f32.gmra.mxu0 %v289
        %v694 = vpop.f32.mrf.mxu0
        %v695 = vadd.f32 0.0, %v694
        %696 = vmatmul.f32.gmra.mxu0 %v290
        %v697 = vpop.f32.mrf.mxu0
        %v698 = vadd.f32 0.0, %v697
        %699 = vmatmul.f32.gmra.mxu0 %v291
        %v700 = vpop.f32.mrf.mxu0
        %v701 = vadd.f32 0.0, %v700
        %702 = vmatmul.f32.gmra.mxu0 %v292
        %v703 = vpop.f32.mrf.mxu0
        %v704 = vadd.f32 0.0, %v703
        %705 = vmatmul.f32.gmra.mxu0 %v293
        %v706 = vpop.f32.mrf.mxu0
        %v707 = vadd.f32 0.0, %v706
        %708 = vmatmul.f32.gmra.mxu0 %v294
        %v709 = vpop.f32.mrf.mxu0
        %v710 = vadd.f32 0.0, %v709
        %711 = vmatmul.f32.gmra.mxu0 %v295
        %v712 = vpop.f32.mrf.mxu0
        %v713 = vadd.f32 0.0, %v712
        %714 = vmatmul.f32.gmra.mxu0 %v296
        %v715 = vpop.f32.mrf.mxu0
        %v716 = vadd.f32 0.0, %v715
        %717 = vdwg.mxu0
        %718 = vmatpush.xpose.msra.mxu0 %v392
        %719 = vmatpush.xpose.msra.mxu0 %v391
        %720 = vmatpush.xpose.msra.mxu0 %v390
        %721 = vmatpush.xpose.msra.mxu0 %v389
        %722 = vmatpush.xpose.msra.mxu0 %v388
        %723 = vmatpush.xpose.msra.mxu0 %v387
        %724 = vmatpush.xpose.msra.mxu0 %v386
        %725 = vmatpush.xpose.msra.mxu0 %v385
        %726 = vmatpush.xpose.msra.mxu0 %v384
        %727 = vmatpush.xpose.msra.mxu0 %v383
        %728 = vmatpush.xpose.msra.mxu0 %v382
        %729 = vmatpush.xpose.msra.mxu0 %v381
        %730 = vmatpush.xpose.msra.mxu0 %v380
        %731 = vmatpush.xpose.msra.mxu0 %v379
        %732 = vmatpush.xpose.msra.mxu0 %v378
        %733 = vmatpush.xpose.msra.mxu0 %v377
        %734 = vmatmul.f32.gmra.mxu0 %v281
        %v735 = vpop.f32.mrf.mxu0
        %v736 = vadd.f32 0.0, %v735
        %737 = vmatmul.f32.gmra.mxu0 %v282
        %v738 = vpop.f32.mrf.mxu0
        %v739 = vadd.f32 0.0, %v738
        %740 = vmatmul.f32.gmra.mxu0 %v283
        %v741 = vpop.f32.mrf.mxu0
        %v742 = vadd.f32 0.0, %v741
        %743 = vmatmul.f32.gmra.mxu0 %v284
        %v744 = vpop.f32.mrf.mxu0
        %v745 = vadd.f32 0.0, %v744
        %746 = vmatmul.f32.gmra.mxu0 %v285
        %v747 = vpop.f32.mrf.mxu0
        %v748 = vadd.f32 0.0, %v747
        %749 = vmatmul.f32.gmra.mxu0 %v286
        %v750 = vpop.f32.mrf.mxu0
        %v751 = vadd.f32 0.0, %v750
        %752 = vmatmul.f32.gmra.mxu0 %v287
        %v753 = vpop.f32.mrf.mxu0
        %v754 = vadd.f32 0.0, %v753
        %755 = vmatmul.f32.gmra.mxu0 %v288
        %v756 = vpop.f32.mrf.mxu0
        %v757 = vadd.f32 0.0, %v756
        %758 = vmatmul.f32.gmra.mxu0 %v289
        %v759 = vpop.f32.mrf.mxu0
        %v760 = vadd.f32 0.0, %v759
        %761 = vmatmul.f32.gmra.mxu0 %v290
        %v762 = vpop.f32.mrf.mxu0
        %v763 = vadd.f32 0.0, %v762
        %764 = vmatmul.f32.gmra.mxu0 %v291
        %v765 = vpop.f32.mrf.mxu0
        %v766 = vadd.f32 0.0, %v765
        %767 = vmatmul.f32.gmra.mxu0 %v292
        %v768 = vpop.f32.mrf.mxu0
        %v769 = vadd.f32 0.0, %v768
        %770 = vmatmul.f32.gmra.mxu0 %v293
        %v771 = vpop.f32.mrf.mxu0
        %v772 = vadd.f32 0.0, %v771
        %773 = vmatmul.f32.gmra.mxu0 %v294
        %v774 = vpop.f32.mrf.mxu0
        %v775 = vadd.f32 0.0, %v774
        %776 = vmatmul.f32.gmra.mxu0 %v295
        %v777 = vpop.f32.mrf.mxu0
        %v778 = vadd.f32 0.0, %v777
        %779 = vmatmul.f32.gmra.mxu0 %v296
        %v780 = vpop.f32.mrf.mxu0
        %v781 = vadd.f32 0.0, %v780
        %782 = vdwg.mxu0
        %v783 = vmax.f32 %v411, %v476
        %v784 = vmax.f32 %v783, %v541
        %v785 = vmax.f32 %v784, %v606
        %v786 = vmax.f32 %v785, %v671
        %v787 = vmax.f32 %v786, %v736
        %788 = vmax.xlane.f32.xlu0 %v787
        %v789 = vpop.xlane.xlu0 %788
        %v790 = vmax.f32 %v414, %v479
        %v791 = vmax.f32 %v790, %v544
        %v792 = vmax.f32 %v791, %v609
        %v793 = vmax.f32 %v792, %v674
        %v794 = vmax.f32 %v793, %v739
        %795 = vmax.xlane.f32.xlu0 %v794
        %v796 = vpop.xlane.xlu0 %795
        %v797 = vmax.f32 %v417, %v482
        %v798 = vmax.f32 %v797, %v547
        %v799 = vmax.f32 %v798, %v612
        %v800 = vmax.f32 %v799, %v677
        %v801 = vmax.f32 %v800, %v742
        %802 = vmax.xlane.f32.xlu0 %v801
        %v803 = vpop.xlane.xlu0 %802
        %v804 = vmax.f32 %v420, %v485
        %v805 = vmax.f32 %v804, %v550
        %v806 = vmax.f32 %v805, %v615
        %v807 = vmax.f32 %v806, %v680
        %v808 = vmax.f32 %v807, %v745
        %809 = vmax.xlane.f32.xlu0 %v808
        %v810 = vpop.xlane.xlu0 %809
        %v811 = vmax.f32 %v423, %v488
        %v812 = vmax.f32 %v811, %v553
        %v813 = vmax.f32 %v812, %v618
        %v814 = vmax.f32 %v813, %v683
        %v815 = vmax.f32 %v814, %v748
        %816 = vmax.xlane.f32.xlu0 %v815
        %v817 = vpop.xlane.xlu0 %816
        %v818 = vmax.f32 %v426, %v491
        %v819 = vmax.f32 %v818, %v556
        %v820 = vmax.f32 %v819, %v621
        %v821 = vmax.f32 %v820, %v686
        %v822 = vmax.f32 %v821, %v751
        %823 = vmax.xlane.f32.xlu0 %v822
        %v824 = vpop.xlane.xlu0 %823
        %v825 = vmax.f32 %v429, %v494
        %v826 = vmax.f32 %v825, %v559
        %v827 = vmax.f32 %v826, %v624
        %v828 = vmax.f32 %v827, %v689
        %v829 = vmax.f32 %v828, %v754
        %830 = vmax.xlane.f32.xlu0 %v829
        %v831 = vpop.xlane.xlu0 %830
        %v832 = vmax.f32 %v432, %v497
        %v833 = vmax.f32 %v832, %v562
        %v834 = vmax.f32 %v833, %v627
        %v835 = vmax.f32 %v834, %v692
        %v836 = vmax.f32 %v835, %v757
        %837 = vmax.xlane.f32.xlu0 %v836
        %v838 = vpop.xlane.xlu0 %837
        %v839 = vmax.f32 %v435, %v500
        %v840 = vmax.f32 %v839, %v565
        %v841 = vmax.f32 %v840, %v630
        %v842 = vmax.f32 %v841, %v695
        %v843 = vmax.f32 %v842, %v760
        %844 = vmax.xlane.f32.xlu0 %v843
        %v845 = vpop.xlane.xlu0 %844
        %v846 = vmax.f32 %v438, %v503
        %v847 = vmax.f32 %v846, %v568
        %v848 = vmax.f32 %v847, %v633
        %v849 = vmax.f32 %v848, %v698
        %v850 = vmax.f32 %v849, %v763
        %851 = vmax.xlane.f32.xlu0 %v850
        %v852 = vpop.xlane.xlu0 %851
        %v853 = vmax.f32 %v441, %v506
        %v854 = vmax.f32 %v853, %v571
        %v855 = vmax.f32 %v854, %v636
        %v856 = vmax.f32 %v855, %v701
        %v857 = vmax.f32 %v856, %v766
        %858 = vmax.xlane.f32.xlu0 %v857
        %v859 = vpop.xlane.xlu0 %858
        %v860 = vmax.f32 %v444, %v509
        %v861 = vmax.f32 %v860, %v574
        %v862 = vmax.f32 %v861, %v639
        %v863 = vmax.f32 %v862, %v704
        %v864 = vmax.f32 %v863, %v769
        %865 = vmax.xlane.f32.xlu0 %v864
        %v866 = vpop.xlane.xlu0 %865
        %v867 = vmax.f32 %v447, %v512
        %v868 = vmax.f32 %v867, %v577
        %v869 = vmax.f32 %v868, %v642
        %v870 = vmax.f32 %v869, %v707
        %v871 = vmax.f32 %v870, %v772
        %872 = vmax.xlane.f32.xlu0 %v871
        %v873 = vpop.xlane.xlu0 %872
        %v874 = vmax.f32 %v450, %v515
        %v875 = vmax.f32 %v874, %v580
        %v876 = vmax.f32 %v875, %v645
        %v877 = vmax.f32 %v876, %v710
        %v878 = vmax.f32 %v877, %v775
        %879 = vmax.xlane.f32.xlu0 %v878
        %v880 = vpop.xlane.xlu0 %879
        %v881 = vmax.f32 %v453, %v518
        %v882 = vmax.f32 %v881, %v583
        %v883 = vmax.f32 %v882, %v648
        %v884 = vmax.f32 %v883, %v713
        %v885 = vmax.f32 %v884, %v778
        %886 = vmax.xlane.f32.xlu0 %v885
        %v887 = vpop.xlane.xlu0 %886
        %v888 = vmax.f32 %v456, %v521
        %v889 = vmax.f32 %v888, %v586
        %v890 = vmax.f32 %v889, %v651
        %v891 = vmax.f32 %v890, %v716
        %v892 = vmax.f32 %v891, %v781
        %893 = vmax.xlane.f32.xlu0 %v892
        %v894 = vpop.xlane.xlu0 %893
        %v895 = vsub.f32 %v411, %v789
        %v896 = vsub.f32 %v476, %v789
        %v897 = vsub.f32 %v541, %v789
        %v898 = vsub.f32 %v606, %v789
        %v899 = vsub.f32 %v671, %v789
        %v900 = vsub.f32 %v736, %v789
        %v901 = vsub.f32 %v414, %v796
        %v902 = vsub.f32 %v479, %v796
        %v903 = vsub.f32 %v544, %v796
        %v904 = vsub.f32 %v609, %v796
        %v905 = vsub.f32 %v674, %v796
        %v906 = vsub.f32 %v739, %v796
        %v907 = vsub.f32 %v417, %v803
        %v908 = vsub.f32 %v482, %v803
        %v909 = vsub.f32 %v547, %v803
        %v910 = vsub.f32 %v612, %v803
        %v911 = vsub.f32 %v677, %v803
        %v912 = vsub.f32 %v742, %v803
        %v913 = vsub.f32 %v420, %v810
        %v914 = vsub.f32 %v485, %v810
        %v915 = vsub.f32 %v550, %v810
        %v916 = vsub.f32 %v615, %v810
        %v917 = vsub.f32 %v680, %v810
        %v918 = vsub.f32 %v745, %v810
        %v919 = vsub.f32 %v423, %v817
        %v920 = vsub.f32 %v488, %v817
        %v921 = vsub.f32 %v553, %v817
        %v922 = vsub.f32 %v618, %v817
        %v923 = vsub.f32 %v683, %v817
        %v924 = vsub.f32 %v748, %v817
        %v925 = vsub.f32 %v426, %v824
        %v926 = vsub.f32 %v491, %v824
        %v927 = vsub.f32 %v556, %v824
        %v928 = vsub.f32 %v621, %v824
        %v929 = vsub.f32 %v686, %v824
        %v930 = vsub.f32 %v751, %v824
        %v931 = vsub.f32 %v429, %v831
        %v932 = vsub.f32 %v494, %v831
        %v933 = vsub.f32 %v559, %v831
        %v934 = vsub.f32 %v624, %v831
        %v935 = vsub.f32 %v689, %v831
        %v936 = vsub.f32 %v754, %v831
        %v937 = vsub.f32 %v432, %v838
        %v938 = vsub.f32 %v497, %v838
        %v939 = vsub.f32 %v562, %v838
        %v940 = vsub.f32 %v627, %v838
        %v941 = vsub.f32 %v692, %v838
        %v942 = vsub.f32 %v757, %v838
        %v943 = vsub.f32 %v435, %v845
        %v944 = vsub.f32 %v500, %v845
        %v945 = vsub.f32 %v565, %v845
        %v946 = vsub.f32 %v630, %v845
        %v947 = vsub.f32 %v695, %v845
        %v948 = vsub.f32 %v760, %v845
        %v949 = vsub.f32 %v438, %v852
        %v950 = vsub.f32 %v503, %v852
        %v951 = vsub.f32 %v568, %v852
        %v952 = vsub.f32 %v633, %v852
        %v953 = vsub.f32 %v698, %v852
        %v954 = vsub.f32 %v763, %v852
        %v955 = vsub.f32 %v441, %v859
        %v956 = vsub.f32 %v506, %v859
        %v957 = vsub.f32 %v571, %v859
        %v958 = vsub.f32 %v636, %v859
        %v959 = vsub.f32 %v701, %v859
        %v960 = vsub.f32 %v766, %v859
        %v961 = vsub.f32 %v444, %v866
        %v962 = vsub.f32 %v509, %v866
        %v963 = vsub.f32 %v574, %v866
        %v964 = vsub.f32 %v639, %v866
        %v965 = vsub.f32 %v704, %v866
        %v966 = vsub.f32 %v769, %v866
        %v967 = vsub.f32 %v447, %v873
        %v968 = vsub.f32 %v512, %v873
        %v969 = vsub.f32 %v577, %v873
        %v970 = vsub.f32 %v642, %v873
        %v971 = vsub.f32 %v707, %v873
        %v972 = vsub.f32 %v772, %v873
        %v973 = vsub.f32 %v450, %v880
        %v974 = vsub.f32 %v515, %v880
        %v975 = vsub.f32 %v580, %v880
        %v976 = vsub.f32 %v645, %v880
        %v977 = vsub.f32 %v710, %v880
        %v978 = vsub.f32 %v775, %v880
        %v979 = vsub.f32 %v453, %v887
        %v980 = vsub.f32 %v518, %v887
        %v981 = vsub.f32 %v583, %v887
        %v982 = vsub.f32 %v648, %v887
        %v983 = vsub.f32 %v713, %v887
        %v984 = vsub.f32 %v778, %v887
        %v985 = vsub.f32 %v456, %v894
        %v986 = vsub.f32 %v521, %v894
        %v987 = vsub.f32 %v586, %v894
        %v988 = vsub.f32 %v651, %v894
        %v989 = vsub.f32 %v716, %v894
        %v990 = vsub.f32 %v781, %v894
        %v991 = vmul.f32 %v895, 1.442695
        %v992 = vpow.pop %v991
        %v993 = vmul.f32 %v896, 1.442695
        %v994 = vpow.pop %v993
        %v995 = vmul.f32 %v897, 1.442695
        %v996 = vpow.pop %v995
        %v997 = vmul.f32 %v898, 1.442695
        %v998 = vpow.pop %v997
        %v999 = vmul.f32 %v899, 1.442695
        %v1000 = vpow.pop %v999
        %v1001 = vmul.f32 %v900, 1.442695
        %v1002 = vpow.pop %v1001
        %v1003 = vmul.f32 %v901, 1.442695
        %v1004 = vpow.pop %v1003
        %v1005 = vmul.f32 %v902, 1.442695
        %v1006 = vpow.pop %v1005
        %v1007 = vmul.f32 %v903, 1.442695
        %v1008 = vpow.pop %v1007
        %v1009 = vmul.f32 %v904, 1.442695
        %v1010 = vpow.pop %v1009
        %v1011 = vmul.f32 %v905, 1.442695
        %v1012 = vpow.pop %v1011
        %v1013 = vmul.f32 %v906, 1.442695
        %v1014 = vpow.pop %v1013
        %v1015 = vmul.f32 %v907, 1.442695
        %v1016 = vpow.pop %v1015
        %v1017 = vmul.f32 %v908, 1.442695
        %v1018 = vpow.pop %v1017
        %v1019 = vmul.f32 %v909, 1.442695
        %v1020 = vpow.pop %v1019
        %v1021 = vmul.f32 %v910, 1.442695
        %v1022 = vpow.pop %v1021
        %v1023 = vmul.f32 %v911, 1.442695
        %v1024 = vpow.pop %v1023
        %v1025 = vmul.f32 %v912, 1.442695
        %v1026 = vpow.pop %v1025
        %v1027 = vmul.f32 %v913, 1.442695
        %v1028 = vpow.pop %v1027
        %v1029 = vmul.f32 %v914, 1.442695
        %v1030 = vpow.pop %v1029
        %v1031 = vmul.f32 %v915, 1.442695
        %v1032 = vpow.pop %v1031
        %v1033 = vmul.f32 %v916, 1.442695
        %v1034 = vpow.pop %v1033
        %v1035 = vmul.f32 %v917, 1.442695
        %v1036 = vpow.pop %v1035
        %v1037 = vmul.f32 %v918, 1.442695
        %v1038 = vpow.pop %v1037
        %v1039 = vmul.f32 %v919, 1.442695
        %v1040 = vpow.pop %v1039
        %v1041 = vmul.f32 %v920, 1.442695
        %v1042 = vpow.pop %v1041
        %v1043 = vmul.f32 %v921, 1.442695
        %v1044 = vpow.pop %v1043
        %v1045 = vmul.f32 %v922, 1.442695
        %v1046 = vpow.pop %v1045
        %v1047 = vmul.f32 %v923, 1.442695
        %v1048 = vpow.pop %v1047
        %v1049 = vmul.f32 %v924, 1.442695
        %v1050 = vpow.pop %v1049
        %v1051 = vmul.f32 %v925, 1.442695
        %v1052 = vpow.pop %v1051
        %v1053 = vmul.f32 %v926, 1.442695
        %v1054 = vpow.pop %v1053
        %v1055 = vmul.f32 %v927, 1.442695
        %v1056 = vpow.pop %v1055
        %v1057 = vmul.f32 %v928, 1.442695
        %v1058 = vpow.pop %v1057
        %v1059 = vmul.f32 %v929, 1.442695
        %v1060 = vpow.pop %v1059
        %v1061 = vmul.f32 %v930, 1.442695
        %v1062 = vpow.pop %v1061
        %v1063 = vmul.f32 %v931, 1.442695
        %v1064 = vpow.pop %v1063
        %v1065 = vmul.f32 %v932, 1.442695
        %v1066 = vpow.pop %v1065
        %v1067 = vmul.f32 %v933, 1.442695
        %v1068 = vpow.pop %v1067
        %v1069 = vmul.f32 %v934, 1.442695
        %v1070 = vpow.pop %v1069
        %v1071 = vmul.f32 %v935, 1.442695
        %v1072 = vpow.pop %v1071
        %v1073 = vmul.f32 %v936, 1.442695
        %v1074 = vpow.pop %v1073
        %v1075 = vmul.f32 %v937, 1.442695
        %v1076 = vpow.pop %v1075
        %v1077 = vmul.f32 %v938, 1.442695
        %v1078 = vpow.pop %v1077
        %v1079 = vmul.f32 %v939, 1.442695
        %v1080 = vpow.pop %v1079
        %v1081 = vmul.f32 %v940, 1.442695
        %v1082 = vpow.pop %v1081
        %v1083 = vmul.f32 %v941, 1.442695
        %v1084 = vpow.pop %v1083
        %v1085 = vmul.f32 %v942, 1.442695
        %v1086 = vpow.pop %v1085
        %v1087 = vmul.f32 %v943, 1.442695
        %v1088 = vpow.pop %v1087
        %v1089 = vmul.f32 %v944, 1.442695
        %v1090 = vpow.pop %v1089
        %v1091 = vmul.f32 %v945, 1.442695
        %v1092 = vpow.pop %v1091
        %v1093 = vmul.f32 %v946, 1.442695
        %v1094 = vpow.pop %v1093
        %v1095 = vmul.f32 %v947, 1.442695
        %v1096 = vpow.pop %v1095
        %v1097 = vmul.f32 %v948, 1.442695
        %v1098 = vpow.pop %v1097
        %v1099 = vmul.f32 %v949, 1.442695
        %v1100 = vpow.pop %v1099
        %v1101 = vmul.f32 %v950, 1.442695
        %v1102 = vpow.pop %v1101
        %v1103 = vmul.f32 %v951, 1.442695
        %v1104 = vpow.pop %v1103
        %v1105 = vmul.f32 %v952, 1.442695
        %v1106 = vpow.pop %v1105
        %v1107 = vmul.f32 %v953, 1.442695
        %v1108 = vpow.pop %v1107
        %v1109 = vmul.f32 %v954, 1.442695
        %v1110 = vpow.pop %v1109
        %v1111 = vmul.f32 %v955, 1.442695
        %v1112 = vpow.pop %v1111
        %v1113 = vmul.f32 %v956, 1.442695
        %v1114 = vpow.pop %v1113
        %v1115 = vmul.f32 %v957, 1.442695
        %v1116 = vpow.pop %v1115
        %v1117 = vmul.f32 %v958, 1.442695
        %v1118 = vpow.pop %v1117
        %v1119 = vmul.f32 %v959, 1.442695
        %v1120 = vpow.pop %v1119
        %v1121 = vmul.f32 %v960, 1.442695
        %v1122 = vpow.pop %v1121
        %v1123 = vmul.f32 %v961, 1.442695
        %v1124 = vpow.pop %v1123
        %v1125 = vmul.f32 %v962, 1.442695
        %v1126 = vpow.pop %v1125
        %v1127 = vmul.f32 %v963, 1.442695
        %v1128 = vpow.pop %v1127
        %v1129 = vmul.f32 %v964, 1.442695
        %v1130 = vpow.pop %v1129
        %v1131 = vmul.f32 %v965, 1.442695
        %v1132 = vpow.pop %v1131
        %v1133 = vmul.f32 %v966, 1.442695
        %v1134 = vpow.pop %v1133
        %v1135 = vmul.f32 %v967, 1.442695
        %v1136 = vpow.pop %v1135
        %v1137 = vmul.f32 %v968, 1.442695
        %v1138 = vpow.pop %v1137
        %v1139 = vmul.f32 %v969, 1.442695
        %v1140 = vpow.pop %v1139
        %v1141 = vmul.f32 %v970, 1.442695
        %v1142 = vpow.pop %v1141
        %v1143 = vmul.f32 %v971, 1.442695
        %v1144 = vpow.pop %v1143
        %v1145 = vmul.f32 %v972, 1.442695
        %v1146 = vpow.pop %v1145
        %v1147 = vmul.f32 %v973, 1.442695
        %v1148 = vpow.pop %v1147
        %v1149 = vmul.f32 %v974, 1.442695
        %v1150 = vpow.pop %v1149
        %v1151 = vmul.f32 %v975, 1.442695
        %v1152 = vpow.pop %v1151
        %v1153 = vmul.f32 %v976, 1.442695
        %v1154 = vpow.pop %v1153
        %v1155 = vmul.f32 %v977, 1.442695
        %v1156 = vpow.pop %v1155
        %v1157 = vmul.f32 %v978, 1.442695
        %v1158 = vpow.pop %v1157
        %v1159 = vmul.f32 %v979, 1.442695
        %v1160 = vpow.pop %v1159
        %v1161 = vmul.f32 %v980, 1.442695
        %v1162 = vpow.pop %v1161
        %v1163 = vmul.f32 %v981, 1.442695
        %v1164 = vpow.pop %v1163
        %v1165 = vmul.f32 %v982, 1.442695
        %v1166 = vpow.pop %v1165
        %v1167 = vmul.f32 %v983, 1.442695
        %v1168 = vpow.pop %v1167
        %v1169 = vmul.f32 %v984, 1.442695
        %v1170 = vpow.pop %v1169
        %v1171 = vmul.f32 %v985, 1.442695
        %v1172 = vpow.pop %v1171
        %v1173 = vmul.f32 %v986, 1.442695
        %v1174 = vpow.pop %v1173
        %v1175 = vmul.f32 %v987, 1.442695
        %v1176 = vpow.pop %v1175
        %v1177 = vmul.f32 %v988, 1.442695
        %v1178 = vpow.pop %v1177
        %v1179 = vmul.f32 %v989, 1.442695
        %v1180 = vpow.pop %v1179
        %v1181 = vmul.f32 %v990, 1.442695
        %v1182 = vpow.pop %v1181
        %v1183 = vadd.f32 %v992, %v994
        %v1184 = vadd.f32 %v1183, %v996
        %v1185 = vadd.f32 %v1184, %v998
        %v1186 = vadd.f32 %v1185, %v1000
        %v1187 = vadd.f32 %v1186, %v1002
        %1188 = vadd.xlane.f32.xlu0 %v1187
        %v1189 = vpop.xlane.xlu0 %1188
        %v1190 = vadd.f32 %v1004, %v1006
        %v1191 = vadd.f32 %v1190, %v1008
        %v1192 = vadd.f32 %v1191, %v1010
        %v1193 = vadd.f32 %v1192, %v1012
        %v1194 = vadd.f32 %v1193, %v1014
        %1195 = vadd.xlane.f32.xlu0 %v1194
        %v1196 = vpop.xlane.xlu0 %1195
        %v1197 = vadd.f32 %v1016, %v1018
        %v1198 = vadd.f32 %v1197, %v1020
        %v1199 = vadd.f32 %v1198, %v1022
        %v1200 = vadd.f32 %v1199, %v1024
        %v1201 = vadd.f32 %v1200, %v1026
        %1202 = vadd.xlane.f32.xlu0 %v1201
        %v1203 = vpop.xlane.xlu0 %1202
        %v1204 = vadd.f32 %v1028, %v1030
        %v1205 = vadd.f32 %v1204, %v1032
        %v1206 = vadd.f32 %v1205, %v1034
        %v1207 = vadd.f32 %v1206, %v1036
        %v1208 = vadd.f32 %v1207, %v1038
        %1209 = vadd.xlane.f32.xlu0 %v1208
        %v1210 = vpop.xlane.xlu0 %1209
        %v1211 = vadd.f32 %v1040, %v1042
        %v1212 = vadd.f32 %v1211, %v1044
        %v1213 = vadd.f32 %v1212, %v1046
        %v1214 = vadd.f32 %v1213, %v1048
        %v1215 = vadd.f32 %v1214, %v1050
        %1216 = vadd.xlane.f32.xlu0 %v1215
        %v1217 = vpop.xlane.xlu0 %1216
        %v1218 = vadd.f32 %v1052, %v1054
        %v1219 = vadd.f32 %v1218, %v1056
        %v1220 = vadd.f32 %v1219, %v1058
        %v1221 = vadd.f32 %v1220, %v1060
        %v1222 = vadd.f32 %v1221, %v1062
        %1223 = vadd.xlane.f32.xlu0 %v1222
        %v1224 = vpop.xlane.xlu0 %1223
        %v1225 = vadd.f32 %v1064, %v1066
        %v1226 = vadd.f32 %v1225, %v1068
        %v1227 = vadd.f32 %v1226, %v1070
        %v1228 = vadd.f32 %v1227, %v1072
        %v1229 = vadd.f32 %v1228, %v1074
        %1230 = vadd.xlane.f32.xlu0 %v1229
        %v1231 = vpop.xlane.xlu0 %1230
        %v1232 = vadd.f32 %v1076, %v1078
        %v1233 = vadd.f32 %v1232, %v1080
        %v1234 = vadd.f32 %v1233, %v1082
        %v1235 = vadd.f32 %v1234, %v1084
        %v1236 = vadd.f32 %v1235, %v1086
        %1237 = vadd.xlane.f32.xlu0 %v1236
        %v1238 = vpop.xlane.xlu0 %1237
        %v1239 = vadd.f32 %v1088, %v1090
        %v1240 = vadd.f32 %v1239, %v1092
        %v1241 = vadd.f32 %v1240, %v1094
        %v1242 = vadd.f32 %v1241, %v1096
        %v1243 = vadd.f32 %v1242, %v1098
        %1244 = vadd.xlane.f32.xlu0 %v1243
        %v1245 = vpop.xlane.xlu0 %1244
        %v1246 = vadd.f32 %v1100, %v1102
        %v1247 = vadd.f32 %v1246, %v1104
        %v1248 = vadd.f32 %v1247, %v1106
        %v1249 = vadd.f32 %v1248, %v1108
        %v1250 = vadd.f32 %v1249, %v1110
        %1251 = vadd.xlane.f32.xlu0 %v1250
        %v1252 = vpop.xlane.xlu0 %1251
        %v1253 = vadd.f32 %v1112, %v1114
        %v1254 = vadd.f32 %v1253, %v1116
        %v1255 = vadd.f32 %v1254, %v1118
        %v1256 = vadd.f32 %v1255, %v1120
        %v1257 = vadd.f32 %v1256, %v1122
        %1258 = vadd.xlane.f32.xlu0 %v1257
        %v1259 = vpop.xlane.xlu0 %1258
        %v1260 = vadd.f32 %v1124, %v1126
        %v1261 = vadd.f32 %v1260, %v1128
        %v1262 = vadd.f32 %v1261, %v1130
        %v1263 = vadd.f32 %v1262, %v1132
        %v1264 = vadd.f32 %v1263, %v1134
        %1265 = vadd.xlane.f32.xlu0 %v1264
        %v1266 = vpop.xlane.xlu0 %1265
        %v1267 = vadd.f32 %v1136, %v1138
        %v1268 = vadd.f32 %v1267, %v1140
        %v1269 = vadd.f32 %v1268, %v1142
        %v1270 = vadd.f32 %v1269, %v1144
        %v1271 = vadd.f32 %v1270, %v1146
        %1272 = vadd.xlane.f32.xlu0 %v1271
        %v1273 = vpop.xlane.xlu0 %1272
        %v1274 = vadd.f32 %v1148, %v1150
        %v1275 = vadd.f32 %v1274, %v1152
        %v1276 = vadd.f32 %v1275, %v1154
        %v1277 = vadd.f32 %v1276, %v1156
        %v1278 = vadd.f32 %v1277, %v1158
        %1279 = vadd.xlane.f32.xlu0 %v1278
        %v1280 = vpop.xlane.xlu0 %1279
        %v1281 = vadd.f32 %v1160, %v1162
        %v1282 = vadd.f32 %v1281, %v1164
        %v1283 = vadd.f32 %v1282, %v1166
        %v1284 = vadd.f32 %v1283, %v1168
        %v1285 = vadd.f32 %v1284, %v1170
        %1286 = vadd.xlane.f32.xlu0 %v1285
        %v1287 = vpop.xlane.xlu0 %1286
        %v1288 = vadd.f32 %v1172, %v1174
        %v1289 = vadd.f32 %v1288, %v1176
        %v1290 = vadd.f32 %v1289, %v1178
        %v1291 = vadd.f32 %v1290, %v1180
        %v1292 = vadd.f32 %v1291, %v1182
        %1293 = vadd.xlane.f32.xlu0 %v1292
        %v1294 = vpop.xlane.xlu0 %1293
        %v1295 = vrcp.pop %v1189
        %v1296 = vmul.f32 %v1189, %v1295
        %v1297 = vsub.f32 1.0, %v1296
        %v1298 = vmul.f32 %v1295, %v1297
        %v1299 = vadd.f32 %v1295, %v1298
        %vm1300 = vweird.f32 %v1189
        %vm1301 = vweird.f32 %v1295
        %vm1302 = vmor %vm1300, %vm1301
        %v1303 = vsel %vm1302, %v1295, %v1299
        %v1304 = vand.u32 2147483647, %v1189
        %vm1305 = vcmp.eq.f32.partialorder %v1304, 8.507059e+37
        %v1306 = vand.u32 %v1189, 2147483648
        %v1307 = vor.u32 1.1754944e-38, %v1306
        %v1308 = vsel %vm1305, %v1307, %v1303
        %v1309 = vrcp.pop %v1196
        %v1310 = vmul.f32 %v1196, %v1309
        %v1311 = vsub.f32 1.0, %v1310
        %v1312 = vmul.f32 %v1309, %v1311
        %v1313 = vadd.f32 %v1309, %v1312
        %vm1314 = vweird.f32 %v1196
        %vm1315 = vweird.f32 %v1309
        %vm1316 = vmor %vm1314, %vm1315
        %v1317 = vsel %vm1316, %v1309, %v1313
        %v1318 = vand.u32 2147483647, %v1196
        %vm1319 = vcmp.eq.f32.partialorder %v1318, 8.507059e+37
        %v1320 = vand.u32 %v1196, 2147483648
        %v1321 = vor.u32 1.1754944e-38, %v1320
        %v1322 = vsel %vm1319, %v1321, %v1317
        %v1323 = vrcp.pop %v1203
        %v1324 = vmul.f32 %v1203, %v1323
        %v1325 = vsub.f32 1.0, %v1324
        %v1326 = vmul.f32 %v1323, %v1325
        %v1327 = vadd.f32 %v1323, %v1326
        %vm1328 = vweird.f32 %v1203
        %vm1329 = vweird.f32 %v1323
        %vm1330 = vmor %vm1328, %vm1329
        %v1331 = vsel %vm1330, %v1323, %v1327
        %v1332 = vand.u32 2147483647, %v1203
        %vm1333 = vcmp.eq.f32.partialorder %v1332, 8.507059e+37
        %v1334 = vand.u32 %v1203, 2147483648
        %v1335 = vor.u32 1.1754944e-38, %v1334
        %v1336 = vsel %vm1333, %v1335, %v1331
        %v1337 = vrcp.pop %v1210
        %v1338 = vmul.f32 %v1210, %v1337
        %v1339 = vsub.f32 1.0, %v1338
        %v1340 = vmul.f32 %v1337, %v1339
        %v1341 = vadd.f32 %v1337, %v1340
        %vm1342 = vweird.f32 %v1210
        %vm1343 = vweird.f32 %v1337
        %vm1344 = vmor %vm1342, %vm1343
        %v1345 = vsel %vm1344, %v1337, %v1341
        %v1346 = vand.u32 2147483647, %v1210
        %vm1347 = vcmp.eq.f32.partialorder %v1346, 8.507059e+37
        %v1348 = vand.u32 %v1210, 2147483648
        %v1349 = vor.u32 1.1754944e-38, %v1348
        %v1350 = vsel %vm1347, %v1349, %v1345
        %v1351 = vrcp.pop %v1217
        %v1352 = vmul.f32 %v1217, %v1351
        %v1353 = vsub.f32 1.0, %v1352
        %v1354 = vmul.f32 %v1351, %v1353
        %v1355 = vadd.f32 %v1351, %v1354
        %vm1356 = vweird.f32 %v1217
        %vm1357 = vweird.f32 %v1351
        %vm1358 = vmor %vm1356, %vm1357
        %v1359 = vsel %vm1358, %v1351, %v1355
        %v1360 = vand.u32 2147483647, %v1217
        %vm1361 = vcmp.eq.f32.partialorder %v1360, 8.507059e+37
        %v1362 = vand.u32 %v1217, 2147483648
        %v1363 = vor.u32 1.1754944e-38, %v1362
        %v1364 = vsel %vm1361, %v1363, %v1359
        %v1365 = vrcp.pop %v1224
        %v1366 = vmul.f32 %v1224, %v1365
        %v1367 = vsub.f32 1.0, %v1366
        %v1368 = vmul.f32 %v1365, %v1367
        %v1369 = vadd.f32 %v1365, %v1368
        %vm1370 = vweird.f32 %v1224
        %vm1371 = vweird.f32 %v1365
        %vm1372 = vmor %vm1370, %vm1371
        %v1373 = vsel %vm1372, %v1365, %v1369
        %v1374 = vand.u32 2147483647, %v1224
        %vm1375 = vcmp.eq.f32.partialorder %v1374, 8.507059e+37
        %v1376 = vand.u32 %v1224, 2147483648
        %v1377 = vor.u32 1.1754944e-38, %v1376
        %v1378 = vsel %vm1375, %v1377, %v1373
        %v1379 = vrcp.pop %v1231
        %v1380 = vmul.f32 %v1231, %v1379
        %v1381 = vsub.f32 1.0, %v1380
        %v1382 = vmul.f32 %v1379, %v1381
        %v1383 = vadd.f32 %v1379, %v1382
        %vm1384 = vweird.f32 %v1231
        %vm1385 = vweird.f32 %v1379
        %vm1386 = vmor %vm1384, %vm1385
        %v1387 = vsel %vm1386, %v1379, %v1383
        %v1388 = vand.u32 2147483647, %v1231
        %vm1389 = vcmp.eq.f32.partialorder %v1388, 8.507059e+37
        %v1390 = vand.u32 %v1231, 2147483648
        %v1391 = vor.u32 1.1754944e-38, %v1390
        %v1392 = vsel %vm1389, %v1391, %v1387
        %v1393 = vrcp.pop %v1238
        %v1394 = vmul.f32 %v1238, %v1393
        %v1395 = vsub.f32 1.0, %v1394
        %v1396 = vmul.f32 %v1393, %v1395
        %v1397 = vadd.f32 %v1393, %v1396
        %vm1398 = vweird.f32 %v1238
        %vm1399 = vweird.f32 %v1393
        %vm1400 = vmor %vm1398, %vm1399
        %v1401 = vsel %vm1400, %v1393, %v1397
        %v1402 = vand.u32 2147483647, %v1238
        %vm1403 = vcmp.eq.f32.partialorder %v1402, 8.507059e+37
        %v1404 = vand.u32 %v1238, 2147483648
        %v1405 = vor.u32 1.1754944e-38, %v1404
        %v1406 = vsel %vm1403, %v1405, %v1401
        %v1407 = vrcp.pop %v1245
        %v1408 = vmul.f32 %v1245, %v1407
        %v1409 = vsub.f32 1.0, %v1408
        %v1410 = vmul.f32 %v1407, %v1409
        %v1411 = vadd.f32 %v1407, %v1410
        %vm1412 = vweird.f32 %v1245
        %vm1413 = vweird.f32 %v1407
        %vm1414 = vmor %vm1412, %vm1413
        %v1415 = vsel %vm1414, %v1407, %v1411
        %v1416 = vand.u32 2147483647, %v1245
        %vm1417 = vcmp.eq.f32.partialorder %v1416, 8.507059e+37
        %v1418 = vand.u32 %v1245, 2147483648
        %v1419 = vor.u32 1.1754944e-38, %v1418
        %v1420 = vsel %vm1417, %v1419, %v1415
        %v1421 = vrcp.pop %v1252
        %v1422 = vmul.f32 %v1252, %v1421
        %v1423 = vsub.f32 1.0, %v1422
        %v1424 = vmul.f32 %v1421, %v1423
        %v1425 = vadd.f32 %v1421, %v1424
        %vm1426 = vweird.f32 %v1252
        %vm1427 = vweird.f32 %v1421
        %vm1428 = vmor %vm1426, %vm1427
        %v1429 = vsel %vm1428, %v1421, %v1425
        %v1430 = vand.u32 2147483647, %v1252
        %vm1431 = vcmp.eq.f32.partialorder %v1430, 8.507059e+37
        %v1432 = vand.u32 %v1252, 2147483648
        %v1433 = vor.u32 1.1754944e-38, %v1432
        %v1434 = vsel %vm1431, %v1433, %v1429
        %v1435 = vrcp.pop %v1259
        %v1436 = vmul.f32 %v1259, %v1435
        %v1437 = vsub.f32 1.0, %v1436
        %v1438 = vmul.f32 %v1435, %v1437
        %v1439 = vadd.f32 %v1435, %v1438
        %vm1440 = vweird.f32 %v1259
        %vm1441 = vweird.f32 %v1435
        %vm1442 = vmor %vm1440, %vm1441
        %v1443 = vsel %vm1442, %v1435, %v1439
        %v1444 = vand.u32 2147483647, %v1259
        %vm1445 = vcmp.eq.f32.partialorder %v1444, 8.507059e+37
        %v1446 = vand.u32 %v1259, 2147483648
        %v1447 = vor.u32 1.1754944e-38, %v1446
        %v1448 = vsel %vm1445, %v1447, %v1443
        %v1449 = vrcp.pop %v1266
        %v1450 = vmul.f32 %v1266, %v1449
        %v1451 = vsub.f32 1.0, %v1450
        %v1452 = vmul.f32 %v1449, %v1451
        %v1453 = vadd.f32 %v1449, %v1452
        %vm1454 = vweird.f32 %v1266
        %vm1455 = vweird.f32 %v1449
        %vm1456 = vmor %vm1454, %vm1455
        %v1457 = vsel %vm1456, %v1449, %v1453
        %v1458 = vand.u32 2147483647, %v1266
        %vm1459 = vcmp.eq.f32.partialorder %v1458, 8.507059e+37
        %v1460 = vand.u32 %v1266, 2147483648
        %v1461 = vor.u32 1.1754944e-38, %v1460
        %v1462 = vsel %vm1459, %v1461, %v1457
        %v1463 = vrcp.pop %v1273
        %v1464 = vmul.f32 %v1273, %v1463
        %v1465 = vsub.f32 1.0, %v1464
        %v1466 = vmul.f32 %v1463, %v1465
        %v1467 = vadd.f32 %v1463, %v1466
        %vm1468 = vweird.f32 %v1273
        %vm1469 = vweird.f32 %v1463
        %vm1470 = vmor %vm1468, %vm1469
        %v1471 = vsel %vm1470, %v1463, %v1467
        %v1472 = vand.u32 2147483647, %v1273
        %vm1473 = vcmp.eq.f32.partialorder %v1472, 8.507059e+37
        %v1474 = vand.u32 %v1273, 2147483648
        %v1475 = vor.u32 1.1754944e-38, %v1474
        %v1476 = vsel %vm1473, %v1475, %v1471
        %v1477 = vrcp.pop %v1280
        %v1478 = vmul.f32 %v1280, %v1477
        %v1479 = vsub.f32 1.0, %v1478
        %v1480 = vmul.f32 %v1477, %v1479
        %v1481 = vadd.f32 %v1477, %v1480
        %vm1482 = vweird.f32 %v1280
        %vm1483 = vweird.f32 %v1477
        %vm1484 = vmor %vm1482, %vm1483
        %v1485 = vsel %vm1484, %v1477, %v1481
        %v1486 = vand.u32 2147483647, %v1280
        %vm1487 = vcmp.eq.f32.partialorder %v1486, 8.507059e+37
        %v1488 = vand.u32 %v1280, 2147483648
        %v1489 = vor.u32 1.1754944e-38, %v1488
        %v1490 = vsel %vm1487, %v1489, %v1485
        %v1491 = vrcp.pop %v1287
        %v1492 = vmul.f32 %v1287, %v1491
        %v1493 = vsub.f32 1.0, %v1492
        %v1494 = vmul.f32 %v1491, %v1493
        %v1495 = vadd.f32 %v1491, %v1494
        %vm1496 = vweird.f32 %v1287
        %vm1497 = vweird.f32 %v1491
        %vm1498 = vmor %vm1496, %vm1497
        %v1499 = vsel %vm1498, %v1491, %v1495
        %v1500 = vand.u32 2147483647, %v1287
        %vm1501 = vcmp.eq.f32.partialorder %v1500, 8.507059e+37
        %v1502 = vand.u32 %v1287, 2147483648
        %v1503 = vor.u32 1.1754944e-38, %v1502
        %v1504 = vsel %vm1501, %v1503, %v1499
        %v1505 = vrcp.pop %v1294
        %v1506 = vmul.f32 %v1294, %v1505
        %v1507 = vsub.f32 1.0, %v1506
        %v1508 = vmul.f32 %v1505, %v1507
        %v1509 = vadd.f32 %v1505, %v1508
        %vm1510 = vweird.f32 %v1294
        %vm1511 = vweird.f32 %v1505
        %vm1512 = vmor %vm1510, %vm1511
        %v1513 = vsel %vm1512, %v1505, %v1509
        %v1514 = vand.u32 2147483647, %v1294
        %vm1515 = vcmp.eq.f32.partialorder %v1514, 8.507059e+37
        %v1516 = vand.u32 %v1294, 2147483648
        %v1517 = vor.u32 1.1754944e-38, %v1516
        %v1518 = vsel %vm1515, %v1517, %v1513
        %v1519 = vmul.f32 %v992, %v1308
        %v1520 = vmul.f32 %v994, %v1308
        %v1521 = vmul.f32 %v996, %v1308
        %v1522 = vmul.f32 %v998, %v1308
        %v1523 = vmul.f32 %v1000, %v1308
        %v1524 = vmul.f32 %v1002, %v1308
        %v1525 = vmul.f32 %v1004, %v1322
        %v1526 = vmul.f32 %v1006, %v1322
        %v1527 = vmul.f32 %v1008, %v1322
        %v1528 = vmul.f32 %v1010, %v1322
        %v1529 = vmul.f32 %v1012, %v1322
        %v1530 = vmul.f32 %v1014, %v1322
        %v1531 = vmul.f32 %v1016, %v1336
        %v1532 = vmul.f32 %v1018, %v1336
        %v1533 = vmul.f32 %v1020, %v1336
        %v1534 = vmul.f32 %v1022, %v1336
        %v1535 = vmul.f32 %v1024, %v1336
        %v1536 = vmul.f32 %v1026, %v1336
        %v1537 = vmul.f32 %v1028, %v1350
        %v1538 = vmul.f32 %v1030, %v1350
        %v1539 = vmul.f32 %v1032, %v1350
        %v1540 = vmul.f32 %v1034, %v1350
        %v1541 = vmul.f32 %v1036, %v1350
        %v1542 = vmul.f32 %v1038, %v1350
        %v1543 = vmul.f32 %v1040, %v1364
        %v1544 = vmul.f32 %v1042, %v1364
        %v1545 = vmul.f32 %v1044, %v1364
        %v1546 = vmul.f32 %v1046, %v1364
        %v1547 = vmul.f32 %v1048, %v1364
        %v1548 = vmul.f32 %v1050, %v1364
        %v1549 = vmul.f32 %v1052, %v1378
        %v1550 = vmul.f32 %v1054, %v1378
        %v1551 = vmul.f32 %v1056, %v1378
        %v1552 = vmul.f32 %v1058, %v1378
        %v1553 = vmul.f32 %v1060, %v1378
        %v1554 = vmul.f32 %v1062, %v1378
        %v1555 = vmul.f32 %v1064, %v1392
        %v1556 = vmul.f32 %v1066, %v1392
        %v1557 = vmul.f32 %v1068, %v1392
        %v1558 = vmul.f32 %v1070, %v1392
        %v1559 = vmul.f32 %v1072, %v1392
        %v1560 = vmul.f32 %v1074, %v1392
        %v1561 = vmul.f32 %v1076, %v1406
        %v1562 = vmul.f32 %v1078, %v1406
        %v1563 = vmul.f32 %v1080, %v1406
        %v1564 = vmul.f32 %v1082, %v1406
        %v1565 = vmul.f32 %v1084, %v1406
        %v1566 = vmul.f32 %v1086, %v1406
        %v1567 = vmul.f32 %v1088, %v1420
        %v1568 = vmul.f32 %v1090, %v1420
        %v1569 = vmul.f32 %v1092, %v1420
        %v1570 = vmul.f32 %v1094, %v1420
        %v1571 = vmul.f32 %v1096, %v1420
        %v1572 = vmul.f32 %v1098, %v1420
        %v1573 = vmul.f32 %v1100, %v1434
        %v1574 = vmul.f32 %v1102, %v1434
        %v1575 = vmul.f32 %v1104, %v1434
        %v1576 = vmul.f32 %v1106, %v1434
        %v1577 = vmul.f32 %v1108, %v1434
        %v1578 = vmul.f32 %v1110, %v1434
        %v1579 = vmul.f32 %v1112, %v1448
        %v1580 = vmul.f32 %v1114, %v1448
        %v1581 = vmul.f32 %v1116, %v1448
        %v1582 = vmul.f32 %v1118, %v1448
        %v1583 = vmul.f32 %v1120, %v1448
        %v1584 = vmul.f32 %v1122, %v1448
        %v1585 = vmul.f32 %v1124, %v1462
        %v1586 = vmul.f32 %v1126, %v1462
        %v1587 = vmul.f32 %v1128, %v1462
        %v1588 = vmul.f32 %v1130, %v1462
        %v1589 = vmul.f32 %v1132, %v1462
        %v1590 = vmul.f32 %v1134, %v1462
        %v1591 = vmul.f32 %v1136, %v1476
        %v1592 = vmul.f32 %v1138, %v1476
        %v1593 = vmul.f32 %v1140, %v1476
        %v1594 = vmul.f32 %v1142, %v1476
        %v1595 = vmul.f32 %v1144, %v1476
        %v1596 = vmul.f32 %v1146, %v1476
        %v1597 = vmul.f32 %v1148, %v1490
        %v1598 = vmul.f32 %v1150, %v1490
        %v1599 = vmul.f32 %v1152, %v1490
        %v1600 = vmul.f32 %v1154, %v1490
        %v1601 = vmul.f32 %v1156, %v1490
        %v1602 = vmul.f32 %v1158, %v1490
        %v1603 = vmul.f32 %v1160, %v1504
        %v1604 = vmul.f32 %v1162, %v1504
        %v1605 = vmul.f32 %v1164, %v1504
        %v1606 = vmul.f32 %v1166, %v1504
        %v1607 = vmul.f32 %v1168, %v1504
        %v1608 = vmul.f32 %v1170, %v1504
        %v1609 = vmul.f32 %v1172, %v1518
        %v1610 = vmul.f32 %v1174, %v1518
        %v1611 = vmul.f32 %v1176, %v1518
        %v1612 = vmul.f32 %v1178, %v1518
        %v1613 = vmul.f32 %v1180, %v1518
        %v1614 = vmul.f32 %v1182, %v1518
        %1615 = vst [vmem:[%s261] sm:$0xff] %v1519
        %1616 = vst [vmem:[%s261 + $0x8] sm:$0xff] %v1520
        %1617 = vst [vmem:[%s261 + $0x10] sm:$0xff] %v1521
        %1618 = vst [vmem:[%s261 + $0x18] sm:$0xff] %v1522
        %1619 = vst [vmem:[%s261 + $0x20] sm:$0xff] %v1523
        %1620 = vst [vmem:[%s261 + $0x28] sm:$0xff] %v1524
        %1621 = vst [vmem:[%s261 + $0x30] sm:$0xff] %v1525
        %1622 = vst [vmem:[%s261 + $0x38] sm:$0xff] %v1526
        %1623 = vst [vmem:[%s261 + $0x40] sm:$0xff] %v1527
        %1624 = vst [vmem:[%s261 + $0x48] sm:$0xff] %v1528
        %1625 = vst [vmem:[%s261 + $0x50] sm:$0xff] %v1529
        %1626 = vst [vmem:[%s261 + $0x58] sm:$0xff] %v1530
        %1627 = vst [vmem:[%s261 + $0x60] sm:$0xff] %v1531
        %1628 = vst [vmem:[%s261 + $0x68] sm:$0xff] %v1532
        %1629 = vst [vmem:[%s261 + $0x70] sm:$0xff] %v1533
        %1630 = vst [vmem:[%s261 + $0x78] sm:$0xff] %v1534
        %1631 = vst [vmem:[%s261 + $0x80] sm:$0xff] %v1535
        %1632 = vst [vmem:[%s261 + $0x88] sm:$0xff] %v1536
        %1633 = vst [vmem:[%s261 + $0x90] sm:$0xff] %v1537
        %1634 = vst [vmem:[%s261 + $0x98] sm:$0xff] %v1538
        %1635 = vst [vmem:[%s261 + $0xa0] sm:$0xff] %v1539
        %1636 = vst [vmem:[%s261 + $0xa8] sm:$0xff] %v1540
        %1637 = vst [vmem:[%s261 + $0xb0] sm:$0xff] %v1541
        %1638 = vst [vmem:[%s261 + $0xb8] sm:$0xff] %v1542
        %1639 = vst [vmem:[%s261 + $0xc0] sm:$0xff] %v1543
        %1640 = vst [vmem:[%s261 + $0xc8] sm:$0xff] %v1544
        %1641 = vst [vmem:[%s261 + $0xd0] sm:$0xff] %v1545
        %1642 = vst [vmem:[%s261 + $0xd8] sm:$0xff] %v1546
        %1643 = vst [vmem:[%s261 + $0xe0] sm:$0xff] %v1547
        %1644 = vst [vmem:[%s261 + $0xe8] sm:$0xff] %v1548
        %1645 = vst [vmem:[%s261 + $0xf0] sm:$0xff] %v1549
        %1646 = vst [vmem:[%s261 + $0xf8] sm:$0xff] %v1550
        %1647 = vst [vmem:[%s261 + $0x100] sm:$0xff] %v1551
        %1648 = vst [vmem:[%s261 + $0x108] sm:$0xff] %v1552
        %1649 = vst [vmem:[%s261 + $0x110] sm:$0xff] %v1553
        %1650 = vst [vmem:[%s261 + $0x118] sm:$0xff] %v1554
        %1651 = vst [vmem:[%s261 + $0x120] sm:$0xff] %v1555
        %1652 = vst [vmem:[%s261 + $0x128] sm:$0xff] %v1556
        %1653 = vst [vmem:[%s261 + $0x130] sm:$0xff] %v1557
        %1654 = vst [vmem:[%s261 + $0x138] sm:$0xff] %v1558
        %1655 = vst [vmem:[%s261 + $0x140] sm:$0xff] %v1559
        %1656 = vst [vmem:[%s261 + $0x148] sm:$0xff] %v1560
        %1657 = vst [vmem:[%s261 + $0x150] sm:$0xff] %v1561
        %1658 = vst [vmem:[%s261 + $0x158] sm:$0xff] %v1562
        %1659 = vst [vmem:[%s261 + $0x160] sm:$0xff] %v1563
        %1660 = vst [vmem:[%s261 + $0x168] sm:$0xff] %v1564
        %1661 = vst [vmem:[%s261 + $0x170] sm:$0xff] %v1565
        %1662 = vst [vmem:[%s261 + $0x178] sm:$0xff] %v1566
        %1663 = vst [vmem:[%s261 + $0x180] sm:$0xff] %v1567
        %1664 = vst [vmem:[%s261 + $0x188] sm:$0xff] %v1568
        %1665 = vst [vmem:[%s261 + $0x190] sm:$0xff] %v1569
        %1666 = vst [vmem:[%s261 + $0x198] sm:$0xff] %v1570
        %1667 = vst [vmem:[%s261 + $0x1a0] sm:$0xff] %v1571
        %1668 = vst [vmem:[%s261 + $0x1a8] sm:$0xff] %v1572
        %1669 = vst [vmem:[%s261 + $0x1b0] sm:$0xff] %v1573
        %1670 = vst [vmem:[%s261 + $0x1b8] sm:$0xff] %v1574
        %1671 = vst [vmem:[%s261 + $0x1c0] sm:$0xff] %v1575
        %1672 = vst [vmem:[%s261 + $0x1c8] sm:$0xff] %v1576
        %1673 = vst [vmem:[%s261 + $0x1d0] sm:$0xff] %v1577
        %1674 = vst [vmem:[%s261 + $0x1d8] sm:$0xff] %v1578
        %1675 = vst [vmem:[%s261 + $0x1e0] sm:$0xff] %v1579
        %1676 = vst [vmem:[%s261 + $0x1e8] sm:$0xff] %v1580
        %1677 = vst [vmem:[%s261 + $0x1f0] sm:$0xff] %v1581
        %1678 = vst [vmem:[%s261 + $0x1f8] sm:$0xff] %v1582
        %1679 = vst [vmem:[%s261 + $0x200] sm:$0xff] %v1583
        %1680 = vst [vmem:[%s261 + $0x208] sm:$0xff] %v1584
        %1681 = vst [vmem:[%s261 + $0x210] sm:$0xff] %v1585
        %1682 = vst [vmem:[%s261 + $0x218] sm:$0xff] %v1586
        %1683 = vst [vmem:[%s261 + $0x220] sm:$0xff] %v1587
        %1684 = vst [vmem:[%s261 + $0x228] sm:$0xff] %v1588
        %1685 = vst [vmem:[%s261 + $0x230] sm:$0xff] %v1589
        %1686 = vst [vmem:[%s261 + $0x238] sm:$0xff] %v1590
        %1687 = vst [vmem:[%s261 + $0x240] sm:$0xff] %v1591
        %1688 = vst [vmem:[%s261 + $0x248] sm:$0xff] %v1592
        %1689 = vst [vmem:[%s261 + $0x250] sm:$0xff] %v1593
        %1690 = vst [vmem:[%s261 + $0x258] sm:$0xff] %v1594
        %1691 = vst [vmem:[%s261 + $0x260] sm:$0xff] %v1595
        %1692 = vst [vmem:[%s261 + $0x268] sm:$0xff] %v1596
        %1693 = vst [vmem:[%s261 + $0x270] sm:$0xff] %v1597
        %1694 = vst [vmem:[%s261 + $0x278] sm:$0xff] %v1598
        %1695 = vst [vmem:[%s261 + $0x280] sm:$0xff] %v1599
        %1696 = vst [vmem:[%s261 + $0x288] sm:$0xff] %v1600
        %1697 = vst [vmem:[%s261 + $0x290] sm:$0xff] %v1601
        %1698 = vst [vmem:[%s261 + $0x298] sm:$0xff] %v1602
        %1699 = vst [vmem:[%s261 + $0x2a0] sm:$0xff] %v1603
        %1700 = vst [vmem:[%s261 + $0x2a8] sm:$0xff] %v1604
        %1701 = vst [vmem:[%s261 + $0x2b0] sm:$0xff] %v1605
        %1702 = vst [vmem:[%s261 + $0x2b8] sm:$0xff] %v1606
        %1703 = vst [vmem:[%s261 + $0x2c0] sm:$0xff] %v1607
        %1704 = vst [vmem:[%s261 + $0x2c8] sm:$0xff] %v1608
        %1705 = vst [vmem:[%s261 + $0x2d0] sm:$0xff] %v1609
        %1706 = vst [vmem:[%s261 + $0x2d8] sm:$0xff] %v1610
        %1707 = vst [vmem:[%s261 + $0x2e0] sm:$0xff] %v1611
        %1708 = vst [vmem:[%s261 + $0x2e8] sm:$0xff] %v1612
        %1709 = vst [vmem:[%s261 + $0x2f0] sm:$0xff] %v1613
        %1710 = vst [vmem:[%s261 + $0x2f8] sm:$0xff] %v1614
        %v1711 = vld [vmem:[#allocation7] sm:$0xff]
        %v1712 = vld [vmem:[#allocation7 + $0x8] sm:$0xff]
        %v1713 = vld [vmem:[#allocation7 + $0x10] sm:$0xff]
        %v1714 = vld [vmem:[#allocation7 + $0x18] sm:$0xff]
        %v1715 = vld [vmem:[#allocation7 + $0x20] sm:$0xff]
        %v1716 = vld [vmem:[#allocation7 + $0x28] sm:$0xff]
        %v1717 = vld [vmem:[#allocation7 + $0x30] sm:$0xff]
        %v1718 = vld [vmem:[#allocation7 + $0x38] sm:$0xff]
        %v1719 = vld [vmem:[#allocation7 + $0x40] sm:$0xff]
        %v1720 = vld [vmem:[#allocation7 + $0x48] sm:$0xff]
        %v1721 = vld [vmem:[#allocation7 + $0x50] sm:$0xff]
        %v1722 = vld [vmem:[#allocation7 + $0x58] sm:$0xff]
        %v1723 = vld [vmem:[#allocation7 + $0x60] sm:$0xff]
        %v1724 = vld [vmem:[#allocation7 + $0x68] sm:$0xff]
        %v1725 = vld [vmem:[#allocation7 + $0x70] sm:$0xff]
        %v1726 = vld [vmem:[#allocation7 + $0x78] sm:$0xff]
        %v1727 = vld [vmem:[#allocation7 + $0x80] sm:$0xff]
        %v1728 = vld [vmem:[#allocation7 + $0x88] sm:$0xff]
        %v1729 = vld [vmem:[#allocation7 + $0x90] sm:$0xff]
        %v1730 = vld [vmem:[#allocation7 + $0x98] sm:$0xff]
        %v1731 = vld [vmem:[#allocation7 + $0xa0] sm:$0xff]
        %v1732 = vld [vmem:[#allocation7 + $0xa8] sm:$0xff]
        %v1733 = vld [vmem:[#allocation7 + $0xb0] sm:$0xff]
        %v1734 = vld [vmem:[#allocation7 + $0xb8] sm:$0xff]
        %v1735 = vld [vmem:[#allocation7 + $0xc0] sm:$0xff]
        %v1736 = vld [vmem:[#allocation7 + $0xc8] sm:$0xff]
        %v1737 = vld [vmem:[#allocation7 + $0xd0] sm:$0xff]
        %v1738 = vld [vmem:[#allocation7 + $0xd8] sm:$0xff]
        %v1739 = vld [vmem:[#allocation7 + $0xe0] sm:$0xff]
        %v1740 = vld [vmem:[#allocation7 + $0xe8] sm:$0xff]
        %v1741 = vld [vmem:[#allocation7 + $0xf0] sm:$0xff]
        %v1742 = vld [vmem:[#allocation7 + $0xf8] sm:$0xff]
        %v1743 = vld [vmem:[#allocation7 + $0x100] sm:$0xff]
        %v1744 = vld [vmem:[#allocation7 + $0x108] sm:$0xff]
        %v1745 = vld [vmem:[#allocation7 + $0x110] sm:$0xff]
        %v1746 = vld [vmem:[#allocation7 + $0x118] sm:$0xff]
        %v1747 = vld [vmem:[#allocation7 + $0x120] sm:$0xff]
        %v1748 = vld [vmem:[#allocation7 + $0x128] sm:$0xff]
        %v1749 = vld [vmem:[#allocation7 + $0x130] sm:$0xff]
        %v1750 = vld [vmem:[#allocation7 + $0x138] sm:$0xff]
        %v1751 = vld [vmem:[#allocation7 + $0x140] sm:$0xff]
        %v1752 = vld [vmem:[#allocation7 + $0x148] sm:$0xff]
        %v1753 = vld [vmem:[#allocation7 + $0x150] sm:$0xff]
        %v1754 = vld [vmem:[#allocation7 + $0x158] sm:$0xff]
        %v1755 = vld [vmem:[#allocation7 + $0x160] sm:$0xff]
        %v1756 = vld [vmem:[#allocation7 + $0x168] sm:$0xff]
        %v1757 = vld [vmem:[#allocation7 + $0x170] sm:$0xff]
        %v1758 = vld [vmem:[#allocation7 + $0x178] sm:$0xff]
        %v1759 = vld [vmem:[#allocation7 + $0x180] sm:$0xff]
        %v1760 = vld [vmem:[#allocation7 + $0x188] sm:$0xff]
        %v1761 = vld [vmem:[#allocation7 + $0x190] sm:$0xff]
        %v1762 = vld [vmem:[#allocation7 + $0x198] sm:$0xff]
        %v1763 = vld [vmem:[#allocation7 + $0x1a0] sm:$0xff]
        %v1764 = vld [vmem:[#allocation7 + $0x1a8] sm:$0xff]
        %v1765 = vld [vmem:[#allocation7 + $0x1b0] sm:$0xff]
        %v1766 = vld [vmem:[#allocation7 + $0x1b8] sm:$0xff]
        %v1767 = vld [vmem:[#allocation7 + $0x1c0] sm:$0xff]
        %v1768 = vld [vmem:[#allocation7 + $0x1c8] sm:$0xff]
        %v1769 = vld [vmem:[#allocation7 + $0x1d0] sm:$0xff]
        %v1770 = vld [vmem:[#allocation7 + $0x1d8] sm:$0xff]
        %v1771 = vld [vmem:[#allocation7 + $0x1e0] sm:$0xff]
        %v1772 = vld [vmem:[#allocation7 + $0x1e8] sm:$0xff]
        %v1773 = vld [vmem:[#allocation7 + $0x1f0] sm:$0xff]
        %v1774 = vld [vmem:[#allocation7 + $0x1f8] sm:$0xff]
        %v1775 = vld [vmem:[#allocation7 + $0x200] sm:$0xff]
        %v1776 = vld [vmem:[#allocation7 + $0x208] sm:$0xff]
        %v1777 = vld [vmem:[#allocation7 + $0x210] sm:$0xff]
        %v1778 = vld [vmem:[#allocation7 + $0x218] sm:$0xff]
        %v1779 = vld [vmem:[#allocation7 + $0x220] sm:$0xff]
        %v1780 = vld [vmem:[#allocation7 + $0x228] sm:$0xff]
        %v1781 = vld [vmem:[#allocation7 + $0x230] sm:$0xff]
        %v1782 = vld [vmem:[#allocation7 + $0x238] sm:$0xff]
        %v1783 = vld [vmem:[#allocation7 + $0x240] sm:$0xff]
        %v1784 = vld [vmem:[#allocation7 + $0x248] sm:$0xff]
        %v1785 = vld [vmem:[#allocation7 + $0x250] sm:$0xff]
        %v1786 = vld [vmem:[#allocation7 + $0x258] sm:$0xff]
        %v1787 = vld [vmem:[#allocation7 + $0x260] sm:$0xff]
        %v1788 = vld [vmem:[#allocation7 + $0x268] sm:$0xff]
        %v1789 = vld [vmem:[#allocation7 + $0x270] sm:$0xff]
        %v1790 = vld [vmem:[#allocation7 + $0x278] sm:$0xff]
        %v1791 = vld [vmem:[#allocation7 + $0x280] sm:$0xff]
        %v1792 = vld [vmem:[#allocation7 + $0x288] sm:$0xff]
        %v1793 = vld [vmem:[#allocation7 + $0x290] sm:$0xff]
        %v1794 = vld [vmem:[#allocation7 + $0x298] sm:$0xff]
        %v1795 = vld [vmem:[#allocation7 + $0x2a0] sm:$0xff]
        %v1796 = vld [vmem:[#allocation7 + $0x2a8] sm:$0xff]
        %v1797 = vld [vmem:[#allocation7 + $0x2b0] sm:$0xff]
        %v1798 = vld [vmem:[#allocation7 + $0x2b8] sm:$0xff]
        %v1799 = vld [vmem:[#allocation7 + $0x2c0] sm:$0xff]
        %v1800 = vld [vmem:[#allocation7 + $0x2c8] sm:$0xff]
        %v1801 = vld [vmem:[#allocation7 + $0x2d0] sm:$0xff]
        %v1802 = vld [vmem:[#allocation7 + $0x2d8] sm:$0xff]
        %v1803 = vld [vmem:[#allocation7 + $0x2e0] sm:$0xff]
        %v1804 = vld [vmem:[#allocation7 + $0x2e8] sm:$0xff]
        %v1805 = vld [vmem:[#allocation7 + $0x2f0] sm:$0xff]
        %v1806 = vld [vmem:[#allocation7 + $0x2f8] sm:$0xff]
        %1807 = vmatpush.msra.mxu0 %v1726
        %1808 = vmatpush.msra.mxu0 %v1725
        %1809 = vmatpush.msra.mxu0 %v1724
        %1810 = vmatpush.msra.mxu0 %v1723
        %1811 = vmatpush.msra.mxu0 %v1722
        %1812 = vmatpush.msra.mxu0 %v1721
        %1813 = vmatpush.msra.mxu0 %v1720
        %1814 = vmatpush.msra.mxu0 %v1719
        %1815 = vmatpush.msra.mxu0 %v1718
        %1816 = vmatpush.msra.mxu0 %v1717
        %1817 = vmatpush.msra.mxu0 %v1716
        %1818 = vmatpush.msra.mxu0 %v1715
        %1819 = vmatpush.msra.mxu0 %v1714
        %1820 = vmatpush.msra.mxu0 %v1713
        %1821 = vmatpush.msra.mxu0 %v1712
        %1822 = vmatpush.msra.mxu0 %v1711
        %1823 = vmatmul.f32.gmra.mxu0 %v1519
        %v1824 = vpop.f32.mrf.mxu0
        %v1825 = vadd.f32 0.0, %v1824
        %1826 = vmatmul.f32.gmra.mxu0 %v1525
        %v1827 = vpop.f32.mrf.mxu0
        %v1828 = vadd.f32 0.0, %v1827
        %1829 = vmatmul.f32.gmra.mxu0 %v1531
        %v1830 = vpop.f32.mrf.mxu0
        %v1831 = vadd.f32 0.0, %v1830
        %1832 = vmatmul.f32.gmra.mxu0 %v1537
        %v1833 = vpop.f32.mrf.mxu0
        %v1834 = vadd.f32 0.0, %v1833
        %1835 = vmatmul.f32.gmra.mxu0 %v1543
        %v1836 = vpop.f32.mrf.mxu0
        %v1837 = vadd.f32 0.0, %v1836
        %1838 = vmatmul.f32.gmra.mxu0 %v1549
        %v1839 = vpop.f32.mrf.mxu0
        %v1840 = vadd.f32 0.0, %v1839
        %1841 = vmatmul.f32.gmra.mxu0 %v1555
        %v1842 = vpop.f32.mrf.mxu0
        %v1843 = vadd.f32 0.0, %v1842
        %1844 = vmatmul.f32.gmra.mxu0 %v1561
        %v1845 = vpop.f32.mrf.mxu0
        %v1846 = vadd.f32 0.0, %v1845
        %1847 = vmatmul.f32.gmra.mxu0 %v1567
        %v1848 = vpop.f32.mrf.mxu0
        %v1849 = vadd.f32 0.0, %v1848
        %1850 = vmatmul.f32.gmra.mxu0 %v1573
        %v1851 = vpop.f32.mrf.mxu0
        %v1852 = vadd.f32 0.0, %v1851
        %1853 = vmatmul.f32.gmra.mxu0 %v1579
        %v1854 = vpop.f32.mrf.mxu0
        %v1855 = vadd.f32 0.0, %v1854
        %1856 = vmatmul.f32.gmra.mxu0 %v1585
        %v1857 = vpop.f32.mrf.mxu0
        %v1858 = vadd.f32 0.0, %v1857
        %1859 = vmatmul.f32.gmra.mxu0 %v1591
        %v1860 = vpop.f32.mrf.mxu0
        %v1861 = vadd.f32 0.0, %v1860
        %1862 = vmatmul.f32.gmra.mxu0 %v1597
        %v1863 = vpop.f32.mrf.mxu0
        %v1864 = vadd.f32 0.0, %v1863
        %1865 = vmatmul.f32.gmra.mxu0 %v1603
        %v1866 = vpop.f32.mrf.mxu0
        %v1867 = vadd.f32 0.0, %v1866
        %1868 = vmatmul.f32.gmra.mxu0 %v1609
        %v1869 = vpop.f32.mrf.mxu0
        %v1870 = vadd.f32 0.0, %v1869
        %1871 = vdwg.mxu0
        %1872 = vmatpush.msra.mxu0 %v1742
        %1873 = vmatpush.msra.mxu0 %v1741
        %1874 = vmatpush.msra.mxu0 %v1740
        %1875 = vmatpush.msra.mxu0 %v1739
        %1876 = vmatpush.msra.mxu0 %v1738
        %1877 = vmatpush.msra.mxu0 %v1737
        %1878 = vmatpush.msra.mxu0 %v1736
        %1879 = vmatpush.msra.mxu0 %v1735
        %1880 = vmatpush.msra.mxu0 %v1734
        %1881 = vmatpush.msra.mxu0 %v1733
        %1882 = vmatpush.msra.mxu0 %v1732
        %1883 = vmatpush.msra.mxu0 %v1731
        %1884 = vmatpush.msra.mxu0 %v1730
        %1885 = vmatpush.msra.mxu0 %v1729
        %1886 = vmatpush.msra.mxu0 %v1728
        %1887 = vmatpush.msra.mxu0 %v1727
        %1888 = vmatmul.f32.gmra.mxu0 %v1520
        %v1889 = vpop.f32.mrf.mxu0
        %v1890 = vadd.f32 %v1825, %v1889
        %1891 = vmatmul.f32.gmra.mxu0 %v1526
        %v1892 = vpop.f32.mrf.mxu0
        %v1893 = vadd.f32 %v1828, %v1892
        %1894 = vmatmul.f32.gmra.mxu0 %v1532
        %v1895 = vpop.f32.mrf.mxu0
        %v1896 = vadd.f32 %v1831, %v1895
        %1897 = vmatmul.f32.gmra.mxu0 %v1538
        %v1898 = vpop.f32.mrf.mxu0
        %v1899 = vadd.f32 %v1834, %v1898
        %1900 = vmatmul.f32.gmra.mxu0 %v1544
        %v1901 = vpop.f32.mrf.mxu0
        %v1902 = vadd.f32 %v1837, %v1901
        %1903 = vmatmul.f32.gmra.mxu0 %v1550
        %v1904 = vpop.f32.mrf.mxu0
        %v1905 = vadd.f32 %v1840, %v1904
        %1906 = vmatmul.f32.gmra.mxu0 %v1556
        %v1907 = vpop.f32.mrf.mxu0
        %v1908 = vadd.f32 %v1843, %v1907
        %1909 = vmatmul.f32.gmra.mxu0 %v1562
        %v1910 = vpop.f32.mrf.mxu0
        %v1911 = vadd.f32 %v1846, %v1910
        %1912 = vmatmul.f32.gmra.mxu0 %v1568
        %v1913 = vpop.f32.mrf.mxu0
        %v1914 = vadd.f32 %v1849, %v1913
        %1915 = vmatmul.f32.gmra.mxu0 %v1574
        %v1916 = vpop.f32.mrf.mxu0
        %v1917 = vadd.f32 %v1852, %v1916
        %1918 = vmatmul.f32.gmra.mxu0 %v1580
        %v1919 = vpop.f32.mrf.mxu0
        %v1920 = vadd.f32 %v1855, %v1919
        %1921 = vmatmul.f32.gmra.mxu0 %v1586
        %v1922 = vpop.f32.mrf.mxu0
        %v1923 = vadd.f32 %v1858, %v1922
        %1924 = vmatmul.f32.gmra.mxu0 %v1592
        %v1925 = vpop.f32.mrf.mxu0
        %v1926 = vadd.f32 %v1861, %v1925
        %1927 = vmatmul.f32.gmra.mxu0 %v1598
        %v1928 = vpop.f32.mrf.mxu0
        %v1929 = vadd.f32 %v1864, %v1928
        %1930 = vmatmul.f32.gmra.mxu0 %v1604
        %v1931 = vpop.f32.mrf.mxu0
        %v1932 = vadd.f32 %v1867, %v1931
        %1933 = vmatmul.f32.gmra.mxu0 %v1610
        %v1934 = vpop.f32.mrf.mxu0
        %v1935 = vadd.f32 %v1870, %v1934
        %1936 = vdwg.mxu0
        %1937 = vmatpush.msra.mxu0 %v1758
        %1938 = vmatpush.msra.mxu0 %v1757
        %1939 = vmatpush.msra.mxu0 %v1756
        %1940 = vmatpush.msra.mxu0 %v1755
        %1941 = vmatpush.msra.mxu0 %v1754
        %1942 = vmatpush.msra.mxu0 %v1753
        %1943 = vmatpush.msra.mxu0 %v1752
        %1944 = vmatpush.msra.mxu0 %v1751
        %1945 = vmatpush.msra.mxu0 %v1750
        %1946 = vmatpush.msra.mxu0 %v1749
        %1947 = vmatpush.msra.mxu0 %v1748
        %1948 = vmatpush.msra.mxu0 %v1747
        %1949 = vmatpush.msra.mxu0 %v1746
        %1950 = vmatpush.msra.mxu0 %v1745
        %1951 = vmatpush.msra.mxu0 %v1744
        %1952 = vmatpush.msra.mxu0 %v1743
        %1953 = vmatmul.f32.gmra.mxu0 %v1521
        %v1954 = vpop.f32.mrf.mxu0
        %v1955 = vadd.f32 %v1890, %v1954
        %1956 = vmatmul.f32.gmra.mxu0 %v1527
        %v1957 = vpop.f32.mrf.mxu0
        %v1958 = vadd.f32 %v1893, %v1957
        %1959 = vmatmul.f32.gmra.mxu0 %v1533
        %v1960 = vpop.f32.mrf.mxu0
        %v1961 = vadd.f32 %v1896, %v1960
        %1962 = vmatmul.f32.gmra.mxu0 %v1539
        %v1963 = vpop.f32.mrf.mxu0
        %v1964 = vadd.f32 %v1899, %v1963
        %1965 = vmatmul.f32.gmra.mxu0 %v1545
        %v1966 = vpop.f32.mrf.mxu0
        %v1967 = vadd.f32 %v1902, %v1966
        %1968 = vmatmul.f32.gmra.mxu0 %v1551
        %v1969 = vpop.f32.mrf.mxu0
        %v1970 = vadd.f32 %v1905, %v1969
        %1971 = vmatmul.f32.gmra.mxu0 %v1557
        %v1972 = vpop.f32.mrf.mxu0
        %v1973 = vadd.f32 %v1908, %v1972
        %1974 = vmatmul.f32.gmra.mxu0 %v1563
        %v1975 = vpop.f32.mrf.mxu0
        %v1976 = vadd.f32 %v1911, %v1975
        %1977 = vmatmul.f32.gmra.mxu0 %v1569
        %v1978 = vpop.f32.mrf.mxu0
        %v1979 = vadd.f32 %v1914, %v1978
        %1980 = vmatmul.f32.gmra.mxu0 %v1575
        %v1981 = vpop.f32.mrf.mxu0
        %v1982 = vadd.f32 %v1917, %v1981
        %1983 = vmatmul.f32.gmra.mxu0 %v1581
        %v1984 = vpop.f32.mrf.mxu0
        %v1985 = vadd.f32 %v1920, %v1984
        %1986 = vmatmul.f32.gmra.mxu0 %v1587
        %v1987 = vpop.f32.mrf.mxu0
        %v1988 = vadd.f32 %v1923, %v1987
        %1989 = vmatmul.f32.gmra.mxu0 %v1593
        %v1990 = vpop.f32.mrf.mxu0
        %v1991 = vadd.f32 %v1926, %v1990
        %1992 = vmatmul.f32.gmra.mxu0 %v1599
        %v1993 = vpop.f32.mrf.mxu0
        %v1994 = vadd.f32 %v1929, %v1993
        %1995 = vmatmul.f32.gmra.mxu0 %v1605
        %v1996 = vpop.f32.mrf.mxu0
        %v1997 = vadd.f32 %v1932, %v1996
        %1998 = vmatmul.f32.gmra.mxu0 %v1611
        %v1999 = vpop.f32.mrf.mxu0
        %v2000 = vadd.f32 %v1935, %v1999
        %2001 = vdwg.mxu0
        %2002 = vmatpush.msra.mxu0 %v1774
        %2003 = vmatpush.msra.mxu0 %v1773
        %2004 = vmatpush.msra.mxu0 %v1772
        %2005 = vmatpush.msra.mxu0 %v1771
        %2006 = vmatpush.msra.mxu0 %v1770
        %2007 = vmatpush.msra.mxu0 %v1769
        %2008 = vmatpush.msra.mxu0 %v1768
        %2009 = vmatpush.msra.mxu0 %v1767
        %2010 = vmatpush.msra.mxu0 %v1766
        %2011 = vmatpush.msra.mxu0 %v1765
        %2012 = vmatpush.msra.mxu0 %v1764
        %2013 = vmatpush.msra.mxu0 %v1763
        %2014 = vmatpush.msra.mxu0 %v1762
        %2015 = vmatpush.msra.mxu0 %v1761
        %2016 = vmatpush.msra.mxu0 %v1760
        %2017 = vmatpush.msra.mxu0 %v1759
        %2018 = vmatmul.f32.gmra.mxu0 %v1522
        %v2019 = vpop.f32.mrf.mxu0
        %v2020 = vadd.f32 %v1955, %v2019
        %2021 = vmatmul.f32.gmra.mxu0 %v1528
        %v2022 = vpop.f32.mrf.mxu0
        %v2023 = vadd.f32 %v1958, %v2022
        %2024 = vmatmul.f32.gmra.mxu0 %v1534
        %v2025 = vpop.f32.mrf.mxu0
        %v2026 = vadd.f32 %v1961, %v2025
        %2027 = vmatmul.f32.gmra.mxu0 %v1540
        %v2028 = vpop.f32.mrf.mxu0
        %v2029 = vadd.f32 %v1964, %v2028
        %2030 = vmatmul.f32.gmra.mxu0 %v1546
        %v2031 = vpop.f32.mrf.mxu0
        %v2032 = vadd.f32 %v1967, %v2031
        %2033 = vmatmul.f32.gmra.mxu0 %v1552
        %v2034 = vpop.f32.mrf.mxu0
        %v2035 = vadd.f32 %v1970, %v2034
        %2036 = vmatmul.f32.gmra.mxu0 %v1558
        %v2037 = vpop.f32.mrf.mxu0
        %v2038 = vadd.f32 %v1973, %v2037
        %2039 = vmatmul.f32.gmra.mxu0 %v1564
        %v2040 = vpop.f32.mrf.mxu0
        %v2041 = vadd.f32 %v1976, %v2040
        %2042 = vmatmul.f32.gmra.mxu0 %v1570
        %v2043 = vpop.f32.mrf.mxu0
        %v2044 = vadd.f32 %v1979, %v2043
        %2045 = vmatmul.f32.gmra.mxu0 %v1576
        %v2046 = vpop.f32.mrf.mxu0
        %v2047 = vadd.f32 %v1982, %v2046
        %2048 = vmatmul.f32.gmra.mxu0 %v1582
        %v2049 = vpop.f32.mrf.mxu0
        %v2050 = vadd.f32 %v1985, %v2049
        %2051 = vmatmul.f32.gmra.mxu0 %v1588
        %v2052 = vpop.f32.mrf.mxu0
        %v2053 = vadd.f32 %v1988, %v2052
        %2054 = vmatmul.f32.gmra.mxu0 %v1594
        %v2055 = vpop.f32.mrf.mxu0
        %v2056 = vadd.f32 %v1991, %v2055
        %2057 = vmatmul.f32.gmra.mxu0 %v1600
        %v2058 = vpop.f32.mrf.mxu0
        %v2059 = vadd.f32 %v1994, %v2058
        %2060 = vmatmul.f32.gmra.mxu0 %v1606
        %v2061 = vpop.f32.mrf.mxu0
        %v2062 = vadd.f32 %v1997, %v2061
        %2063 = vmatmul.f32.gmra.mxu0 %v1612
        %v2064 = vpop.f32.mrf.mxu0
        %v2065 = vadd.f32 %v2000, %v2064
        %2066 = vdwg.mxu0
        %2067 = vmatpush.msra.mxu0 %v1790
        %2068 = vmatpush.msra.mxu0 %v1789
        %2069 = vmatpush.msra.mxu0 %v1788
        %2070 = vmatpush.msra.mxu0 %v1787
        %2071 = vmatpush.msra.mxu0 %v1786
        %2072 = vmatpush.msra.mxu0 %v1785
        %2073 = vmatpush.msra.mxu0 %v1784
        %2074 = vmatpush.msra.mxu0 %v1783
        %2075 = vmatpush.msra.mxu0 %v1782
        %2076 = vmatpush.msra.mxu0 %v1781
        %2077 = vmatpush.msra.mxu0 %v1780
        %2078 = vmatpush.msra.mxu0 %v1779
        %2079 = vmatpush.msra.mxu0 %v1778
        %2080 = vmatpush.msra.mxu0 %v1777
        %2081 = vmatpush.msra.mxu0 %v1776
        %2082 = vmatpush.msra.mxu0 %v1775
        %2083 = vmatmul.f32.gmra.mxu0 %v1523
        %v2084 = vpop.f32.mrf.mxu0
        %v2085 = vadd.f32 %v2020, %v2084
        %2086 = vmatmul.f32.gmra.mxu0 %v1529
        %v2087 = vpop.f32.mrf.mxu0
        %v2088 = vadd.f32 %v2023, %v2087
        %2089 = vmatmul.f32.gmra.mxu0 %v1535
        %v2090 = vpop.f32.mrf.mxu0
        %v2091 = vadd.f32 %v2026, %v2090
        %2092 = vmatmul.f32.gmra.mxu0 %v1541
        %v2093 = vpop.f32.mrf.mxu0
        %v2094 = vadd.f32 %v2029, %v2093
        %2095 = vmatmul.f32.gmra.mxu0 %v1547
        %v2096 = vpop.f32.mrf.mxu0
        %v2097 = vadd.f32 %v2032, %v2096
        %2098 = vmatmul.f32.gmra.mxu0 %v1553
        %v2099 = vpop.f32.mrf.mxu0
        %v2100 = vadd.f32 %v2035, %v2099
        %2101 = vmatmul.f32.gmra.mxu0 %v1559
        %v2102 = vpop.f32.mrf.mxu0
        %v2103 = vadd.f32 %v2038, %v2102
        %2104 = vmatmul.f32.gmra.mxu0 %v1565
        %v2105 = vpop.f32.mrf.mxu0
        %v2106 = vadd.f32 %v2041, %v2105
        %2107 = vmatmul.f32.gmra.mxu0 %v1571
        %v2108 = vpop.f32.mrf.mxu0
        %v2109 = vadd.f32 %v2044, %v2108
        %2110 = vmatmul.f32.gmra.mxu0 %v1577
        %v2111 = vpop.f32.mrf.mxu0
        %v2112 = vadd.f32 %v2047, %v2111
        %2113 = vmatmul.f32.gmra.mxu0 %v1583
        %v2114 = vpop.f32.mrf.mxu0
        %v2115 = vadd.f32 %v2050, %v2114
        %2116 = vmatmul.f32.gmra.mxu0 %v1589
        %v2117 = vpop.f32.mrf.mxu0
        %v2118 = vadd.f32 %v2053, %v2117
        %2119 = vmatmul.f32.gmra.mxu0 %v1595
        %v2120 = vpop.f32.mrf.mxu0
        %v2121 = vadd.f32 %v2056, %v2120
        %2122 = vmatmul.f32.gmra.mxu0 %v1601
        %v2123 = vpop.f32.mrf.mxu0
        %v2124 = vadd.f32 %v2059, %v2123
        %2125 = vmatmul.f32.gmra.mxu0 %v1607
        %v2126 = vpop.f32.mrf.mxu0
        %v2127 = vadd.f32 %v2062, %v2126
        %2128 = vmatmul.f32.gmra.mxu0 %v1613
        %v2129 = vpop.f32.mrf.mxu0
        %v2130 = vadd.f32 %v2065, %v2129
        %2131 = vdwg.mxu0
        %2132 = vmatpush.msra.mxu0 %v1806
        %2133 = vmatpush.msra.mxu0 %v1805
        %2134 = vmatpush.msra.mxu0 %v1804
        %2135 = vmatpush.msra.mxu0 %v1803
        %2136 = vmatpush.msra.mxu0 %v1802
        %2137 = vmatpush.msra.mxu0 %v1801
        %2138 = vmatpush.msra.mxu0 %v1800
        %2139 = vmatpush.msra.mxu0 %v1799
        %2140 = vmatpush.msra.mxu0 %v1798
        %2141 = vmatpush.msra.mxu0 %v1797
        %2142 = vmatpush.msra.mxu0 %v1796
        %2143 = vmatpush.msra.mxu0 %v1795
        %2144 = vmatpush.msra.mxu0 %v1794
        %2145 = vmatpush.msra.mxu0 %v1793
        %2146 = vmatpush.msra.mxu0 %v1792
        %2147 = vmatpush.msra.mxu0 %v1791
        %2148 = vmatmul.f32.gmra.mxu0 %v1524
        %v2149 = vpop.f32.mrf.mxu0
        %v2150 = vadd.f32 %v2085, %v2149
        %2151 = vmatmul.f32.gmra.mxu0 %v1530
        %v2152 = vpop.f32.mrf.mxu0
        %v2153 = vadd.f32 %v2088, %v2152
        %2154 = vmatmul.f32.gmra.mxu0 %v1536
        %v2155 = vpop.f32.mrf.mxu0
        %v2156 = vadd.f32 %v2091, %v2155
        %2157 = vmatmul.f32.gmra.mxu0 %v1542
        %v2158 = vpop.f32.mrf.mxu0
        %v2159 = vadd.f32 %v2094, %v2158
        %2160 = vmatmul.f32.gmra.mxu0 %v1548
        %v2161 = vpop.f32.mrf.mxu0
        %v2162 = vadd.f32 %v2097, %v2161
        %2163 = vmatmul.f32.gmra.mxu0 %v1554
        %v2164 = vpop.f32.mrf.mxu0
        %v2165 = vadd.f32 %v2100, %v2164
        %2166 = vmatmul.f32.gmra.mxu0 %v1560
        %v2167 = vpop.f32.mrf.mxu0
        %v2168 = vadd.f32 %v2103, %v2167
        %2169 = vmatmul.f32.gmra.mxu0 %v1566
        %v2170 = vpop.f32.mrf.mxu0
        %v2171 = vadd.f32 %v2106, %v2170
        %2172 = vmatmul.f32.gmra.mxu0 %v1572
        %v2173 = vpop.f32.mrf.mxu0
        %v2174 = vadd.f32 %v2109, %v2173
        %2175 = vmatmul.f32.gmra.mxu0 %v1578
        %v2176 = vpop.f32.mrf.mxu0
        %v2177 = vadd.f32 %v2112, %v2176
        %2178 = vmatmul.f32.gmra.mxu0 %v1584
        %v2179 = vpop.f32.mrf.mxu0
        %v2180 = vadd.f32 %v2115, %v2179
        %2181 = vmatmul.f32.gmra.mxu0 %v1590
        %v2182 = vpop.f32.mrf.mxu0
        %v2183 = vadd.f32 %v2118, %v2182
        %2184 = vmatmul.f32.gmra.mxu0 %v1596
        %v2185 = vpop.f32.mrf.mxu0
        %v2186 = vadd.f32 %v2121, %v2185
        %2187 = vmatmul.f32.gmra.mxu0 %v1602
        %v2188 = vpop.f32.mrf.mxu0
        %v2189 = vadd.f32 %v2124, %v2188
        %2190 = vmatmul.f32.gmra.mxu0 %v1608
        %v2191 = vpop.f32.mrf.mxu0
        %v2192 = vadd.f32 %v2127, %v2191
        %2193 = vmatmul.f32.gmra.mxu0 %v1614
        %v2194 = vpop.f32.mrf.mxu0
        %v2195 = vadd.f32 %v2130, %v2194
        %2196 = vdwg.mxu0
        %2197 = vst [vmem:[%s254] sm:$0xff] %v2150
        %2198 = vst [vmem:[%s254 + $0x8] sm:$0xff] %v2153
        %2199 = vst [vmem:[%s254 + $0x10] sm:$0xff] %v2156
        %2200 = vst [vmem:[%s254 + $0x18] sm:$0xff] %v2159
        %2201 = vst [vmem:[%s254 + $0x20] sm:$0xff] %v2162
        %2202 = vst [vmem:[%s254 + $0x28] sm:$0xff] %v2165
        %2203 = vst [vmem:[%s254 + $0x30] sm:$0xff] %v2168
        %2204 = vst [vmem:[%s254 + $0x38] sm:$0xff] %v2171
        %2205 = vst [vmem:[%s254 + $0x40] sm:$0xff] %v2174
        %2206 = vst [vmem:[%s254 + $0x48] sm:$0xff] %v2177
        %2207 = vst [vmem:[%s254 + $0x50] sm:$0xff] %v2180
        %2208 = vst [vmem:[%s254 + $0x58] sm:$0xff] %v2183
        %2209 = vst [vmem:[%s254 + $0x60] sm:$0xff] %v2186
        %2210 = vst [vmem:[%s254 + $0x68] sm:$0xff] %v2189
        %2211 = vst [vmem:[%s254 + $0x70] sm:$0xff] %v2192
        %2212 = vst [vmem:[%s254 + $0x78] sm:$0xff] %v2195
        %s2213 = sand.u32 %s102, 1
        %s2214 = scalar_lea.sflag [#allocation4], %s2213
        %s2215 = sand.u32 %s102, 1
        %s2216 = smul.addr %s2215, 128
        %s2217 = scalar_lea.vmem [#allocation8], %s2216
        %s2218 = sand.u32 %s128, 1
        %s2219 = scalar_lea.sflag [#allocation10], %s2218
        %s2220 = sand.u32 %s128, 1
        %s2221 = smul.addr %s2220, 768
        %s2222 = scalar_lea.vmem [#allocation9], %s2221
        // Predicated region
        $region45: #{tpu_custom_call.1} parent=31 // pred_check
          %p2223 = pneg %p112
        $region46: #{tpu_custom_call.1} parent=31 // pred_check_branch
          %2225 = sbr.rel (%p2223) target = $region48
        $region47: #{tpu_custom_call.1} parent=31 // pred_region
          %s2226 = smul.u32 16, %s26
          %2228 = vsyncadd %s2214, 0
          %s2229 = smul.addr %s2226, 8
          %s2230 = scalar_lea.hbm %s3, %s2229
          %s2231 = sshll.u32 %s2217, 4
          %s2232 = int_to_ptr.vmem [resolvable:$true] %s2231
          %s2233 = sshll.u32 %s2230, 4
          %s2234 = int_to_ptr.hbm [resolvable:$true] %s2233
          %2239 = dma.vmem_to_hbm [thread:$0]  %s2232, 2048, %s2234, %s2214, 128, 128, 8
        $region48: #{tpu_custom_call.1} parent=31 // pred_fallthru
          _
        // Predicated region
        $region49: #{tpu_custom_call.1} parent=31 // pred_check
          %p2240 = pneg %p138
        $region50: #{tpu_custom_call.1} parent=31 // pred_check_branch
          %2242 = sbr.rel (%p2240) target = $region52
        $region51: #{tpu_custom_call.1} parent=31 // pred_region
          %s2243 = smul.u32 16, %s26
          %2245 = vsyncadd %s2219, 0
          %s2246 = smul.addr %s2243, 6
          %s2247 = smul.addr %s2246, 8
          %s2248 = scalar_lea.hbm %s4, %s2247
          %s2249 = sshll.u32 %s2222, 4
          %s2250 = int_to_ptr.vmem [resolvable:$true] %s2249
          %s2251 = sshll.u32 %s2248, 4
          %s2252 = int_to_ptr.hbm [resolvable:$true] %s2251
          %2257 = dma.vmem_to_hbm [thread:$0]  %s2250, 12288, %s2252, %s2219, 768, 768, 48
        $region52: #{tpu_custom_call.1} parent=31 // pred_fallthru
          _
      $region32: #{tpu_custom_call.1} parent=5 // pred_fallthru
        _
      %p2258 = scmp.le.s32.totalorder 2, %s21
      // Predicated region
      $region53: #{tpu_custom_call.1} parent=5 // pred_check
        %p2259 = pneg %p2258
      $region54: #{tpu_custom_call.1} parent=5 // pred_check_branch
        %2261 = sbr.rel (%p2259) target = $region56
      $region55: #{tpu_custom_call.1} parent=5 // pred_region
        %s2262 = ssub.s32 %s21, 2
        // Predicated region
        $region57: #{tpu_custom_call.1} parent=55 // pred_check
          %p2263 = pneg %p118
        $region58: #{tpu_custom_call.1} parent=55 // pred_check_branch
          %2265 = sbr.rel (%p2263) target = $region60
        $region59: #{tpu_custom_call.1} parent=55 // pred_region
          %s2266 = sand.u32 %s103, 1
          %s2267 = scalar_lea.sflag [#allocation4], %s2266
          %s2268 = sand.u32 %s103, 1
          %s2269 = smul.addr %s2268, 128
          %s2270 = scalar_lea.vmem [#allocation8], %s2269
          %2272 = dma.done %s2267, 2048
        $region60: #{tpu_custom_call.1} parent=55 // pred_fallthru
          _
        // Predicated region
        $region61: #{tpu_custom_call.1} parent=55 // pred_check
          %p2273 = pneg %p144
        $region62: #{tpu_custom_call.1} parent=55 // pred_check_branch
          %2275 = sbr.rel (%p2273) target = $region64
        $region63: #{tpu_custom_call.1} parent=55 // pred_region
          %s2276 = sand.u32 %s129, 1
          %s2277 = scalar_lea.sflag [#allocation10], %s2276
          %s2278 = sand.u32 %s129, 1
          %s2279 = smul.addr %s2278, 768
          %s2280 = scalar_lea.vmem [#allocation9], %s2279
          %2282 = dma.done %s2277, 12288
        $region64: #{tpu_custom_call.1} parent=55 // pred_fallthru
          _
      $region56: #{tpu_custom_call.1} parent=5 // pred_fallthru
        _
    $region6: #{tpu_custom_call.1} parent=1 // loop_footer
      %s25 = sadd.s32 1, %s21
    $region7: #{tpu_custom_call.1} parent=1 // loop_footer_branch
      %20 = sbr.rel target = $region3
    $region8: #{tpu_custom_call.1} parent=1 // loop_exit
      _
    %2283 = vsyncpa [#allocation3], 1
    %s2284 = scalar_lea.sflag [#allocation3], 1
    %2285 = vsyncpa %s2284, 1
    %2286 = vsyncpa [#allocation6], 1
    %2287 = vsyncpa [#allocation4], 1
    %s2288 = scalar_lea.sflag [#allocation4], 1
    %2289 = vsyncpa %s2288, 1
    %2290 = vsyncpa [#allocation10], 1
    %s2291 = scalar_lea.sflag [#allocation10], 1
    %2292 = vsyncpa %s2291, 1

// kernel: tpu_custom_call.1
$region0: #{tpu_custom_call.1}
  #allocation0 [shape = 'u32[]', space=smem, size = 0x4, offset = 0x4, fixed_abs, tag = 'smem constant byte address 0x4 - core index']
  #allocation1 [shape = 'u32[72,128]{1,0:T(1,128)}', space=vmem, size = 0x9000, scoped, tag = 'internal scratch']
  %s0 = inlined_call_operand.hbm [shape: f32[256,128], index: 0, kind: input, shape index: {}]
  %s1 = inlined_call_operand.hbm [shape: f32[768,128], index: 1, kind: input, shape index: {}]
  %s2 = inlined_call_operand.hbm [shape: f32[768,128], index: 2, kind: input, shape index: {}]
  %s3 = inlined_call_operand.hbm [shape: f32[256,128], index: 3, kind: output, shape index: {0}]
  %s4 = inlined_call_operand.hbm [shape: f32[256,768], index: 4, kind: output, shape index: {1}]
  %5 = xla_tuple %s3, %s4
  %s6 = sld [smem:[#allocation0]]
  $region65: #{tpu_custom_call.1} parent=0
    _
  %s8 = ssub.s32 1, %s6
  %s9 = scalar_select 0, %s8, %s6
  $region1: #{tpu_custom_call.1} parent=0
    #allocation2 [shape = 'u8[131072]{0}', space=vmem, size = 0x20000, scoped, tag = 'input window, operand 0']
    #allocation3 [shape = 's32[2]{0}', space=sflag, size = 0x8, scoped, tag = 'scoped memory for tpu_custom_call.1']
    #allocation4 [shape = 's32[2]{0}', space=sflag, size = 0x8, scoped, tag = 'scoped memory for tpu_custom_call.1']
    #allocation5 [shape = 'u8[393216]{0}', space=vmem, size = 0x60000, scoped, tag = 'input window, operand 1, single buffered']
    #allocation6 [shape = 's32[1]{0}', space=sflag, size = 0x4, scoped, tag = 'scoped memory for tpu_custom_call.1']
    #allocation7 [shape = 'u8[393216]{0}', space=vmem, size = 0x60000, scoped, tag = 'input window, operand 2, single buffered']
    #allocation8 [shape = 'u8[131072]{0}', space=vmem, size = 0x20000, scoped, tag = 'output window, operand 0']
    #allocation9 [shape = 'u8[786432]{0}', space=vmem, size = 0xc0000, scoped, tag = 'output window, operand 1']
    #allocation10 [shape = 's32[2]{0}', space=sflag, size = 0x8, scoped, tag = 'scoped memory for tpu_custom_call.1']
    %10 = vsyncpa [#allocation3], 0
    %s11 = scalar_lea.sflag [#allocation3], 1
    %12 = vsyncpa %s11, 0
    %13 = vsyncpa [#allocation6], 0
    %14 = vsyncpa [#allocation4], 0
    %s15 = scalar_lea.sflag [#allocation4], 1
    %16 = vsyncpa %s15, 0
    %17 = vsyncpa [#allocation10], 0
    %s18 = scalar_lea.sflag [#allocation10], 1
    %19 = vsyncpa %s18, 0
    loop: start=0, step=1, limit=4
    $region2: #{tpu_custom_call.1} parent=1 // loop_pre_header
      _
    $region3: #{tpu_custom_call.1} parent=1 // loop_header
      %s21 = sphi 0, %s25
      %p22 = scmp.ge.s32.totalorder %s21, 4
      %s31 = sphi 0, %s33
      %s34 = sphi 0, %s31
      %s35 = sphi 0, %s34
      %s51 = sphi 0, %s35
      %s55 = sphi 0, %s55
      %s57 = sphi 0, %s55
      %s58 = sphi 0, %s57
      %s72 = sphi 0, %s58
      %s76 = sphi 0, %s76
      %s78 = sphi 0, %s76
      %s79 = sphi 0, %s78
      %s93 = sphi 0, %s79
      %s99 = sphi 0, %s101
      %s102 = sphi 0, %s99
      %s103 = sphi 0, %s102
      %s119 = sphi 0, %s103
      %s125 = sphi 0, %s127
      %s128 = sphi 0, %s125
      %s129 = sphi 0, %s128
      %s145 = sphi 0, %s129
    $region4: #{tpu_custom_call.1} parent=1 // loop_header_branch
      %24 = sbr.rel (%p22) target = $region8
    $region5: #{tpu_custom_call.1} parent=1 // loop_body
      %s26 = ssub.s32 %s21, 1
      %s27 = ssub.s32 %s21, 2
      %s28 = sadd.s32 %s21, 1
      %s29 = ssub.s32 %s21, %s28
      %p30 = scmp.eq.s32.totalorder %s29, 0
      %s32 = sadd.s32 %s31, 1
      %s33 = scalar_select %p30, %s31, %s32
      %p36 = pneg %p30
      %p37 = scmp.eq.s32.totalorder %s21, 1
      %p38 = por %p36, %p37
      %p39 = scmp.ne.s32.totalorder %s31, %s34
      %p40 = scmp.eq.s32.totalorder %s21, 0
      %p41 = por %p39, %p40
      %p42 = scmp.ne.s32.totalorder %s31, %s34
      %p43 = scmp.eq.s32.totalorder %s26, 1
      %p44 = por %p42, %p43
      %p45 = scmp.ne.s32.totalorder %s34, %s35
      %p46 = scmp.eq.s32.totalorder %s26, 0
      %p47 = por %p45, %p46
      %p48 = scmp.ne.s32.totalorder %s34, %s35
      %p49 = scmp.eq.s32.totalorder %s27, 1
      %p50 = por %p48, %p49
      %p52 = scmp.ne.s32.totalorder %s35, %s51
      %p53 = scmp.eq.s32.totalorder %s27, 0
      %p54 = por %p52, %p53
      %s56 = sadd.s32 %s55, 1
      %p59 = scmp.eq.s32.totalorder %s21, 1
      %p60 = scmp.ne.s32.totalorder %s55, %s57
      %p61 = scmp.eq.s32.totalorder %s21, 0
      %p62 = por %p60, %p61
      %p63 = scmp.ne.s32.totalorder %s55, %s57
      %p64 = scmp.eq.s32.totalorder %s26, 1
      %p65 = por %p63, %p64
      %p66 = scmp.ne.s32.totalorder %s57, %s58
      %p67 = scmp.eq.s32.totalorder %s26, 0
      %p68 = por %p66, %p67
      %p69 = scmp.ne.s32.totalorder %s57, %s58
      %p70 = scmp.eq.s32.totalorder %s27, 1
      %p71 = por %p69, %p70
      %p73 = scmp.ne.s32.totalorder %s58, %s72
      %p74 = scmp.eq.s32.totalorder %s27, 0
      %p75 = por %p73, %p74
      %s77 = sadd.s32 %s76, 1
      %p80 = scmp.eq.s32.totalorder %s21, 1
      %p81 = scmp.ne.s32.totalorder %s76, %s78
      %p82 = scmp.eq.s32.totalorder %s21, 0
      %p83 = por %p81, %p82
      %p84 = scmp.ne.s32.totalorder %s76, %s78
      %p85 = scmp.eq.s32.totalorder %s26, 1
      %p86 = por %p84, %p85
      %p87 = scmp.ne.s32.totalorder %s78, %s79
      %p88 = scmp.eq.s32.totalorder %s26, 0
      %p89 = por %p87, %p88
      %p90 = scmp.ne.s32.totalorder %s78, %s79
      %p91 = scmp.eq.s32.totalorder %s27, 1
      %p92 = por %p90, %p91
      %p94 = scmp.ne.s32.totalorder %s79, %s93
      %p95 = scmp.eq.s32.totalorder %s27, 0
      %p96 = por %p94, %p95
      %s97 = ssub.s32 %s21, %s28
      %p98 = scmp.eq.s32.totalorder %s97, 0
      %s100 = sadd.s32 %s99, 1
      %s101 = scalar_select %p98, %s99, %s100
      %p104 = pneg %p98
      %p105 = scmp.eq.s32.totalorder %s21, 1
      %p106 = por %p104, %p105
      %p107 = scmp.ne.s32.totalorder %s99, %s102
      %p108 = scmp.eq.s32.totalorder %s21, 0
      %p109 = por %p107, %p108
      %p110 = scmp.ne.s32.totalorder %s99, %s102
      %p111 = scmp.eq.s32.totalorder %s26, 1
      %p112 = por %p110, %p111
      %p113 = scmp.ne.s32.totalorder %s102, %s103
      %p114 = scmp.eq.s32.totalorder %s26, 0
      %p115 = por %p113, %p114
      %p116 = scmp.ne.s32.totalorder %s102, %s103
      %p117 = scmp.eq.s32.totalorder %s27, 1
      %p118 = por %p116, %p117
      %p120 = scmp.ne.s32.totalorder %s103, %s119
      %p121 = scmp.eq.s32.totalorder %s27, 0
      %p122 = por %p120, %p121
      %s123 = ssub.s32 %s21, %s28
      %p124 = scmp.eq.s32.totalorder %s123, 0
      %s126 = sadd.s32 %s125, 1
      %s127 = scalar_select %p124, %s125, %s126
      %p130 = pneg %p124
      %p131 = scmp.eq.s32.totalorder %s21, 1
      %p132 = por %p130, %p131
      %p133 = scmp.ne.s32.totalorder %s125, %s128
      %p134 = scmp.eq.s32.totalorder %s21, 0
      %p135 = por %p133, %p134
      %p136 = scmp.ne.s32.totalorder %s125, %s128
      %p137 = scmp.eq.s32.totalorder %s26, 1
      %p138 = por %p136, %p137
      %p139 = scmp.ne.s32.totalorder %s128, %s129
      %p140 = scmp.eq.s32.totalorder %s26, 0
      %p141 = por %p139, %p140
      %p142 = scmp.ne.s32.totalorder %s128, %s129
      %p143 = scmp.eq.s32.totalorder %s27, 1
      %p144 = por %p142, %p143
      %p146 = scmp.ne.s32.totalorder %s129, %s145
      %p147 = scmp.eq.s32.totalorder %s27, 0
      %p148 = por %p146, %p147
      %p149 = scmp.le.s32.totalorder 1, %s21
      %p150 = scmp.lt.s32.totalorder %s21, 3
      %p151 = pnand %p149, %p150
      %p152 = pneg %p151
      // Predicated region
      $region9: #{tpu_custom_call.1} parent=5 // pred_check
        _
      $region10: #{tpu_custom_call.1} parent=5 // pred_check_branch
        %154 = sbr.rel (%p151) target = $region12
      $region11: #{tpu_custom_call.1} parent=5 // pred_region
        %s155 = ssub.s32 %s21, 1
        // Predicated region
        $region13: #{tpu_custom_call.1} parent=11 // pred_check
          %p156 = pneg %p68
        $region14: #{tpu_custom_call.1} parent=11 // pred_check_branch
          %158 = sbr.rel (%p156) target = $region16
        $region15: #{tpu_custom_call.1} parent=11 // pred_region
          %160 = vsyncadd [#allocation6], 0
          %s161 = sshll.u32 %s1, 4
          %s162 = int_to_ptr.hbm [resolvable:$true] %s161
          %s163 = sshll.u32 [#allocation5], 4
          %s164 = int_to_ptr.vmem [resolvable:$true] %s163
          %169 = dma.hbm_to_vmem [thread:$0]  %s162, 12288, %s164, [#allocation6], 128, 128, 8
        $region16: #{tpu_custom_call.1} parent=11 // pred_fallthru
          _
        // Predicated region
        $region17: #{tpu_custom_call.1} parent=11 // pred_check
          %p170 = pneg %p89
        $region18: #{tpu_custom_call.1} parent=11 // pred_check_branch
          %172 = sbr.rel (%p170) target = $region20
        $region19: #{tpu_custom_call.1} parent=11 // pred_region
          %174 = vsyncadd [#allocation6], 0
          %s175 = sshll.u32 %s2, 4
          %s176 = int_to_ptr.hbm [resolvable:$true] %s175
          %s177 = sshll.u32 [#allocation7], 4
          %s178 = int_to_ptr.vmem [resolvable:$true] %s177
          %183 = dma.hbm_to_vmem [thread:$0]  %s176, 12288, %s178, [#allocation6], 128, 128, 8
        $region20: #{tpu_custom_call.1} parent=11 // pred_fallthru
          _
      $region12: #{tpu_custom_call.1} parent=5 // pred_fallthru
        _
      %p184 = scmp.lt.s32.totalorder %s21, 2
      // Predicated region
      $region21: #{tpu_custom_call.1} parent=5 // pred_check
        %p185 = pneg %p184
      $region22: #{tpu_custom_call.1} parent=5 // pred_check_branch
        %187 = sbr.rel (%p185) target = $region24
      $region23: #{tpu_custom_call.1} parent=5 // pred_region
        // Predicated region
        $region25: #{tpu_custom_call.1} parent=23 // pred_check
          %p188 = pneg %p41
        $region26: #{tpu_custom_call.1} parent=23 // pred_check_branch
          %190 = sbr.rel (%p188) target = $region28
        $region27: #{tpu_custom_call.1} parent=23 // pred_region
          %s191 = sand.u32 %s31, 1
          %s192 = scalar_lea.sflag [#allocation3], %s191
          %s193 = sand.u32 %s31, 1
          %s194 = smul.addr %s193, 128
          %s195 = scalar_lea.vmem [#allocation2], %s194
          %s196 = smul.u32 16, %s21
          %198 = vsyncadd %s192, 0
          %s199 = smul.addr %s196, 8
          %s200 = scalar_lea.hbm %s0, %s199
          %s201 = sshll.u32 %s200, 4
          %s202 = int_to_ptr.hbm [resolvable:$true] %s201
          %s203 = sshll.u32 %s195, 4
          %s204 = int_to_ptr.vmem [resolvable:$true] %s203
          %209 = dma.hbm_to_vmem [thread:$0]  %s202, 2048, %s204, %s192, 128, 128, 8
        $region28: #{tpu_custom_call.1} parent=23 // pred_fallthru
          _
      $region24: #{tpu_custom_call.1} parent=5 // pred_fallthru
        _
      %p210 = scmp.le.s32.totalorder 1, %s21
      %p211 = scmp.lt.s32.totalorder %s21, 3
      %p212 = pnand %p210, %p211
      %p213 = pneg %p212
      // Predicated region
      $region29: #{tpu_custom_call.1} parent=5 // pred_check
        _
      $region30: #{tpu_custom_call.1} parent=5 // pred_check_branch
        %215 = sbr.rel (%p212) target = $region32
      $region31: #{tpu_custom_call.1} parent=5 // pred_region
        %s216 = ssub.s32 %s21, 1
        %s217 = sand.u32 %s34, 1
        %s218 = scalar_lea.sflag [#allocation3], %s217
        %s219 = sand.u32 %s34, 1
        %s220 = smul.addr %s219, 128
        %s221 = scalar_lea.vmem [#allocation2], %s220
        // Predicated region
        $region33: #{tpu_custom_call.1} parent=31 // pred_check
          %p222 = pneg %p47
        $region34: #{tpu_custom_call.1} parent=31 // pred_check_branch
          %224 = sbr.rel (%p222) target = $region36
        $region35: #{tpu_custom_call.1} parent=31 // pred_region
          %226 = dma.done %s218, 2048
        $region36: #{tpu_custom_call.1} parent=31 // pred_fallthru
          _
        // Predicated region
        $region37: #{tpu_custom_call.1} parent=31 // pred_check
          %p227 = pneg %p68
        $region38: #{tpu_custom_call.1} parent=31 // pred_check_branch
          %229 = sbr.rel (%p227) target = $region40
        $region39: #{tpu_custom_call.1} parent=31 // pred_region
          %231 = dma.done [#allocation6], 12288
        $region40: #{tpu_custom_call.1} parent=31 // pred_fallthru
          _
        // Predicated region
        $region41: #{tpu_custom_call.1} parent=31 // pred_check
          %p232 = pneg %p89
        $region42: #{tpu_custom_call.1} parent=31 // pred_check_branch
          %234 = sbr.rel (%p232) target = $region44
        $region43: #{tpu_custom_call.1} parent=31 // pred_region
          %236 = dma.done [#allocation6], 12288
        $region44: #{tpu_custom_call.1} parent=31 // pred_fallthru
          _
        %s237 = sand.u32 %s34, 1
        %s238 = scalar_lea.sflag [#allocation3], %s237
        %s239 = sand.u32 %s34, 1
        %s240 = smul.addr %s239, 128
        %s241 = scalar_lea.vmem [#allocation2], %s240
        %p242 = pneg %p47
        %p243 = pneg %p44
        %p244 = pneg %p68
        %p245 = pneg %p65
        %p246 = pneg %p89
        %p247 = pneg %p86
        %p248 = pneg %p115
        %p249 = pneg %p112
        %s250 = sand.u32 %s102, 1
        %s251 = scalar_lea.sflag [#allocation4], %s250
        %s252 = sand.u32 %s102, 1
        %s253 = smul.addr %s252, 128
        %s254 = scalar_lea.vmem [#allocation8], %s253
        %p255 = pneg %p141
        %p256 = pneg %p138
        %s257 = sand.u32 %s128, 1
        %s258 = scalar_lea.sflag [#allocation10], %s257
        %s259 = sand.u32 %s128, 1
        %s260 = smul.addr %s259, 768
        %s261 = scalar_lea.vmem [#allocation9], %s260
        %s262 = smul.u32 16, %s26
        %s263 = smul.u32 16, %s26
        %s264 = smul.u32 16, %s26
        %v265 = vld [vmem:[%s221] sm:$0xff]
        %v266 = vld [vmem:[%s221 + $0x8] sm:$0xff]
        %v267 = vld [vmem:[%s221 + $0x10] sm:$0xff]
        %v268 = vld [vmem:[%s221 + $0x18] sm:$0xff]
        %v269 = vld [vmem:[%s221 + $0x20] sm:$0xff]
        %v270 = vld [vmem:[%s221 + $0x28] sm:$0xff]
        %v271 = vld [vmem:[%s221 + $0x30] sm:$0xff]
        %v272 = vld [vmem:[%s221 + $0x38] sm:$0xff]
        %v273 = vld [vmem:[%s221 + $0x40] sm:$0xff]
        %v274 = vld [vmem:[%s221 + $0x48] sm:$0xff]
        %v275 = vld [vmem:[%s221 + $0x50] sm:$0xff]
        %v276 = vld [vmem:[%s221 + $0x58] sm:$0xff]
        %v277 = vld [vmem:[%s221 + $0x60] sm:$0xff]
        %v278 = vld [vmem:[%s221 + $0x68] sm:$0xff]
        %v279 = vld [vmem:[%s221 + $0x70] sm:$0xff]
        %v280 = vld [vmem:[%s221 + $0x78] sm:$0xff]
        %v281 = vmul.f32 %v265, 0.088388346
        %v282 = vmul.f32 %v266, 0.088388346
        %v283 = vmul.f32 %v267, 0.088388346
        %v284 = vmul.f32 %v268, 0.088388346
        %v285 = vmul.f32 %v269, 0.088388346
        %v286 = vmul.f32 %v270, 0.088388346
        %v287 = vmul.f32 %v271, 0.088388346
        %v288 = vmul.f32 %v272, 0.088388346
        %v289 = vmul.f32 %v273, 0.088388346
        %v290 = vmul.f32 %v274, 0.088388346
        %v291 = vmul.f32 %v275, 0.088388346
        %v292 = vmul.f32 %v276, 0.088388346
        %v293 = vmul.f32 %v277, 0.088388346
        %v294 = vmul.f32 %v278, 0.088388346
        %v295 = vmul.f32 %v279, 0.088388346
        %v296 = vmul.f32 %v280, 0.088388346
        %v297 = vld [vmem:[#allocation5] sm:$0xff]
        %v298 = vld [vmem:[#allocation5 + $0x8] sm:$0xff]
        %v299 = vld [vmem:[#allocation5 + $0x10] sm:$0xff]
        %v300 = vld [vmem:[#allocation5 + $0x18] sm:$0xff]
        %v301 = vld [vmem:[#allocation5 + $0x20] sm:$0xff]
        %v302 = vld [vmem:[#allocation5 + $0x28] sm:$0xff]
        %v303 = vld [vmem:[#allocation5 + $0x30] sm:$0xff]
        %v304 = vld [vmem:[#allocation5 + $0x38] sm:$0xff]
        %v305 = vld [vmem:[#allocation5 + $0x40] sm:$0xff]
        %v306 = vld [vmem:[#allocation5 + $0x48] sm:$0xff]
        %v307 = vld [vmem:[#allocation5 + $0x50] sm:$0xff]
        %v308 = vld [vmem:[#allocation5 + $0x58] sm:$0xff]
        %v309 = vld [vmem:[#allocation5 + $0x60] sm:$0xff]
        %v310 = vld [vmem:[#allocation5 + $0x68] sm:$0xff]
        %v311 = vld [vmem:[#allocation5 + $0x70] sm:$0xff]
        %v312 = vld [vmem:[#allocation5 + $0x78] sm:$0xff]
        %v313 = vld [vmem:[#allocation5 + $0x80] sm:$0xff]
        %v314 = vld [vmem:[#allocation5 + $0x88] sm:$0xff]
        %v315 = vld [vmem:[#allocation5 + $0x90] sm:$0xff]
        %v316 = vld [vmem:[#allocation5 + $0x98] sm:$0xff]
        %v317 = vld [vmem:[#allocation5 + $0xa0] sm:$0xff]
        %v318 = vld [vmem:[#allocation5 + $0xa8] sm:$0xff]
        %v319 = vld [vmem:[#allocation5 + $0xb0] sm:$0xff]
        %v320 = vld [vmem:[#allocation5 + $0xb8] sm:$0xff]
        %v321 = vld [vmem:[#allocation5 + $0xc0] sm:$0xff]
        %v322 = vld [vmem:[#allocation5 + $0xc8] sm:$0xff]
        %v323 = vld [vmem:[#allocation5 + $0xd0] sm:$0xff]
        %v324 = vld [vmem:[#allocation5 + $0xd8] sm:$0xff]
        %v325 = vld [vmem:[#allocation5 + $0xe0] sm:$0xff]
        %v326 = vld [vmem:[#allocation5 + $0xe8] sm:$0xff]
        %v327 = vld [vmem:[#allocation5 + $0xf0] sm:$0xff]
        %v328 = vld [vmem:[#allocation5 + $0xf8] sm:$0xff]
        %v329 = vld [vmem:[#allocation5 + $0x100] sm:$0xff]
        %v330 = vld [vmem:[#allocation5 + $0x108] sm:$0xff]
        %v331 = vld [vmem:[#allocation5 + $0x110] sm:$0xff]
        %v332 = vld [vmem:[#allocation5 + $0x118] sm:$0xff]
        %v333 = vld [vmem:[#allocation5 + $0x120] sm:$0xff]
        %v334 = vld [vmem:[#allocation5 + $0x128] sm:$0xff]
        %v335 = vld [vmem:[#allocation5 + $0x130] sm:$0xff]
        %v336 = vld [vmem:[#allocation5 + $0x138] sm:$0xff]
        %v337 = vld [vmem:[#allocation5 + $0x140] sm:$0xff]
        %v338 = vld [vmem:[#allocation5 + $0x148] sm:$0xff]
        %v339 = vld [vmem:[#allocation5 + $0x150] sm:$0xff]
        %v340 = vld [vmem:[#allocation5 + $0x158] sm:$0xff]
        %v341 = vld [vmem:[#allocation5 + $0x160] sm:$0xff]
        %v342 = vld [vmem:[#allocation5 + $0x168] sm:$0xff]
        %v343 = vld [vmem:[#allocation5 + $0x170] sm:$0xff]
        %v344 = vld [vmem:[#allocation5 + $0x178] sm:$0xff]
        %v345 = vld [vmem:[#allocation5 + $0x180] sm:$0xff]
        %v346 = vld [vmem:[#allocation5 + $0x188] sm:$0xff]
        %v347 = vld [vmem:[#allocation5 + $0x190] sm:$0xff]
        %v348 = vld [vmem:[#allocation5 + $0x198] sm:$0xff]
        %v349 = vld [vmem:[#allocation5 + $0x1a0] sm:$0xff]
        %v350 = vld [vmem:[#allocation5 + $0x1a8] sm:$0xff]
        %v351 = vld [vmem:[#allocation5 + $0x1b0] sm:$0xff]
        %v352 = vld [vmem:[#allocation5 + $0x1b8] sm:$0xff]
        %v353 = vld [vmem:[#allocation5 + $0x1c0] sm:$0xff]
        %v354 = vld [vmem:[#allocation5 + $0x1c8] sm:$0xff]
        %v355 = vld [vmem:[#allocation5 + $0x1d0] sm:$0xff]
        %v356 = vld [vmem:[#allocation5 + $0x1d8] sm:$0xff]
        %v357 = vld [vmem:[#allocation5 + $0x1e0] sm:$0xff]
        %v358 = vld [vmem:[#allocation5 + $0x1e8] sm:$0xff]
        %v359 = vld [vmem:[#allocation5 + $0x1f0] sm:$0xff]
        %v360 = vld [vmem:[#allocation5 + $0x1f8] sm:$0xff]
        %v361 = vld [vmem:[#allocation5 + $0x200] sm:$0xff]
        %v362 = vld [vmem:[#allocation5 + $0x208] sm:$0xff]
        %v363 = vld [vmem:[#allocation5 + $0x210] sm:$0xff]
        %v364 = vld [vmem:[#allocation5 + $0x218] sm:$0xff]
        %v365 = vld [vmem:[#allocation5 + $0x220] sm:$0xff]
        %v366 = vld [vmem:[#allocation5 + $0x228] sm:$0xff]
        %v367 = vld [vmem:[#allocation5 + $0x230] sm:$0xff]
        %v368 = vld [vmem:[#allocation5 + $0x238] sm:$0xff]
        %v369 = vld [vmem:[#allocation5 + $0x240] sm:$0xff]
        %v370 = vld [vmem:[#allocation5 + $0x248] sm:$0xff]
        %v371 = vld [vmem:[#allocation5 + $0x250] sm:$0xff]
        %v372 = vld [vmem:[#allocation5 + $0x258] sm:$0xff]
        %v373 = vld [vmem:[#allocation5 + $0x260] sm:$0xff]
        %v374 = vld [vmem:[#allocation5 + $0x268] sm:$0xff]
        %v375 = vld [vmem:[#allocation5 + $0x270] sm:$0xff]
        %v376 = vld [vmem:[#allocation5 + $0x278] sm:$0xff]
        %v377 = vld [vmem:[#allocation5 + $0x280] sm:$0xff]
        %v378 = vld [vmem:[#allocation5 + $0x288] sm:$0xff]
        %v379 = vld [vmem:[#allocation5 + $0x290] sm:$0xff]
        %v380 = vld [vmem:[#allocation5 + $0x298] sm:$0xff]
        %v381 = vld [vmem:[#allocation5 + $0x2a0] sm:$0xff]
        %v382 = vld [vmem:[#allocation5 + $0x2a8] sm:$0xff]
        %v383 = vld [vmem:[#allocation5 + $0x2b0] sm:$0xff]
        %v384 = vld [vmem:[#allocation5 + $0x2b8] sm:$0xff]
        %v385 = vld [vmem:[#allocation5 + $0x2c0] sm:$0xff]
        %v386 = vld [vmem:[#allocation5 + $0x2c8] sm:$0xff]
        %v387 = vld [vmem:[#allocation5 + $0x2d0] sm:$0xff]
        %v388 = vld [vmem:[#allocation5 + $0x2d8] sm:$0xff]
        %v389 = vld [vmem:[#allocation5 + $0x2e0] sm:$0xff]
        %v390 = vld [vmem:[#allocation5 + $0x2e8] sm:$0xff]
        %v391 = vld [vmem:[#allocation5 + $0x2f0] sm:$0xff]
        %v392 = vld [vmem:[#allocation5 + $0x2f8] sm:$0xff]
        %393 = vmatpush.xpose.msra.mxu0 %v312
        %394 = vmatpush.xpose.msra.mxu0 %v311
        %395 = vmatpush.xpose.msra.mxu0 %v310
        %396 = vmatpush.xpose.msra.mxu0 %v309
        %397 = vmatpush.xpose.msra.mxu0 %v308
        %398 = vmatpush.xpose.msra.mxu0 %v307
        %399 = vmatpush.xpose.msra.mxu0 %v306
        %400 = vmatpush.xpose.msra.mxu0 %v305
        %401 = vmatpush.xpose.msra.mxu0 %v304
        %402 = vmatpush.xpose.msra.mxu0 %v303
        %403 = vmatpush.xpose.msra.mxu0 %v302
        %404 = vmatpush.xpose.msra.mxu0 %v301
        %405 = vmatpush.xpose.msra.mxu0 %v300
        %406 = vmatpush.xpose.msra.mxu0 %v299
        %407 = vmatpush.xpose.msra.mxu0 %v298
        %408 = vmatpush.xpose.msra.mxu0 %v297
        %409 = vmatmul.f32.gmra.mxu0 %v281
        %v410 = vpop.f32.mrf.mxu0
        %v411 = vadd.f32 0.0, %v410
        %412 = vmatmul.f32.gmra.mxu0 %v282
        %v413 = vpop.f32.mrf.mxu0
        %v414 = vadd.f32 0.0, %v413
        %415 = vmatmul.f32.gmra.mxu0 %v283
        %v416 = vpop.f32.mrf.mxu0
        %v417 = vadd.f32 0.0, %v416
        %418 = vmatmul.f32.gmra.mxu0 %v284
        %v419 = vpop.f32.mrf.mxu0
        %v420 = vadd.f32 0.0, %v419
        %421 = vmatmul.f32.gmra.mxu0 %v285
        %v422 = vpop.f32.mrf.mxu0
        %v423 = vadd.f32 0.0, %v422
        %424 = vmatmul.f32.gmra.mxu0 %v286
        %v425 = vpop.f32.mrf.mxu0
        %v426 = vadd.f32 0.0, %v425
        %427 = vmatmul.f32.gmra.mxu0 %v287
        %v428 = vpop.f32.mrf.mxu0
        %v429 = vadd.f32 0.0, %v428
        %430 = vmatmul.f32.gmra.mxu0 %v288
        %v431 = vpop.f32.mrf.mxu0
        %v432 = vadd.f32 0.0, %v431
        %433 = vmatmul.f32.gmra.mxu0 %v289
        %v434 = vpop.f32.mrf.mxu0
        %v435 = vadd.f32 0.0, %v434
        %436 = vmatmul.f32.gmra.mxu0 %v290
        %v437 = vpop.f32.mrf.mxu0
        %v438 = vadd.f32 0.0, %v437
        %439 = vmatmul.f32.gmra.mxu0 %v291
        %v440 = vpop.f32.mrf.mxu0
        %v441 = vadd.f32 0.0, %v440
        %442 = vmatmul.f32.gmra.mxu0 %v292
        %v443 = vpop.f32.mrf.mxu0
        %v444 = vadd.f32 0.0, %v443
        %445 = vmatmul.f32.gmra.mxu0 %v293
        %v446 = vpop.f32.mrf.mxu0
        %v447 = vadd.f32 0.0, %v446
        %448 = vmatmul.f32.gmra.mxu0 %v294
        %v449 = vpop.f32.mrf.mxu0
        %v450 = vadd.f32 0.0, %v449
        %451 = vmatmul.f32.gmra.mxu0 %v295
        %v452 = vpop.f32.mrf.mxu0
        %v453 = vadd.f32 0.0, %v452
        %454 = vmatmul.f32.gmra.mxu0 %v296
        %v455 = vpop.f32.mrf.mxu0
        %v456 = vadd.f32 0.0, %v455
        %457 = vdwg.mxu0
        %458 = vmatpush.xpose.msra.mxu0 %v328
        %459 = vmatpush.xpose.msra.mxu0 %v327
        %460 = vmatpush.xpose.msra.mxu0 %v326
        %461 = vmatpush.xpose.msra.mxu0 %v325
        %462 = vmatpush.xpose.msra.mxu0 %v324
        %463 = vmatpush.xpose.msra.mxu0 %v323
        %464 = vmatpush.xpose.msra.mxu0 %v322
        %465 = vmatpush.xpose.msra.mxu0 %v321
        %466 = vmatpush.xpose.msra.mxu0 %v320
        %467 = vmatpush.xpose.msra.mxu0 %v319
        %468 = vmatpush.xpose.msra.mxu0 %v318
        %469 = vmatpush.xpose.msra.mxu0 %v317
        %470 = vmatpush.xpose.msra.mxu0 %v316
        %471 = vmatpush.xpose.msra.mxu0 %v315
        %472 = vmatpush.xpose.msra.mxu0 %v314
        %473 = vmatpush.xpose.msra.mxu0 %v313
        %474 = vmatmul.f32.gmra.mxu0 %v281
        %v475 = vpop.f32.mrf.mxu0
        %v476 = vadd.f32 0.0, %v475
        %477 = vmatmul.f32.gmra.mxu0 %v282
        %v478 = vpop.f32.mrf.mxu0
        %v479 = vadd.f32 0.0, %v478
        %480 = vmatmul.f32.gmra.mxu0 %v283
        %v481 = vpop.f32.mrf.mxu0
        %v482 = vadd.f32 0.0, %v481
        %483 = vmatmul.f32.gmra.mxu0 %v284
        %v484 = vpop.f32.mrf.mxu0
        %v485 = vadd.f32 0.0, %v484
        %486 = vmatmul.f32.gmra.mxu0 %v285
        %v487 = vpop.f32.mrf.mxu0
        %v488 = vadd.f32 0.0, %v487
        %489 = vmatmul.f32.gmra.mxu0 %v286
        %v490 = vpop.f32.mrf.mxu0
        %v491 = vadd.f32 0.0, %v490
        %492 = vmatmul.f32.gmra.mxu0 %v287
        %v493 = vpop.f32.mrf.mxu0
        %v494 = vadd.f32 0.0, %v493
        %495 = vmatmul.f32.gmra.mxu0 %v288
        %v496 = vpop.f32.mrf.mxu0
        %v497 = vadd.f32 0.0, %v496
        %498 = vmatmul.f32.gmra.mxu0 %v289
        %v499 = vpop.f32.mrf.mxu0
        %v500 = vadd.f32 0.0, %v499
        %501 = vmatmul.f32.gmra.mxu0 %v290
        %v502 = vpop.f32.mrf.mxu0
        %v503 = vadd.f32 0.0, %v502
        %504 = vmatmul.f32.gmra.mxu0 %v291
        %v505 = vpop.f32.mrf.mxu0
        %v506 = vadd.f32 0.0, %v505
        %507 = vmatmul.f32.gmra.mxu0 %v292
        %v508 = vpop.f32.mrf.mxu0
        %v509 = vadd.f32 0.0, %v508
        %510 = vmatmul.f32.gmra.mxu0 %v293
        %v511 = vpop.f32.mrf.mxu0
        %v512 = vadd.f32 0.0, %v511
        %513 = vmatmul.f32.gmra.mxu0 %v294
        %v514 = vpop.f32.mrf.mxu0
        %v515 = vadd.f32 0.0, %v514
        %516 = vmatmul.f32.gmra.mxu0 %v295
        %v517 = vpop.f32.mrf.mxu0
        %v518 = vadd.f32 0.0, %v517
        %519 = vmatmul.f32.gmra.mxu0 %v296
        %v520 = vpop.f32.mrf.mxu0
        %v521 = vadd.f32 0.0, %v520
        %522 = vdwg.mxu0
        %523 = vmatpush.xpose.msra.mxu0 %v344
        %524 = vmatpush.xpose.msra.mxu0 %v343
        %525 = vmatpush.xpose.msra.mxu0 %v342
        %526 = vmatpush.xpose.msra.mxu0 %v341
        %527 = vmatpush.xpose.msra.mxu0 %v340
        %528 = vmatpush.xpose.msra.mxu0 %v339
        %529 = vmatpush.xpose.msra.mxu0 %v338
        %530 = vmatpush.xpose.msra.mxu0 %v337
        %531 = vmatpush.xpose.msra.mxu0 %v336
        %532 = vmatpush.xpose.msra.mxu0 %v335
        %533 = vmatpush.xpose.msra.mxu0 %v334
        %534 = vmatpush.xpose.msra.mxu0 %v333
        %535 = vmatpush.xpose.msra.mxu0 %v332
        %536 = vmatpush.xpose.msra.mxu0 %v331
        %537 = vmatpush.xpose.msra.mxu0 %v330
        %538 = vmatpush.xpose.msra.mxu0 %v329
        %539 = vmatmul.f32.gmra.mxu0 %v281
        %v540 = vpop.f32.mrf.mxu0
        %v541 = vadd.f32 0.0, %v540
        %542 = vmatmul.f32.gmra.mxu0 %v282
        %v543 = vpop.f32.mrf.mxu0
        %v544 = vadd.f32 0.0, %v543
        %545 = vmatmul.f32.gmra.mxu0 %v283
        %v546 = vpop.f32.mrf.mxu0
        %v547 = vadd.f32 0.0, %v546
        %548 = vmatmul.f32.gmra.mxu0 %v284
        %v549 = vpop.f32.mrf.mxu0
        %v550 = vadd.f32 0.0, %v549
        %551 = vmatmul.f32.gmra.mxu0 %v285
        %v552 = vpop.f32.mrf.mxu0
        %v553 = vadd.f32 0.0, %v552
        %554 = vmatmul.f32.gmra.mxu0 %v286
        %v555 = vpop.f32.mrf.mxu0
        %v556 = vadd.f32 0.0, %v555
        %557 = vmatmul.f32.gmra.mxu0 %v287
        %v558 = vpop.f32.mrf.mxu0
        %v559 = vadd.f32 0.0, %v558
        %560 = vmatmul.f32.gmra.mxu0 %v288
        %v561 = vpop.f32.mrf.mxu0
        %v562 = vadd.f32 0.0, %v561
        %563 = vmatmul.f32.gmra.mxu0 %v289
        %v564 = vpop.f32.mrf.mxu0
        %v565 = vadd.f32 0.0, %v564
        %566 = vmatmul.f32.gmra.mxu0 %v290
        %v567 = vpop.f32.mrf.mxu0
        %v568 = vadd.f32 0.0, %v567
        %569 = vmatmul.f32.gmra.mxu0 %v291
        %v570 = vpop.f32.mrf.mxu0
        %v571 = vadd.f32 0.0, %v570
        %572 = vmatmul.f32.gmra.mxu0 %v292
        %v573 = vpop.f32.mrf.mxu0
        %v574 = vadd.f32 0.0, %v573
        %575 = vmatmul.f32.gmra.mxu0 %v293
        %v576 = vpop.f32.mrf.mxu0
        %v577 = vadd.f32 0.0, %v576
        %578 = vmatmul.f32.gmra.mxu0 %v294
        %v579 = vpop.f32.mrf.mxu0
        %v580 = vadd.f32 0.0, %v579
        %581 = vmatmul.f32.gmra.mxu0 %v295
        %v582 = vpop.f32.mrf.mxu0
        %v583 = vadd.f32 0.0, %v582
        %584 = vmatmul.f32.gmra.mxu0 %v296
        %v585 = vpop.f32.mrf.mxu0
        %v586 = vadd.f32 0.0, %v585
        %587 = vdwg.mxu0
        %588 = vmatpush.xpose.msra.mxu0 %v360
        %589 = vmatpush.xpose.msra.mxu0 %v359
        %590 = vmatpush.xpose.msra.mxu0 %v358
        %591 = vmatpush.xpose.msra.mxu0 %v357
        %592 = vmatpush.xpose.msra.mxu0 %v356
        %593 = vmatpush.xpose.msra.mxu0 %v355
        %594 = vmatpush.xpose.msra.mxu0 %v354
        %595 = vmatpush.xpose.msra.mxu0 %v353
        %596 = vmatpush.xpose.msra.mxu0 %v352
        %597 = vmatpush.xpose.msra.mxu0 %v351
        %598 = vmatpush.xpose.msra.mxu0 %v350
        %599 = vmatpush.xpose.msra.mxu0 %v349
        %600 = vmatpush.xpose.msra.mxu0 %v348
        %601 = vmatpush.xpose.msra.mxu0 %v347
        %602 = vmatpush.xpose.msra.mxu0 %v346
        %603 = vmatpush.xpose.msra.mxu0 %v345
        %604 = vmatmul.f32.gmra.mxu0 %v281
        %v605 = vpop.f32.mrf.mxu0
        %v606 = vadd.f32 0.0, %v605
        %607 = vmatmul.f32.gmra.mxu0 %v282
        %v608 = vpop.f32.mrf.mxu0
        %v609 = vadd.f32 0.0, %v608
        %610 = vmatmul.f32.gmra.mxu0 %v283
        %v611 = vpop.f32.mrf.mxu0
        %v612 = vadd.f32 0.0, %v611
        %613 = vmatmul.f32.gmra.mxu0 %v284
        %v614 = vpop.f32.mrf.mxu0
        %v615 = vadd.f32 0.0, %v614
        %616 = vmatmul.f32.gmra.mxu0 %v285
        %v617 = vpop.f32.mrf.mxu0
        %v618 = vadd.f32 0.0, %v617
        %619 = vmatmul.f32.gmra.mxu0 %v286
        %v620 = vpop.f32.mrf.mxu0
        %v621 = vadd.f32 0.0, %v620
        %622 = vmatmul.f32.gmra.mxu0 %v287
        %v623 = vpop.f32.mrf.mxu0
        %v624 = vadd.f32 0.0, %v623
        %625 = vmatmul.f32.gmra.mxu0 %v288
        %v626 = vpop.f32.mrf.mxu0
        %v627 = vadd.f32 0.0, %v626
        %628 = vmatmul.f32.gmra.mxu0 %v289
        %v629 = vpop.f32.mrf.mxu0
        %v630 = vadd.f32 0.0, %v629
        %631 = vmatmul.f32.gmra.mxu0 %v290
        %v632 = vpop.f32.mrf.mxu0
        %v633 = vadd.f32 0.0, %v632
        %634 = vmatmul.f32.gmra.mxu0 %v291
        %v635 = vpop.f32.mrf.mxu0
        %v636 = vadd.f32 0.0, %v635
        %637 = vmatmul.f32.gmra.mxu0 %v292
        %v638 = vpop.f32.mrf.mxu0
        %v639 = vadd.f32 0.0, %v638
        %640 = vmatmul.f32.gmra.mxu0 %v293
        %v641 = vpop.f32.mrf.mxu0
        %v642 = vadd.f32 0.0, %v641
        %643 = vmatmul.f32.gmra.mxu0 %v294
        %v644 = vpop.f32.mrf.mxu0
        %v645 = vadd.f32 0.0, %v644
        %646 = vmatmul.f32.gmra.mxu0 %v295
        %v647 = vpop.f32.mrf.mxu0
        %v648 = vadd.f32 0.0, %v647
        %649 = vmatmul.f32.gmra.mxu0 %v296
        %v650 = vpop.f32.mrf.mxu0
        %v651 = vadd.f32 0.0, %v650
        %652 = vdwg.mxu0
        %653 = vmatpush.xpose.msra.mxu0 %v376
        %654 = vmatpush.xpose.msra.mxu0 %v375
        %655 = vmatpush.xpose.msra.mxu0 %v374
        %656 = vmatpush.xpose.msra.mxu0 %v373
        %657 = vmatpush.xpose.msra.mxu0 %v372
        %658 = vmatpush.xpose.msra.mxu0 %v371
        %659 = vmatpush.xpose.msra.mxu0 %v370
        %660 = vmatpush.xpose.msra.mxu0 %v369
        %661 = vmatpush.xpose.msra.mxu0 %v368
        %662 = vmatpush.xpose.msra.mxu0 %v367
        %663 = vmatpush.xpose.msra.mxu0 %v366
        %664 = vmatpush.xpose.msra.mxu0 %v365
        %665 = vmatpush.xpose.msra.mxu0 %v364
        %666 = vmatpush.xpose.msra.mxu0 %v363
        %667 = vmatpush.xpose.msra.mxu0 %v362
        %668 = vmatpush.xpose.msra.mxu0 %v361
        %669 = vmatmul.f32.gmra.mxu0 %v281
        %v670 = vpop.f32.mrf.mxu0
        %v671 = vadd.f32 0.0, %v670
        %672 = vmatmul.f32.gmra.mxu0 %v282
        %v673 = vpop.f32.mrf.mxu0
        %v674 = vadd.f32 0.0, %v673
        %675 = vmatmul.f32.gmra.mxu0 %v283
        %v676 = vpop.f32.mrf.mxu0
        %v677 = vadd.f32 0.0, %v676
        %678 = vmatmul.f32.gmra.mxu0 %v284
        %v679 = vpop.f32.mrf.mxu0
        %v680 = vadd.f32 0.0, %v679
        %681 = vmatmul.f32.gmra.mxu0 %v285
        %v682 = vpop.f32.mrf.mxu0
        %v683 = vadd.f32 0.0, %v682
        %684 = vmatmul.f32.gmra.mxu0 %v286
        %v685 = vpop.f32.mrf.mxu0
        %v686 = vadd.f32 0.0, %v685
        %687 = vmatmul.f32.gmra.mxu0 %v287
        %v688 = vpop.f32.mrf.mxu0
        %v689 = vadd.f32 0.0, %v688
        %690 = vmatmul.f32.gmra.mxu0 %v288
        %v691 = vpop.f32.mrf.mxu0
        %v692 = vadd.f32 0.0, %v691
        %693 = vmatmul.f32.gmra.mxu0 %v289
        %v694 = vpop.f32.mrf.mxu0
        %v695 = vadd.f32 0.0, %v694
        %696 = vmatmul.f32.gmra.mxu0 %v290
        %v697 = vpop.f32.mrf.mxu0
        %v698 = vadd.f32 0.0, %v697
        %699 = vmatmul.f32.gmra.mxu0 %v291
        %v700 = vpop.f32.mrf.mxu0
        %v701 = vadd.f32 0.0, %v700
        %702 = vmatmul.f32.gmra.mxu0 %v292
        %v703 = vpop.f32.mrf.mxu0
        %v704 = vadd.f32 0.0, %v703
        %705 = vmatmul.f32.gmra.mxu0 %v293
        %v706 = vpop.f32.mrf.mxu0
        %v707 = vadd.f32 0.0, %v706
        %708 = vmatmul.f32.gmra.mxu0 %v294
        %v709 = vpop.f32.mrf.mxu0
        %v710 = vadd.f32 0.0, %v709
        %711 = vmatmul.f32.gmra.mxu0 %v295
        %v712 = vpop.f32.mrf.mxu0
        %v713 = vadd.f32 0.0, %v712
        %714 = vmatmul.f32.gmra.mxu0 %v296
        %v715 = vpop.f32.mrf.mxu0
        %v716 = vadd.f32 0.0, %v715
        %717 = vdwg.mxu0
        %718 = vmatpush.xpose.msra.mxu0 %v392
        %719 = vmatpush.xpose.msra.mxu0 %v391
        %720 = vmatpush.xpose.msra.mxu0 %v390
        %721 = vmatpush.xpose.msra.mxu0 %v389
        %722 = vmatpush.xpose.msra.mxu0 %v388
        %723 = vmatpush.xpose.msra.mxu0 %v387
        %724 = vmatpush.xpose.msra.mxu0 %v386
        %725 = vmatpush.xpose.msra.mxu0 %v385
        %726 = vmatpush.xpose.msra.mxu0 %v384
        %727 = vmatpush.xpose.msra.mxu0 %v383
        %728 = vmatpush.xpose.msra.mxu0 %v382
        %729 = vmatpush.xpose.msra.mxu0 %v381
        %730 = vmatpush.xpose.msra.mxu0 %v380
        %731 = vmatpush.xpose.msra.mxu0 %v379
        %732 = vmatpush.xpose.msra.mxu0 %v378
        %733 = vmatpush.xpose.msra.mxu0 %v377
        %734 = vmatmul.f32.gmra.mxu0 %v281
        %v735 = vpop.f32.mrf.mxu0
        %v736 = vadd.f32 0.0, %v735
        %737 = vmatmul.f32.gmra.mxu0 %v282
        %v738 = vpop.f32.mrf.mxu0
        %v739 = vadd.f32 0.0, %v738
        %740 = vmatmul.f32.gmra.mxu0 %v283
        %v741 = vpop.f32.mrf.mxu0
        %v742 = vadd.f32 0.0, %v741
        %743 = vmatmul.f32.gmra.mxu0 %v284
        %v744 = vpop.f32.mrf.mxu0
        %v745 = vadd.f32 0.0, %v744
        %746 = vmatmul.f32.gmra.mxu0 %v285
        %v747 = vpop.f32.mrf.mxu0
        %v748 = vadd.f32 0.0, %v747
        %749 = vmatmul.f32.gmra.mxu0 %v286
        %v750 = vpop.f32.mrf.mxu0
        %v751 = vadd.f32 0.0, %v750
        %752 = vmatmul.f32.gmra.mxu0 %v287
        %v753 = vpop.f32.mrf.mxu0
        %v754 = vadd.f32 0.0, %v753
        %755 = vmatmul.f32.gmra.mxu0 %v288
        %v756 = vpop.f32.mrf.mxu0
        %v757 = vadd.f32 0.0, %v756
        %758 = vmatmul.f32.gmra.mxu0 %v289
        %v759 = vpop.f32.mrf.mxu0
        %v760 = vadd.f32 0.0, %v759
        %761 = vmatmul.f32.gmra.mxu0 %v290
        %v762 = vpop.f32.mrf.mxu0
        %v763 = vadd.f32 0.0, %v762
        %764 = vmatmul.f32.gmra.mxu0 %v291
        %v765 = vpop.f32.mrf.mxu0
        %v766 = vadd.f32 0.0, %v765
        %767 = vmatmul.f32.gmra.mxu0 %v292
        %v768 = vpop.f32.mrf.mxu0
        %v769 = vadd.f32 0.0, %v768
        %770 = vmatmul.f32.gmra.mxu0 %v293
        %v771 = vpop.f32.mrf.mxu0
        %v772 = vadd.f32 0.0, %v771
        %773 = vmatmul.f32.gmra.mxu0 %v294
        %v774 = vpop.f32.mrf.mxu0
        %v775 = vadd.f32 0.0, %v774
        %776 = vmatmul.f32.gmra.mxu0 %v295
        %v777 = vpop.f32.mrf.mxu0
        %v778 = vadd.f32 0.0, %v777
        %779 = vmatmul.f32.gmra.mxu0 %v296
        %v780 = vpop.f32.mrf.mxu0
        %v781 = vadd.f32 0.0, %v780
        %782 = vdwg.mxu0
        %v783 = vmax.f32 %v411, %v476
        %v784 = vmax.f32 %v783, %v541
        %v785 = vmax.f32 %v784, %v606
        %v786 = vmax.f32 %v785, %v671
        %v787 = vmax.f32 %v786, %v736
        %788 = vmax.xlane.f32.xlu0 %v787
        %v789 = vpop.xlane.xlu0 %788
        %v790 = vmax.f32 %v414, %v479
        %v791 = vmax.f32 %v790, %v544
        %v792 = vmax.f32 %v791, %v609
        %v793 = vmax.f32 %v792, %v674
        %v794 = vmax.f32 %v793, %v739
        %795 = vmax.xlane.f32.xlu0 %v794
        %v796 = vpop.xlane.xlu0 %795
        %v797 = vmax.f32 %v417, %v482
        %v798 = vmax.f32 %v797, %v547
        %v799 = vmax.f32 %v798, %v612
        %v800 = vmax.f32 %v799, %v677
        %v801 = vmax.f32 %v800, %v742
        %802 = vmax.xlane.f32.xlu0 %v801
        %v803 = vpop.xlane.xlu0 %802
        %v804 = vmax.f32 %v420, %v485
        %v805 = vmax.f32 %v804, %v550
        %v806 = vmax.f32 %v805, %v615
        %v807 = vmax.f32 %v806, %v680
        %v808 = vmax.f32 %v807, %v745
        %809 = vmax.xlane.f32.xlu0 %v808
        %v810 = vpop.xlane.xlu0 %809
        %v811 = vmax.f32 %v423, %v488
        %v812 = vmax.f32 %v811, %v553
        %v813 = vmax.f32 %v812, %v618
        %v814 = vmax.f32 %v813, %v683
        %v815 = vmax.f32 %v814, %v748
        %816 = vmax.xlane.f32.xlu0 %v815
        %v817 = vpop.xlane.xlu0 %816
        %v818 = vmax.f32 %v426, %v491
        %v819 = vmax.f32 %v818, %v556
        %v820 = vmax.f32 %v819, %v621
        %v821 = vmax.f32 %v820, %v686
        %v822 = vmax.f32 %v821, %v751
        %823 = vmax.xlane.f32.xlu0 %v822
        %v824 = vpop.xlane.xlu0 %823
        %v825 = vmax.f32 %v429, %v494
        %v826 = vmax.f32 %v825, %v559
        %v827 = vmax.f32 %v826, %v624
        %v828 = vmax.f32 %v827, %v689
        %v829 = vmax.f32 %v828, %v754
        %830 = vmax.xlane.f32.xlu0 %v829
        %v831 = vpop.xlane.xlu0 %830
        %v832 = vmax.f32 %v432, %v497
        %v833 = vmax.f32 %v832, %v562
        %v834 = vmax.f32 %v833, %v627
        %v835 = vmax.f32 %v834, %v692
        %v836 = vmax.f32 %v835, %v757
        %837 = vmax.xlane.f32.xlu0 %v836
        %v838 = vpop.xlane.xlu0 %837
        %v839 = vmax.f32 %v435, %v500
        %v840 = vmax.f32 %v839, %v565
        %v841 = vmax.f32 %v840, %v630
        %v842 = vmax.f32 %v841, %v695
        %v843 = vmax.f32 %v842, %v760
        %844 = vmax.xlane.f32.xlu0 %v843
        %v845 = vpop.xlane.xlu0 %844
        %v846 = vmax.f32 %v438, %v503
        %v847 = vmax.f32 %v846, %v568
        %v848 = vmax.f32 %v847, %v633
        %v849 = vmax.f32 %v848, %v698
        %v850 = vmax.f32 %v849, %v763
        %851 = vmax.xlane.f32.xlu0 %v850
        %v852 = vpop.xlane.xlu0 %851
        %v853 = vmax.f32 %v441, %v506
        %v854 = vmax.f32 %v853, %v571
        %v855 = vmax.f32 %v854, %v636
        %v856 = vmax.f32 %v855, %v701
        %v857 = vmax.f32 %v856, %v766
        %858 = vmax.xlane.f32.xlu0 %v857
        %v859 = vpop.xlane.xlu0 %858
        %v860 = vmax.f32 %v444, %v509
        %v861 = vmax.f32 %v860, %v574
        %v862 = vmax.f32 %v861, %v639
        %v863 = vmax.f32 %v862, %v704
        %v864 = vmax.f32 %v863, %v769
        %865 = vmax.xlane.f32.xlu0 %v864
        %v866 = vpop.xlane.xlu0 %865
        %v867 = vmax.f32 %v447, %v512
        %v868 = vmax.f32 %v867, %v577
        %v869 = vmax.f32 %v868, %v642
        %v870 = vmax.f32 %v869, %v707
        %v871 = vmax.f32 %v870, %v772
        %872 = vmax.xlane.f32.xlu0 %v871
        %v873 = vpop.xlane.xlu0 %872
        %v874 = vmax.f32 %v450, %v515
        %v875 = vmax.f32 %v874, %v580
        %v876 = vmax.f32 %v875, %v645
        %v877 = vmax.f32 %v876, %v710
        %v878 = vmax.f32 %v877, %v775
        %879 = vmax.xlane.f32.xlu0 %v878
        %v880 = vpop.xlane.xlu0 %879
        %v881 = vmax.f32 %v453, %v518
        %v882 = vmax.f32 %v881, %v583
        %v883 = vmax.f32 %v882, %v648
        %v884 = vmax.f32 %v883, %v713
        %v885 = vmax.f32 %v884, %v778
        %886 = vmax.xlane.f32.xlu0 %v885
        %v887 = vpop.xlane.xlu0 %886
        %v888 = vmax.f32 %v456, %v521
        %v889 = vmax.f32 %v888, %v586
        %v890 = vmax.f32 %v889, %v651
        %v891 = vmax.f32 %v890, %v716
        %v892 = vmax.f32 %v891, %v781
        %893 = vmax.xlane.f32.xlu0 %v892
        %v894 = vpop.xlane.xlu0 %893
        %v895 = vsub.f32 %v411, %v789
        %v896 = vsub.f32 %v476, %v789
        %v897 = vsub.f32 %v541, %v789
        %v898 = vsub.f32 %v606, %v789
        %v899 = vsub.f32 %v671, %v789
        %v900 = vsub.f32 %v736, %v789
        %v901 = vsub.f32 %v414, %v796
        %v902 = vsub.f32 %v479, %v796
        %v903 = vsub.f32 %v544, %v796
        %v904 = vsub.f32 %v609, %v796
        %v905 = vsub.f32 %v674, %v796
        %v906 = vsub.f32 %v739, %v796
        %v907 = vsub.f32 %v417, %v803
        %v908 = vsub.f32 %v482, %v803
        %v909 = vsub.f32 %v547, %v803
        %v910 = vsub.f32 %v612, %v803
        %v911 = vsub.f32 %v677, %v803
        %v912 = vsub.f32 %v742, %v803
        %v913 = vsub.f32 %v420, %v810
        %v914 = vsub.f32 %v485, %v810
        %v915 = vsub.f32 %v550, %v810
        %v916 = vsub.f32 %v615, %v810
        %v917 = vsub.f32 %v680, %v810
        %v918 = vsub.f32 %v745, %v810
        %v919 = vsub.f32 %v423, %v817
        %v920 = vsub.f32 %v488, %v817
        %v921 = vsub.f32 %v553, %v817
        %v922 = vsub.f32 %v618, %v817
        %v923 = vsub.f32 %v683, %v817
        %v924 = vsub.f32 %v748, %v817
        %v925 = vsub.f32 %v426, %v824
        %v926 = vsub.f32 %v491, %v824
        %v927 = vsub.f32 %v556, %v824
        %v928 = vsub.f32 %v621, %v824
        %v929 = vsub.f32 %v686, %v824
        %v930 = vsub.f32 %v751, %v824
        %v931 = vsub.f32 %v429, %v831
        %v932 = vsub.f32 %v494, %v831
        %v933 = vsub.f32 %v559, %v831
        %v934 = vsub.f32 %v624, %v831
        %v935 = vsub.f32 %v689, %v831
        %v936 = vsub.f32 %v754, %v831
        %v937 = vsub.f32 %v432, %v838
        %v938 = vsub.f32 %v497, %v838
        %v939 = vsub.f32 %v562, %v838
        %v940 = vsub.f32 %v627, %v838
        %v941 = vsub.f32 %v692, %v838
        %v942 = vsub.f32 %v757, %v838
        %v943 = vsub.f32 %v435, %v845
        %v944 = vsub.f32 %v500, %v845
        %v945 = vsub.f32 %v565, %v845
        %v946 = vsub.f32 %v630, %v845
        %v947 = vsub.f32 %v695, %v845
        %v948 = vsub.f32 %v760, %v845
        %v949 = vsub.f32 %v438, %v852
        %v950 = vsub.f32 %v503, %v852
        %v951 = vsub.f32 %v568, %v852
        %v952 = vsub.f32 %v633, %v852
        %v953 = vsub.f32 %v698, %v852
        %v954 = vsub.f32 %v763, %v852
        %v955 = vsub.f32 %v441, %v859
        %v956 = vsub.f32 %v506, %v859
        %v957 = vsub.f32 %v571, %v859
        %v958 = vsub.f32 %v636, %v859
        %v959 = vsub.f32 %v701, %v859
        %v960 = vsub.f32 %v766, %v859
        %v961 = vsub.f32 %v444, %v866
        %v962 = vsub.f32 %v509, %v866
        %v963 = vsub.f32 %v574, %v866
        %v964 = vsub.f32 %v639, %v866
        %v965 = vsub.f32 %v704, %v866
        %v966 = vsub.f32 %v769, %v866
        %v967 = vsub.f32 %v447, %v873
        %v968 = vsub.f32 %v512, %v873
        %v969 = vsub.f32 %v577, %v873
        %v970 = vsub.f32 %v642, %v873
        %v971 = vsub.f32 %v707, %v873
        %v972 = vsub.f32 %v772, %v873
        %v973 = vsub.f32 %v450, %v880
        %v974 = vsub.f32 %v515, %v880
        %v975 = vsub.f32 %v580, %v880
        %v976 = vsub.f32 %v645, %v880
        %v977 = vsub.f32 %v710, %v880
        %v978 = vsub.f32 %v775, %v880
        %v979 = vsub.f32 %v453, %v887
        %v980 = vsub.f32 %v518, %v887
        %v981 = vsub.f32 %v583, %v887
        %v982 = vsub.f32 %v648, %v887
        %v983 = vsub.f32 %v713, %v887
        %v984 = vsub.f32 %v778, %v887
        %v985 = vsub.f32 %v456, %v894
        %v986 = vsub.f32 %v521, %v894
        %v987 = vsub.f32 %v586, %v894
        %v988 = vsub.f32 %v651, %v894
        %v989 = vsub.f32 %v716, %v894
        %v990 = vsub.f32 %v781, %v894
        %v991 = vmul.f32 %v895, 1.442695
        %v992 = vpow.pop %v991
        %v993 = vmul.f32 %v896, 1.442695
        %v994 = vpow.pop %v993
        %v995 = vmul.f32 %v897, 1.442695
        %v996 = vpow.pop %v995
        %v997 = vmul.f32 %v898, 1.442695
        %v998 = vpow.pop %v997
        %v999 = vmul.f32 %v899, 1.442695
        %v1000 = vpow.pop %v999
        %v1001 = vmul.f32 %v900, 1.442695
        %v1002 = vpow.pop %v1001
        %v1003 = vmul.f32 %v901, 1.442695
        %v1004 = vpow.pop %v1003
        %v1005 = vmul.f32 %v902, 1.442695
        %v1006 = vpow.pop %v1005
        %v1007 = vmul.f32 %v903, 1.442695
        %v1008 = vpow.pop %v1007
        %v1009 = vmul.f32 %v904, 1.442695
        %v1010 = vpow.pop %v1009
        %v1011 = vmul.f32 %v905, 1.442695
        %v1012 = vpow.pop %v1011
        %v1013 = vmul.f32 %v906, 1.442695
        %v1014 = vpow.pop %v1013
        %v1015 = vmul.f32 %v907, 1.442695
        %v1016 = vpow.pop %v1015
        %v1017 = vmul.f32 %v908, 1.442695
        %v1018 = vpow.pop %v1017
        %v1019 = vmul.f32 %v909, 1.442695
        %v1020 = vpow.pop %v1019
        %v1021 = vmul.f32 %v910, 1.442695
        %v1022 = vpow.pop %v1021
        %v1023 = vmul.f32 %v911, 1.442695
        %v1024 = vpow.pop %v1023
        %v1025 = vmul.f32 %v912, 1.442695
        %v1026 = vpow.pop %v1025
        %v1027 = vmul.f32 %v913, 1.442695
        %v1028 = vpow.pop %v1027
        %v1029 = vmul.f32 %v914, 1.442695
        %v1030 = vpow.pop %v1029
        %v1031 = vmul.f32 %v915, 1.442695
        %v1032 = vpow.pop %v1031
        %v1033 = vmul.f32 %v916, 1.442695
        %v1034 = vpow.pop %v1033
        %v1035 = vmul.f32 %v917, 1.442695
        %v1036 = vpow.pop %v1035
        %v1037 = vmul.f32 %v918, 1.442695
        %v1038 = vpow.pop %v1037
        %v1039 = vmul.f32 %v919, 1.442695
        %v1040 = vpow.pop %v1039
        %v1041 = vmul.f32 %v920, 1.442695
        %v1042 = vpow.pop %v1041
        %v1043 = vmul.f32 %v921, 1.442695
        %v1044 = vpow.pop %v1043
        %v1045 = vmul.f32 %v922, 1.442695
        %v1046 = vpow.pop %v1045
        %v1047 = vmul.f32 %v923, 1.442695
        %v1048 = vpow.pop %v1047
        %v1049 = vmul.f32 %v924, 1.442695
        %v1050 = vpow.pop %v1049
        %v1051 = vmul.f32 %v925, 1.442695
        %v1052 = vpow.pop %v1051
        %v1053 = vmul.f32 %v926, 1.442695
        %v1054 = vpow.pop %v1053
        %v1055 = vmul.f32 %v927, 1.442695
        %v1056 = vpow.pop %v1055
        %v1057 = vmul.f32 %v928, 1.442695
        %v1058 = vpow.pop %v1057
        %v1059 = vmul.f32 %v929, 1.442695
        %v1060 = vpow.pop %v1059
        %v1061 = vmul.f32 %v930, 1.442695
        %v1062 = vpow.pop %v1061
        %v1063 = vmul.f32 %v931, 1.442695
        %v1064 = vpow.pop %v1063
        %v1065 = vmul.f32 %v932, 1.442695
        %v1066 = vpow.pop %v1065
        %v1067 = vmul.f32 %v933, 1.442695
        %v1068 = vpow.pop %v1067
        %v1069 = vmul.f32 %v934, 1.442695
        %v1070 = vpow.pop %v1069
        %v1071 = vmul.f32 %v935, 1.442695
        %v1072 = vpow.pop %v1071
        %v1073 = vmul.f32 %v936, 1.442695
        %v1074 = vpow.pop %v1073
        %v1075 = vmul.f32 %v937, 1.442695
        %v1076 = vpow.pop %v1075
        %v1077 = vmul.f32 %v938, 1.442695
        %v1078 = vpow.pop %v1077
        %v1079 = vmul.f32 %v939, 1.442695
        %v1080 = vpow.pop %v1079
        %v1081 = vmul.f32 %v940, 1.442695
        %v1082 = vpow.pop %v1081
        %v1083 = vmul.f32 %v941, 1.442695
        %v1084 = vpow.pop %v1083
        %v1085 = vmul.f32 %v942, 1.442695
        %v1086 = vpow.pop %v1085
        %v1087 = vmul.f32 %v943, 1.442695
        %v1088 = vpow.pop %v1087
        %v1089 = vmul.f32 %v944, 1.442695
        %v1090 = vpow.pop %v1089
        %v1091 = vmul.f32 %v945, 1.442695
        %v1092 = vpow.pop %v1091
        %v1093 = vmul.f32 %v946, 1.442695
        %v1094 = vpow.pop %v1093
        %v1095 = vmul.f32 %v947, 1.442695
        %v1096 = vpow.pop %v1095
        %v1097 = vmul.f32 %v948, 1.442695
        %v1098 = vpow.pop %v1097
        %v1099 = vmul.f32 %v949, 1.442695
        %v1100 = vpow.pop %v1099
        %v1101 = vmul.f32 %v950, 1.442695
        %v1102 = vpow.pop %v1101
        %v1103 = vmul.f32 %v951, 1.442695
        %v1104 = vpow.pop %v1103
        %v1105 = vmul.f32 %v952, 1.442695
        %v1106 = vpow.pop %v1105
        %v1107 = vmul.f32 %v953, 1.442695
        %v1108 = vpow.pop %v1107
        %v1109 = vmul.f32 %v954, 1.442695
        %v1110 = vpow.pop %v1109
        %v1111 = vmul.f32 %v955, 1.442695
        %v1112 = vpow.pop %v1111
        %v1113 = vmul.f32 %v956, 1.442695
        %v1114 = vpow.pop %v1113
        %v1115 = vmul.f32 %v957, 1.442695
        %v1116 = vpow.pop %v1115
        %v1117 = vmul.f32 %v958, 1.442695
        %v1118 = vpow.pop %v1117
        %v1119 = vmul.f32 %v959, 1.442695
        %v1120 = vpow.pop %v1119
        %v1121 = vmul.f32 %v960, 1.442695
        %v1122 = vpow.pop %v1121
        %v1123 = vmul.f32 %v961, 1.442695
        %v1124 = vpow.pop %v1123
        %v1125 = vmul.f32 %v962, 1.442695
        %v1126 = vpow.pop %v1125
        %v1127 = vmul.f32 %v963, 1.442695
        %v1128 = vpow.pop %v1127
        %v1129 = vmul.f32 %v964, 1.442695
        %v1130 = vpow.pop %v1129
        %v1131 = vmul.f32 %v965, 1.442695
        %v1132 = vpow.pop %v1131
        %v1133 = vmul.f32 %v966, 1.442695
        %v1134 = vpow.pop %v1133
        %v1135 = vmul.f32 %v967, 1.442695
        %v1136 = vpow.pop %v1135
        %v1137 = vmul.f32 %v968, 1.442695
        %v1138 = vpow.pop %v1137
        %v1139 = vmul.f32 %v969, 1.442695
        %v1140 = vpow.pop %v1139
        %v1141 = vmul.f32 %v970, 1.442695
        %v1142 = vpow.pop %v1141
        %v1143 = vmul.f32 %v971, 1.442695
        %v1144 = vpow.pop %v1143
        %v1145 = vmul.f32 %v972, 1.442695
        %v1146 = vpow.pop %v1145
        %v1147 = vmul.f32 %v973, 1.442695
        %v1148 = vpow.pop %v1147
        %v1149 = vmul.f32 %v974, 1.442695
        %v1150 = vpow.pop %v1149
        %v1151 = vmul.f32 %v975, 1.442695
        %v1152 = vpow.pop %v1151
        %v1153 = vmul.f32 %v976, 1.442695
        %v1154 = vpow.pop %v1153
        %v1155 = vmul.f32 %v977, 1.442695
        %v1156 = vpow.pop %v1155
        %v1157 = vmul.f32 %v978, 1.442695
        %v1158 = vpow.pop %v1157
        %v1159 = vmul.f32 %v979, 1.442695
        %v1160 = vpow.pop %v1159
        %v1161 = vmul.f32 %v980, 1.442695
        %v1162 = vpow.pop %v1161
        %v1163 = vmul.f32 %v981, 1.442695
        %v1164 = vpow.pop %v1163
        %v1165 = vmul.f32 %v982, 1.442695
        %v1166 = vpow.pop %v1165
        %v1167 = vmul.f32 %v983, 1.442695
        %v1168 = vpow.pop %v1167
        %v1169 = vmul.f32 %v984, 1.442695
        %v1170 = vpow.pop %v1169
        %v1171 = vmul.f32 %v985, 1.442695
        %v1172 = vpow.pop %v1171
        %v1173 = vmul.f32 %v986, 1.442695
        %v1174 = vpow.pop %v1173
        %v1175 = vmul.f32 %v987, 1.442695
        %v1176 = vpow.pop %v1175
        %v1177 = vmul.f32 %v988, 1.442695
        %v1178 = vpow.pop %v1177
        %v1179 = vmul.f32 %v989, 1.442695
        %v1180 = vpow.pop %v1179
        %v1181 = vmul.f32 %v990, 1.442695
        %v1182 = vpow.pop %v1181
        %v1183 = vadd.f32 %v992, %v994
        %v1184 = vadd.f32 %v1183, %v996
        %v1185 = vadd.f32 %v1184, %v998
        %v1186 = vadd.f32 %v1185, %v1000
        %v1187 = vadd.f32 %v1186, %v1002
        %1188 = vadd.xlane.f32.xlu0 %v1187
        %v1189 = vpop.xlane.xlu0 %1188
        %v1190 = vadd.f32 %v1004, %v1006
        %v1191 = vadd.f32 %v1190, %v1008
        %v1192 = vadd.f32 %v1191, %v1010
        %v1193 = vadd.f32 %v1192, %v1012
        %v1194 = vadd.f32 %v1193, %v1014
        %1195 = vadd.xlane.f32.xlu0 %v1194
        %v1196 = vpop.xlane.xlu0 %1195
        %v1197 = vadd.f32 %v1016, %v1018
        %v1198 = vadd.f32 %v1197, %v1020
        %v1199 = vadd.f32 %v1198, %v1022
        %v1200 = vadd.f32 %v1199, %v1024
        %v1201 = vadd.f32 %v1200, %v1026
        %1202 = vadd.xlane.f32.xlu0 %v1201
        %v1203 = vpop.xlane.xlu0 %1202
        %v1204 = vadd.f32 %v1028, %v1030
        %v1205 = vadd.f32 %v1204, %v1032
        %v1206 = vadd.f32 %v1205, %v1034
        %v1207 = vadd.f32 %v1206, %v1036
        %v1208 = vadd.f32 %v1207, %v1038
        %1209 = vadd.xlane.f32.xlu0 %v1208
        %v1210 = vpop.xlane.xlu0 %1209
        %v1211 = vadd.f32 %v1040, %v1042
        %v1212 = vadd.f32 %v1211, %v1044
        %v1213 = vadd.f32 %v1212, %v1046
        %v1214 = vadd.f32 %v1213, %v1048
        %v1215 = vadd.f32 %v1214, %v1050
        %1216 = vadd.xlane.f32.xlu0 %v1215
        %v1217 = vpop.xlane.xlu0 %1216
        %v1218 = vadd.f32 %v1052, %v1054
        %v1219 = vadd.f32 %v1218, %v1056
        %v1220 = vadd.f32 %v1219, %v1058
        %v1221 = vadd.f32 %v1220, %v1060
        %v1222 = vadd.f32 %v1221, %v1062
        %1223 = vadd.xlane.f32.xlu0 %v1222
        %v1224 = vpop.xlane.xlu0 %1223
        %v1225 = vadd.f32 %v1064, %v1066
        %v1226 = vadd.f32 %v1225, %v1068
        %v1227 = vadd.f32 %v1226, %v1070
        %v1228 = vadd.f32 %v1227, %v1072
        %v1229 = vadd.f32 %v1228, %v1074
        %1230 = vadd.xlane.f32.xlu0 %v1229
        %v1231 = vpop.xlane.xlu0 %1230
        %v1232 = vadd.f32 %v1076, %v1078
        %v1233 = vadd.f32 %v1232, %v1080
        %v1234 = vadd.f32 %v1233, %v1082
        %v1235 = vadd.f32 %v1234, %v1084
        %v1236 = vadd.f32 %v1235, %v1086
        %1237 = vadd.xlane.f32.xlu0 %v1236
        %v1238 = vpop.xlane.xlu0 %1237
        %v1239 = vadd.f32 %v1088, %v1090
        %v1240 = vadd.f32 %v1239, %v1092
        %v1241 = vadd.f32 %v1240, %v1094
        %v1242 = vadd.f32 %v1241, %v1096
        %v1243 = vadd.f32 %v1242, %v1098
        %1244 = vadd.xlane.f32.xlu0 %v1243
        %v1245 = vpop.xlane.xlu0 %1244
        %v1246 = vadd.f32 %v1100, %v1102
        %v1247 = vadd.f32 %v1246, %v1104
        %v1248 = vadd.f32 %v1247, %v1106
        %v1249 = vadd.f32 %v1248, %v1108
        %v1250 = vadd.f32 %v1249, %v1110
        %1251 = vadd.xlane.f32.xlu0 %v1250
        %v1252 = vpop.xlane.xlu0 %1251
        %v1253 = vadd.f32 %v1112, %v1114
        %v1254 = vadd.f32 %v1253, %v1116
        %v1255 = vadd.f32 %v1254, %v1118
        %v1256 = vadd.f32 %v1255, %v1120
        %v1257 = vadd.f32 %v1256, %v1122
        %1258 = vadd.xlane.f32.xlu0 %v1257
        %v1259 = vpop.xlane.xlu0 %1258
        %v1260 = vadd.f32 %v1124, %v1126
        %v1261 = vadd.f32 %v1260, %v1128
        %v1262 = vadd.f32 %v1261, %v1130
        %v1263 = vadd.f32 %v1262, %v1132
        %v1264 = vadd.f32 %v1263, %v1134
        %1265 = vadd.xlane.f32.xlu0 %v1264
        %v1266 = vpop.xlane.xlu0 %1265
        %v1267 = vadd.f32 %v1136, %v1138
        %v1268 = vadd.f32 %v1267, %v1140
        %v1269 = vadd.f32 %v1268, %v1142
        %v1270 = vadd.f32 %v1269, %v1144
        %v1271 = vadd.f32 %v1270, %v1146
        %1272 = vadd.xlane.f32.xlu0 %v1271
        %v1273 = vpop.xlane.xlu0 %1272
        %v1274 = vadd.f32 %v1148, %v1150
        %v1275 = vadd.f32 %v1274, %v1152
        %v1276 = vadd.f32 %v1275, %v1154
        %v1277 = vadd.f32 %v1276, %v1156
        %v1278 = vadd.f32 %v1277, %v1158
        %1279 = vadd.xlane.f32.xlu0 %v1278
        %v1280 = vpop.xlane.xlu0 %1279
        %v1281 = vadd.f32 %v1160, %v1162
        %v1282 = vadd.f32 %v1281, %v1164
        %v1283 = vadd.f32 %v1282, %v1166
        %v1284 = vadd.f32 %v1283, %v1168
        %v1285 = vadd.f32 %v1284, %v1170
        %1286 = vadd.xlane.f32.xlu0 %v1285
        %v1287 = vpop.xlane.xlu0 %1286
        %v1288 = vadd.f32 %v1172, %v1174
        %v1289 = vadd.f32 %v1288, %v1176
        %v1290 = vadd.f32 %v1289, %v1178
        %v1291 = vadd.f32 %v1290, %v1180
        %v1292 = vadd.f32 %v1291, %v1182
        %1293 = vadd.xlane.f32.xlu0 %v1292
        %v1294 = vpop.xlane.xlu0 %1293
        %v1295 = vrcp.pop %v1189
        %v1296 = vmul.f32 %v1189, %v1295
        %v1297 = vsub.f32 1.0, %v1296
        %v1298 = vmul.f32 %v1295, %v1297
        %v1299 = vadd.f32 %v1295, %v1298
        %vm1300 = vweird.f32 %v1189
        %vm1301 = vweird.f32 %v1295
        %vm1302 = vmor %vm1300, %vm1301
        %v1303 = vsel %vm1302, %v1295, %v1299
        %v1304 = vand.u32 2147483647, %v1189
        %vm1305 = vcmp.eq.f32.partialorder %v1304, 8.507059e+37
        %v1306 = vand.u32 %v1189, 2147483648
        %v1307 = vor.u32 1.1754944e-38, %v1306
        %v1308 = vsel %vm1305, %v1307, %v1303
        %v1309 = vrcp.pop %v1196
        %v1310 = vmul.f32 %v1196, %v1309
        %v1311 = vsub.f32 1.0, %v1310
        %v1312 = vmul.f32 %v1309, %v1311
        %v1313 = vadd.f32 %v1309, %v1312
        %vm1314 = vweird.f32 %v1196
        %vm1315 = vweird.f32 %v1309
        %vm1316 = vmor %vm1314, %vm1315
        %v1317 = vsel %vm1316, %v1309, %v1313
        %v1318 = vand.u32 2147483647, %v1196
        %vm1319 = vcmp.eq.f32.partialorder %v1318, 8.507059e+37
        %v1320 = vand.u32 %v1196, 2147483648
        %v1321 = vor.u32 1.1754944e-38, %v1320
        %v1322 = vsel %vm1319, %v1321, %v1317
        %v1323 = vrcp.pop %v1203
        %v1324 = vmul.f32 %v1203, %v1323
        %v1325 = vsub.f32 1.0, %v1324
        %v1326 = vmul.f32 %v1323, %v1325
        %v1327 = vadd.f32 %v1323, %v1326
        %vm1328 = vweird.f32 %v1203
        %vm1329 = vweird.f32 %v1323
        %vm1330 = vmor %vm1328, %vm1329
        %v1331 = vsel %vm1330, %v1323, %v1327
        %v1332 = vand.u32 2147483647, %v1203
        %vm1333 = vcmp.eq.f32.partialorder %v1332, 8.507059e+37
        %v1334 = vand.u32 %v1203, 2147483648
        %v1335 = vor.u32 1.1754944e-38, %v1334
        %v1336 = vsel %vm1333, %v1335, %v1331
        %v1337 = vrcp.pop %v1210
        %v1338 = vmul.f32 %v1210, %v1337
        %v1339 = vsub.f32 1.0, %v1338
        %v1340 = vmul.f32 %v1337, %v1339
        %v1341 = vadd.f32 %v1337, %v1340
        %vm1342 = vweird.f32 %v1210
        %vm1343 = vweird.f32 %v1337
        %vm1344 = vmor %vm1342, %vm1343
        %v1345 = vsel %vm1344, %v1337, %v1341
        %v1346 = vand.u32 2147483647, %v1210
        %vm1347 = vcmp.eq.f32.partialorder %v1346, 8.507059e+37
        %v1348 = vand.u32 %v1210, 2147483648
        %v1349 = vor.u32 1.1754944e-38, %v1348
        %v1350 = vsel %vm1347, %v1349, %v1345
        %v1351 = vrcp.pop %v1217
        %v1352 = vmul.f32 %v1217, %v1351
        %v1353 = vsub.f32 1.0, %v1352
        %v1354 = vmul.f32 %v1351, %v1353
        %v1355 = vadd.f32 %v1351, %v1354
        %vm1356 = vweird.f32 %v1217
        %vm1357 = vweird.f32 %v1351
        %vm1358 = vmor %vm1356, %vm1357
        %v1359 = vsel %vm1358, %v1351, %v1355
        %v1360 = vand.u32 2147483647, %v1217
        %vm1361 = vcmp.eq.f32.partialorder %v1360, 8.507059e+37
        %v1362 = vand.u32 %v1217, 2147483648
        %v1363 = vor.u32 1.1754944e-38, %v1362
        %v1364 = vsel %vm1361, %v1363, %v1359
        %v1365 = vrcp.pop %v1224
        %v1366 = vmul.f32 %v1224, %v1365
        %v1367 = vsub.f32 1.0, %v1366
        %v1368 = vmul.f32 %v1365, %v1367
        %v1369 = vadd.f32 %v1365, %v1368
        %vm1370 = vweird.f32 %v1224
        %vm1371 = vweird.f32 %v1365
        %vm1372 = vmor %vm1370, %vm1371
        %v1373 = vsel %vm1372, %v1365, %v1369
        %v1374 = vand.u32 2147483647, %v1224
        %vm1375 = vcmp.eq.f32.partialorder %v1374, 8.507059e+37
        %v1376 = vand.u32 %v1224, 2147483648
        %v1377 = vor.u32 1.1754944e-38, %v1376
        %v1378 = vsel %vm1375, %v1377, %v1373
        %v1379 = vrcp.pop %v1231
        %v1380 = vmul.f32 %v1231, %v1379
        %v1381 = vsub.f32 1.0, %v1380
        %v1382 = vmul.f32 %v1379, %v1381
        %v1383 = vadd.f32 %v1379, %v1382
        %vm1384 = vweird.f32 %v1231
        %vm1385 = vweird.f32 %v1379
        %vm1386 = vmor %vm1384, %vm1385
        %v1387 = vsel %vm1386, %v1379, %v1383
        %v1388 = vand.u32 2147483647, %v1231
        %vm1389 = vcmp.eq.f32.partialorder %v1388, 8.507059e+37
        %v1390 = vand.u32 %v1231, 2147483648
        %v1391 = vor.u32 1.1754944e-38, %v1390
        %v1392 = vsel %vm1389, %v1391, %v1387
        %v1393 = vrcp.pop %v1238
        %v1394 = vmul.f32 %v1238, %v1393
        %v1395 = vsub.f32 1.0, %v1394
        %v1396 = vmul.f32 %v1393, %v1395
        %v1397 = vadd.f32 %v1393, %v1396
        %vm1398 = vweird.f32 %v1238
        %vm1399 = vweird.f32 %v1393
        %vm1400 = vmor %vm1398, %vm1399
        %v1401 = vsel %vm1400, %v1393, %v1397
        %v1402 = vand.u32 2147483647, %v1238
        %vm1403 = vcmp.eq.f32.partialorder %v1402, 8.507059e+37
        %v1404 = vand.u32 %v1238, 2147483648
        %v1405 = vor.u32 1.1754944e-38, %v1404
        %v1406 = vsel %vm1403, %v1405, %v1401
        %v1407 = vrcp.pop %v1245
        %v1408 = vmul.f32 %v1245, %v1407
        %v1409 = vsub.f32 1.0, %v1408
        %v1410 = vmul.f32 %v1407, %v1409
        %v1411 = vadd.f32 %v1407, %v1410
        %vm1412 = vweird.f32 %v1245
        %vm1413 = vweird.f32 %v1407
        %vm1414 = vmor %vm1412, %vm1413
        %v1415 = vsel %vm1414, %v1407, %v1411
        %v1416 = vand.u32 2147483647, %v1245
        %vm1417 = vcmp.eq.f32.partialorder %v1416, 8.507059e+37
        %v1418 = vand.u32 %v1245, 2147483648
        %v1419 = vor.u32 1.1754944e-38, %v1418
        %v1420 = vsel %vm1417, %v1419, %v1415
        %v1421 = vrcp.pop %v1252
        %v1422 = vmul.f32 %v1252, %v1421
        %v1423 = vsub.f32 1.0, %v1422
        %v1424 = vmul.f32 %v1421, %v1423
        %v1425 = vadd.f32 %v1421, %v1424
        %vm1426 = vweird.f32 %v1252
        %vm1427 = vweird.f32 %v1421
        %vm1428 = vmor %vm1426, %vm1427
        %v1429 = vsel %vm1428, %v1421, %v1425
        %v1430 = vand.u32 2147483647, %v1252
        %vm1431 = vcmp.eq.f32.partialorder %v1430, 8.507059e+37
        %v1432 = vand.u32 %v1252, 2147483648
        %v1433 = vor.u32 1.1754944e-38, %v1432
        %v1434 = vsel %vm1431, %v1433, %v1429
        %v1435 = vrcp.pop %v1259
        %v1436 = vmul.f32 %v1259, %v1435
        %v1437 = vsub.f32 1.0, %v1436
        %v1438 = vmul.f32 %v1435, %v1437
        %v1439 = vadd.f32 %v1435, %v1438
        %vm1440 = vweird.f32 %v1259
        %vm1441 = vweird.f32 %v1435
        %vm1442 = vmor %vm1440, %vm1441
        %v1443 = vsel %vm1442, %v1435, %v1439
        %v1444 = vand.u32 2147483647, %v1259
        %vm1445 = vcmp.eq.f32.partialorder %v1444, 8.507059e+37
        %v1446 = vand.u32 %v1259, 2147483648
        %v1447 = vor.u32 1.1754944e-38, %v1446
        %v1448 = vsel %vm1445, %v1447, %v1443
        %v1449 = vrcp.pop %v1266
        %v1450 = vmul.f32 %v1266, %v1449
        %v1451 = vsub.f32 1.0, %v1450
        %v1452 = vmul.f32 %v1449, %v1451
        %v1453 = vadd.f32 %v1449, %v1452
        %vm1454 = vweird.f32 %v1266
        %vm1455 = vweird.f32 %v1449
        %vm1456 = vmor %vm1454, %vm1455
        %v1457 = vsel %vm1456, %v1449, %v1453
        %v1458 = vand.u32 2147483647, %v1266
        %vm1459 = vcmp.eq.f32.partialorder %v1458, 8.507059e+37
        %v1460 = vand.u32 %v1266, 2147483648
        %v1461 = vor.u32 1.1754944e-38, %v1460
        %v1462 = vsel %vm1459, %v1461, %v1457
        %v1463 = vrcp.pop %v1273
        %v1464 = vmul.f32 %v1273, %v1463
        %v1465 = vsub.f32 1.0, %v1464
        %v1466 = vmul.f32 %v1463, %v1465
        %v1467 = vadd.f32 %v1463, %v1466
        %vm1468 = vweird.f32 %v1273
        %vm1469 = vweird.f32 %v1463
        %vm1470 = vmor %vm1468, %vm1469
        %v1471 = vsel %vm1470, %v1463, %v1467
        %v1472 = vand.u32 2147483647, %v1273
        %vm1473 = vcmp.eq.f32.partialorder %v1472, 8.507059e+37
        %v1474 = vand.u32 %v1273, 2147483648
        %v1475 = vor.u32 1.1754944e-38, %v1474
        %v1476 = vsel %vm1473, %v1475, %v1471
        %v1477 = vrcp.pop %v1280
        %v1478 = vmul.f32 %v1280, %v1477
        %v1479 = vsub.f32 1.0, %v1478
        %v1480 = vmul.f32 %v1477, %v1479
        %v1481 = vadd.f32 %v1477, %v1480
        %vm1482 = vweird.f32 %v1280
        %vm1483 = vweird.f32 %v1477
        %vm1484 = vmor %vm1482, %vm1483
        %v1485 = vsel %vm1484, %v1477, %v1481
        %v1486 = vand.u32 2147483647, %v1280
        %vm1487 = vcmp.eq.f32.partialorder %v1486, 8.507059e+37
        %v1488 = vand.u32 %v1280, 2147483648
        %v1489 = vor.u32 1.1754944e-38, %v1488
        %v1490 = vsel %vm1487, %v1489, %v1485
        %v1491 = vrcp.pop %v1287
        %v1492 = vmul.f32 %v1287, %v1491
        %v1493 = vsub.f32 1.0, %v1492
        %v1494 = vmul.f32 %v1491, %v1493
        %v1495 = vadd.f32 %v1491, %v1494
        %vm1496 = vweird.f32 %v1287
        %vm1497 = vweird.f32 %v1491
        %vm1498 = vmor %vm1496, %vm1497
        %v1499 = vsel %vm1498, %v1491, %v1495
        %v1500 = vand.u32 2147483647, %v1287
        %vm1501 = vcmp.eq.f32.partialorder %v1500, 8.507059e+37
        %v1502 = vand.u32 %v1287, 2147483648
        %v1503 = vor.u32 1.1754944e-38, %v1502
        %v1504 = vsel %vm1501, %v1503, %v1499
        %v1505 = vrcp.pop %v1294
        %v1506 = vmul.f32 %v1294, %v1505
        %v1507 = vsub.f32 1.0, %v1506
        %v1508 = vmul.f32 %v1505, %v1507
        %v1509 = vadd.f32 %v1505, %v1508
        %vm1510 = vweird.f32 %v1294
        %vm1511 = vweird.f32 %v1505
        %vm1512 = vmor %vm1510, %vm1511
        %v1513 = vsel %vm1512, %v1505, %v1509
        %v1514 = vand.u32 2147483647, %v1294
        %vm1515 = vcmp.eq.f32.partialorder %v1514, 8.507059e+37
        %v1516 = vand.u32 %v1294, 2147483648
        %v1517 = vor.u32 1.1754944e-38, %v1516
        %v1518 = vsel %vm1515, %v1517, %v1513
        %v1519 = vmul.f32 %v992, %v1308
        %v1520 = vmul.f32 %v994, %v1308
        %v1521 = vmul.f32 %v996, %v1308
        %v1522 = vmul.f32 %v998, %v1308
        %v1523 = vmul.f32 %v1000, %v1308
        %v1524 = vmul.f32 %v1002, %v1308
        %v1525 = vmul.f32 %v1004, %v1322
        %v1526 = vmul.f32 %v1006, %v1322
        %v1527 = vmul.f32 %v1008, %v1322
        %v1528 = vmul.f32 %v1010, %v1322
        %v1529 = vmul.f32 %v1012, %v1322
        %v1530 = vmul.f32 %v1014, %v1322
        %v1531 = vmul.f32 %v1016, %v1336
        %v1532 = vmul.f32 %v1018, %v1336
        %v1533 = vmul.f32 %v1020, %v1336
        %v1534 = vmul.f32 %v1022, %v1336
        %v1535 = vmul.f32 %v1024, %v1336
        %v1536 = vmul.f32 %v1026, %v1336
        %v1537 = vmul.f32 %v1028, %v1350
        %v1538 = vmul.f32 %v1030, %v1350
        %v1539 = vmul.f32 %v1032, %v1350
        %v1540 = vmul.f32 %v1034, %v1350
        %v1541 = vmul.f32 %v1036, %v1350
        %v1542 = vmul.f32 %v1038, %v1350
        %v1543 = vmul.f32 %v1040, %v1364
        %v1544 = vmul.f32 %v1042, %v1364
        %v1545 = vmul.f32 %v1044, %v1364
        %v1546 = vmul.f32 %v1046, %v1364
        %v1547 = vmul.f32 %v1048, %v1364
        %v1548 = vmul.f32 %v1050, %v1364
        %v1549 = vmul.f32 %v1052, %v1378
        %v1550 = vmul.f32 %v1054, %v1378
        %v1551 = vmul.f32 %v1056, %v1378
        %v1552 = vmul.f32 %v1058, %v1378
        %v1553 = vmul.f32 %v1060, %v1378
        %v1554 = vmul.f32 %v1062, %v1378
        %v1555 = vmul.f32 %v1064, %v1392
        %v1556 = vmul.f32 %v1066, %v1392
        %v1557 = vmul.f32 %v1068, %v1392
        %v1558 = vmul.f32 %v1070, %v1392
        %v1559 = vmul.f32 %v1072, %v1392
        %v1560 = vmul.f32 %v1074, %v1392
        %v1561 = vmul.f32 %v1076, %v1406
        %v1562 = vmul.f32 %v1078, %v1406
        %v1563 = vmul.f32 %v1080, %v1406
        %v1564 = vmul.f32 %v1082, %v1406
        %v1565 = vmul.f32 %v1084, %v1406
        %v1566 = vmul.f32 %v1086, %v1406
        %v1567 = vmul.f32 %v1088, %v1420
        %v1568 = vmul.f32 %v1090, %v1420
        %v1569 = vmul.f32 %v1092, %v1420
        %v1570 = vmul.f32 %v1094, %v1420
        %v1571 = vmul.f32 %v1096, %v1420
        %v1572 = vmul.f32 %v1098, %v1420
        %v1573 = vmul.f32 %v1100, %v1434
        %v1574 = vmul.f32 %v1102, %v1434
        %v1575 = vmul.f32 %v1104, %v1434
        %v1576 = vmul.f32 %v1106, %v1434
        %v1577 = vmul.f32 %v1108, %v1434
        %v1578 = vmul.f32 %v1110, %v1434
        %v1579 = vmul.f32 %v1112, %v1448
        %v1580 = vmul.f32 %v1114, %v1448
        %v1581 = vmul.f32 %v1116, %v1448
        %v1582 = vmul.f32 %v1118, %v1448
        %v1583 = vmul.f32 %v1120, %v1448
        %v1584 = vmul.f32 %v1122, %v1448
        %v1585 = vmul.f32 %v1124, %v1462
        %v1586 = vmul.f32 %v1126, %v1462
        %v1587 = vmul.f32 %v1128, %v1462
        %v1588 = vmul.f32 %v1130, %v1462
        %v1589 = vmul.f32 %v1132, %v1462
        %v1590 = vmul.f32 %v1134, %v1462
        %v1591 = vmul.f32 %v1136, %v1476
        %v1592 = vmul.f32 %v1138, %v1476
        %v1593 = vmul.f32 %v1140, %v1476
        %v1594 = vmul.f32 %v1142, %v1476
        %v1595 = vmul.f32 %v1144, %v1476
        %v1596 = vmul.f32 %v1146, %v1476
        %v1597 = vmul.f32 %v1148, %v1490
        %v1598 = vmul.f32 %v1150, %v1490
        %v1599 = vmul.f32 %v1152, %v1490
        %v1600 = vmul.f32 %v1154, %v1490
        %v1601 = vmul.f32 %v1156, %v1490
        %v1602 = vmul.f32 %v1158, %v1490
        %v1603 = vmul.f32 %v1160, %v1504
        %v1604 = vmul.f32 %v1162, %v1504
        %v1605 = vmul.f32 %v1164, %v1504
        %v1606 = vmul.f32 %v1166, %v1504
        %v1607 = vmul.f32 %v1168, %v1504
        %v1608 = vmul.f32 %v1170, %v1504
        %v1609 = vmul.f32 %v1172, %v1518
        %v1610 = vmul.f32 %v1174, %v1518
        %v1611 = vmul.f32 %v1176, %v1518
        %v1612 = vmul.f32 %v1178, %v1518
        %v1613 = vmul.f32 %v1180, %v1518
        %v1614 = vmul.f32 %v1182, %v1518
        %1615 = vst [vmem:[%s261] sm:$0xff] %v1519
        %1616 = vst [vmem:[%s261 + $0x8] sm:$0xff] %v1520
        %1617 = vst [vmem:[%s261 + $0x10] sm:$0xff] %v1521
        %1618 = vst [vmem:[%s261 + $0x18] sm:$0xff] %v1522
        %1619 = vst [vmem:[%s261 + $0x20] sm:$0xff] %v1523
        %1620 = vst [vmem:[%s261 + $0x28] sm:$0xff] %v1524
        %1621 = vst [vmem:[%s261 + $0x30] sm:$0xff] %v1525
        %1622 = vst [vmem:[%s261 + $0x38] sm:$0xff] %v1526
        %1623 = vst [vmem:[%s261 + $0x40] sm:$0xff] %v1527
        %1624 = vst [vmem:[%s261 + $0x48] sm:$0xff] %v1528
        %1625 = vst [vmem:[%s261 + $0x50] sm:$0xff] %v1529
        %1626 = vst [vmem:[%s261 + $0x58] sm:$0xff] %v1530
        %1627 = vst [vmem:[%s261 + $0x60] sm:$0xff] %v1531
        %1628 = vst [vmem:[%s261 + $0x68] sm:$0xff] %v1532
        %1629 = vst [vmem:[%s261 + $0x70] sm:$0xff] %v1533
        %1630 = vst [vmem:[%s261 + $0x78] sm:$0xff] %v1534
        %1631 = vst [vmem:[%s261 + $0x80] sm:$0xff] %v1535
        %1632 = vst [vmem:[%s261 + $0x88] sm:$0xff] %v1536
        %1633 = vst [vmem:[%s261 + $0x90] sm:$0xff] %v1537
        %1634 = vst [vmem:[%s261 + $0x98] sm:$0xff] %v1538
        %1635 = vst [vmem:[%s261 + $0xa0] sm:$0xff] %v1539
        %1636 = vst [vmem:[%s261 + $0xa8] sm:$0xff] %v1540
        %1637 = vst [vmem:[%s261 + $0xb0] sm:$0xff] %v1541
        %1638 = vst [vmem:[%s261 + $0xb8] sm:$0xff] %v1542
        %1639 = vst [vmem:[%s261 + $0xc0] sm:$0xff] %v1543
        %1640 = vst [vmem:[%s261 + $0xc8] sm:$0xff] %v1544
        %1641 = vst [vmem:[%s261 + $0xd0] sm:$0xff] %v1545
        %1642 = vst [vmem:[%s261 + $0xd8] sm:$0xff] %v1546
        %1643 = vst [vmem:[%s261 + $0xe0] sm:$0xff] %v1547
        %1644 = vst [vmem:[%s261 + $0xe8] sm:$0xff] %v1548
        %1645 = vst [vmem:[%s261 + $0xf0] sm:$0xff] %v1549
        %1646 = vst [vmem:[%s261 + $0xf8] sm:$0xff] %v1550
        %1647 = vst [vmem:[%s261 + $0x100] sm:$0xff] %v1551
        %1648 = vst [vmem:[%s261 + $0x108] sm:$0xff] %v1552
        %1649 = vst [vmem:[%s261 + $0x110] sm:$0xff] %v1553
        %1650 = vst [vmem:[%s261 + $0x118] sm:$0xff] %v1554
        %1651 = vst [vmem:[%s261 + $0x120] sm:$0xff] %v1555
        %1652 = vst [vmem:[%s261 + $0x128] sm:$0xff] %v1556
        %1653 = vst [vmem:[%s261 + $0x130] sm:$0xff] %v1557
        %1654 = vst [vmem:[%s261 + $0x138] sm:$0xff] %v1558
        %1655 = vst [vmem:[%s261 + $0x140] sm:$0xff] %v1559
        %1656 = vst [vmem:[%s261 + $0x148] sm:$0xff] %v1560
        %1657 = vst [vmem:[%s261 + $0x150] sm:$0xff] %v1561
        %1658 = vst [vmem:[%s261 + $0x158] sm:$0xff] %v1562
        %1659 = vst [vmem:[%s261 + $0x160] sm:$0xff] %v1563
        %1660 = vst [vmem:[%s261 + $0x168] sm:$0xff] %v1564
        %1661 = vst [vmem:[%s261 + $0x170] sm:$0xff] %v1565
        %1662 = vst [vmem:[%s261 + $0x178] sm:$0xff] %v1566
        %1663 = vst [vmem:[%s261 + $0x180] sm:$0xff] %v1567
        %1664 = vst [vmem:[%s261 + $0x188] sm:$0xff] %v1568
        %1665 = vst [vmem:[%s261 + $0x190] sm:$0xff] %v1569
        %1666 = vst [vmem:[%s261 + $0x198] sm:$0xff] %v1570
        %1667 = vst [vmem:[%s261 + $0x1a0] sm:$0xff] %v1571
        %1668 = vst [vmem:[%s261 + $0x1a8] sm:$0xff] %v1572
        %1669 = vst [vmem:[%s261 + $0x1b0] sm:$0xff] %v1573
        %1670 = vst [vmem:[%s261 + $0x1b8] sm:$0xff] %v1574
        %1671 = vst [vmem:[%s261 + $0x1c0] sm:$0xff] %v1575
        %1672 = vst [vmem:[%s261 + $0x1c8] sm:$0xff] %v1576
        %1673 = vst [vmem:[%s261 + $0x1d0] sm:$0xff] %v1577
        %1674 = vst [vmem:[%s261 + $0x1d8] sm:$0xff] %v1578
        %1675 = vst [vmem:[%s261 + $0x1e0] sm:$0xff] %v1579
        %1676 = vst [vmem:[%s261 + $0x1e8] sm:$0xff] %v1580
        %1677 = vst [vmem:[%s261 + $0x1f0] sm:$0xff] %v1581
        %1678 = vst [vmem:[%s261 + $0x1f8] sm:$0xff] %v1582
        %1679 = vst [vmem:[%s261 + $0x200] sm:$0xff] %v1583
        %1680 = vst [vmem:[%s261 + $0x208] sm:$0xff] %v1584
        %1681 = vst [vmem:[%s261 + $0x210] sm:$0xff] %v1585
        %1682 = vst [vmem:[%s261 + $0x218] sm:$0xff] %v1586
        %1683 = vst [vmem:[%s261 + $0x220] sm:$0xff] %v1587
        %1684 = vst [vmem:[%s261 + $0x228] sm:$0xff] %v1588
        %1685 = vst [vmem:[%s261 + $0x230] sm:$0xff] %v1589
        %1686 = vst [vmem:[%s261 + $0x238] sm:$0xff] %v1590
        %1687 = vst [vmem:[%s261 + $0x240] sm:$0xff] %v1591
        %1688 = vst [vmem:[%s261 + $0x248] sm:$0xff] %v1592
        %1689 = vst [vmem:[%s261 + $0x250] sm:$0xff] %v1593
        %1690 = vst [vmem:[%s261 + $0x258] sm:$0xff] %v1594
        %1691 = vst [vmem:[%s261 + $0x260] sm:$0xff] %v1595
        %1692 = vst [vmem:[%s261 + $0x268] sm:$0xff] %v1596
        %1693 = vst [vmem:[%s261 + $0x270] sm:$0xff] %v1597
        %1694 = vst [vmem:[%s261 + $0x278] sm:$0xff] %v1598
        %1695 = vst [vmem:[%s261 + $0x280] sm:$0xff] %v1599
        %1696 = vst [vmem:[%s261 + $0x288] sm:$0xff] %v1600
        %1697 = vst [vmem:[%s261 + $0x290] sm:$0xff] %v1601
        %1698 = vst [vmem:[%s261 + $0x298] sm:$0xff] %v1602
        %1699 = vst [vmem:[%s261 + $0x2a0] sm:$0xff] %v1603
        %1700 = vst [vmem:[%s261 + $0x2a8] sm:$0xff] %v1604
        %1701 = vst [vmem:[%s261 + $0x2b0] sm:$0xff] %v1605
        %1702 = vst [vmem:[%s261 + $0x2b8] sm:$0xff] %v1606
        %1703 = vst [vmem:[%s261 + $0x2c0] sm:$0xff] %v1607
        %1704 = vst [vmem:[%s261 + $0x2c8] sm:$0xff] %v1608
        %1705 = vst [vmem:[%s261 + $0x2d0] sm:$0xff] %v1609
        %1706 = vst [vmem:[%s261 + $0x2d8] sm:$0xff] %v1610
        %1707 = vst [vmem:[%s261 + $0x2e0] sm:$0xff] %v1611
        %1708 = vst [vmem:[%s261 + $0x2e8] sm:$0xff] %v1612
        %1709 = vst [vmem:[%s261 + $0x2f0] sm:$0xff] %v1613
        %1710 = vst [vmem:[%s261 + $0x2f8] sm:$0xff] %v1614
        %v1711 = vld [vmem:[#allocation7] sm:$0xff]
        %v1712 = vld [vmem:[#allocation7 + $0x8] sm:$0xff]
        %v1713 = vld [vmem:[#allocation7 + $0x10] sm:$0xff]
        %v1714 = vld [vmem:[#allocation7 + $0x18] sm:$0xff]
        %v1715 = vld [vmem:[#allocation7 + $0x20] sm:$0xff]
        %v1716 = vld [vmem:[#allocation7 + $0x28] sm:$0xff]
        %v1717 = vld [vmem:[#allocation7 + $0x30] sm:$0xff]
        %v1718 = vld [vmem:[#allocation7 + $0x38] sm:$0xff]
        %v1719 = vld [vmem:[#allocation7 + $0x40] sm:$0xff]
        %v1720 = vld [vmem:[#allocation7 + $0x48] sm:$0xff]
        %v1721 = vld [vmem:[#allocation7 + $0x50] sm:$0xff]
        %v1722 = vld [vmem:[#allocation7 + $0x58] sm:$0xff]
        %v1723 = vld [vmem:[#allocation7 + $0x60] sm:$0xff]
        %v1724 = vld [vmem:[#allocation7 + $0x68] sm:$0xff]
        %v1725 = vld [vmem:[#allocation7 + $0x70] sm:$0xff]
        %v1726 = vld [vmem:[#allocation7 + $0x78] sm:$0xff]
        %v1727 = vld [vmem:[#allocation7 + $0x80] sm:$0xff]
        %v1728 = vld [vmem:[#allocation7 + $0x88] sm:$0xff]
        %v1729 = vld [vmem:[#allocation7 + $0x90] sm:$0xff]
        %v1730 = vld [vmem:[#allocation7 + $0x98] sm:$0xff]
        %v1731 = vld [vmem:[#allocation7 + $0xa0] sm:$0xff]
        %v1732 = vld [vmem:[#allocation7 + $0xa8] sm:$0xff]
        %v1733 = vld [vmem:[#allocation7 + $0xb0] sm:$0xff]
        %v1734 = vld [vmem:[#allocation7 + $0xb8] sm:$0xff]
        %v1735 = vld [vmem:[#allocation7 + $0xc0] sm:$0xff]
        %v1736 = vld [vmem:[#allocation7 + $0xc8] sm:$0xff]
        %v1737 = vld [vmem:[#allocation7 + $0xd0] sm:$0xff]
        %v1738 = vld [vmem:[#allocation7 + $0xd8] sm:$0xff]
        %v1739 = vld [vmem:[#allocation7 + $0xe0] sm:$0xff]
        %v1740 = vld [vmem:[#allocation7 + $0xe8] sm:$0xff]
        %v1741 = vld [vmem:[#allocation7 + $0xf0] sm:$0xff]
        %v1742 = vld [vmem:[#allocation7 + $0xf8] sm:$0xff]
        %v1743 = vld [vmem:[#allocation7 + $0x100] sm:$0xff]
        %v1744 = vld [vmem:[#allocation7 + $0x108] sm:$0xff]
        %v1745 = vld [vmem:[#allocation7 + $0x110] sm:$0xff]
        %v1746 = vld [vmem:[#allocation7 + $0x118] sm:$0xff]
        %v1747 = vld [vmem:[#allocation7 + $0x120] sm:$0xff]
        %v1748 = vld [vmem:[#allocation7 + $0x128] sm:$0xff]
        %v1749 = vld [vmem:[#allocation7 + $0x130] sm:$0xff]
        %v1750 = vld [vmem:[#allocation7 + $0x138] sm:$0xff]
        %v1751 = vld [vmem:[#allocation7 + $0x140] sm:$0xff]
        %v1752 = vld [vmem:[#allocation7 + $0x148] sm:$0xff]
        %v1753 = vld [vmem:[#allocation7 + $0x150] sm:$0xff]
        %v1754 = vld [vmem:[#allocation7 + $0x158] sm:$0xff]
        %v1755 = vld [vmem:[#allocation7 + $0x160] sm:$0xff]
        %v1756 = vld [vmem:[#allocation7 + $0x168] sm:$0xff]
        %v1757 = vld [vmem:[#allocation7 + $0x170] sm:$0xff]
        %v1758 = vld [vmem:[#allocation7 + $0x178] sm:$0xff]
        %v1759 = vld [vmem:[#allocation7 + $0x180] sm:$0xff]
        %v1760 = vld [vmem:[#allocation7 + $0x188] sm:$0xff]
        %v1761 = vld [vmem:[#allocation7 + $0x190] sm:$0xff]
        %v1762 = vld [vmem:[#allocation7 + $0x198] sm:$0xff]
        %v1763 = vld [vmem:[#allocation7 + $0x1a0] sm:$0xff]
        %v1764 = vld [vmem:[#allocation7 + $0x1a8] sm:$0xff]
        %v1765 = vld [vmem:[#allocation7 + $0x1b0] sm:$0xff]
        %v1766 = vld [vmem:[#allocation7 + $0x1b8] sm:$0xff]
        %v1767 = vld [vmem:[#allocation7 + $0x1c0] sm:$0xff]
        %v1768 = vld [vmem:[#allocation7 + $0x1c8] sm:$0xff]
        %v1769 = vld [vmem:[#allocation7 + $0x1d0] sm:$0xff]
        %v1770 = vld [vmem:[#allocation7 + $0x1d8] sm:$0xff]
        %v1771 = vld [vmem:[#allocation7 + $0x1e0] sm:$0xff]
        %v1772 = vld [vmem:[#allocation7 + $0x1e8] sm:$0xff]
        %v1773 = vld [vmem:[#allocation7 + $0x1f0] sm:$0xff]
        %v1774 = vld [vmem:[#allocation7 + $0x1f8] sm:$0xff]
        %v1775 = vld [vmem:[#allocation7 + $0x200] sm:$0xff]
        %v1776 = vld [vmem:[#allocation7 + $0x208] sm:$0xff]
        %v1777 = vld [vmem:[#allocation7 + $0x210] sm:$0xff]
        %v1778 = vld [vmem:[#allocation7 + $0x218] sm:$0xff]
        %v1779 = vld [vmem:[#allocation7 + $0x220] sm:$0xff]
        %v1780 = vld [vmem:[#allocation7 + $0x228] sm:$0xff]
        %v1781 = vld [vmem:[#allocation7 + $0x230] sm:$0xff]
        %v1782 = vld [vmem:[#allocation7 + $0x238] sm:$0xff]
        %v1783 = vld [vmem:[#allocation7 + $0x240] sm:$0xff]
        %v1784 = vld [vmem:[#allocation7 + $0x248] sm:$0xff]
        %v1785 = vld [vmem:[#allocation7 + $0x250] sm:$0xff]
        %v1786 = vld [vmem:[#allocation7 + $0x258] sm:$0xff]
        %v1787 = vld [vmem:[#allocation7 + $0x260] sm:$0xff]
        %v1788 = vld [vmem:[#allocation7 + $0x268] sm:$0xff]
        %v1789 = vld [vmem:[#allocation7 + $0x270] sm:$0xff]
        %v1790 = vld [vmem:[#allocation7 + $0x278] sm:$0xff]
        %v1791 = vld [vmem:[#allocation7 + $0x280] sm:$0xff]
        %v1792 = vld [vmem:[#allocation7 + $0x288] sm:$0xff]
        %v1793 = vld [vmem:[#allocation7 + $0x290] sm:$0xff]
        %v1794 = vld [vmem:[#allocation7 + $0x298] sm:$0xff]
        %v1795 = vld [vmem:[#allocation7 + $0x2a0] sm:$0xff]
        %v1796 = vld [vmem:[#allocation7 + $0x2a8] sm:$0xff]
        %v1797 = vld [vmem:[#allocation7 + $0x2b0] sm:$0xff]
        %v1798 = vld [vmem:[#allocation7 + $0x2b8] sm:$0xff]
        %v1799 = vld [vmem:[#allocation7 + $0x2c0] sm:$0xff]
        %v1800 = vld [vmem:[#allocation7 + $0x2c8] sm:$0xff]
        %v1801 = vld [vmem:[#allocation7 + $0x2d0] sm:$0xff]
        %v1802 = vld [vmem:[#allocation7 + $0x2d8] sm:$0xff]
        %v1803 = vld [vmem:[#allocation7 + $0x2e0] sm:$0xff]
        %v1804 = vld [vmem:[#allocation7 + $0x2e8] sm:$0xff]
        %v1805 = vld [vmem:[#allocation7 + $0x2f0] sm:$0xff]
        %v1806 = vld [vmem:[#allocation7 + $0x2f8] sm:$0xff]
        %1807 = vmatpush.msra.mxu0 %v1726
        %1808 = vmatpush.msra.mxu0 %v1725
        %1809 = vmatpush.msra.mxu0 %v1724
        %1810 = vmatpush.msra.mxu0 %v1723
        %1811 = vmatpush.msra.mxu0 %v1722
        %1812 = vmatpush.msra.mxu0 %v1721
        %1813 = vmatpush.msra.mxu0 %v1720
        %1814 = vmatpush.msra.mxu0 %v1719
        %1815 = vmatpush.msra.mxu0 %v1718
        %1816 = vmatpush.msra.mxu0 %v1717
        %1817 = vmatpush.msra.mxu0 %v1716
        %1818 = vmatpush.msra.mxu0 %v1715
        %1819 = vmatpush.msra.mxu0 %v1714
        %1820 = vmatpush.msra.mxu0 %v1713
        %1821 = vmatpush.msra.mxu0 %v1712
        %1822 = vmatpush.msra.mxu0 %v1711
        %1823 = vmatmul.f32.gmra.mxu0 %v1519
        %v1824 = vpop.f32.mrf.mxu0
        %v1825 = vadd.f32 0.0, %v1824
        %1826 = vmatmul.f32.gmra.mxu0 %v1525
        %v1827 = vpop.f32.mrf.mxu0
        %v1828 = vadd.f32 0.0, %v1827
        %1829 = vmatmul.f32.gmra.mxu0 %v1531
        %v1830 = vpop.f32.mrf.mxu0
        %v1831 = vadd.f32 0.0, %v1830
        %1832 = vmatmul.f32.gmra.mxu0 %v1537
        %v1833 = vpop.f32.mrf.mxu0
        %v1834 = vadd.f32 0.0, %v1833
        %1835 = vmatmul.f32.gmra.mxu0 %v1543
        %v1836 = vpop.f32.mrf.mxu0
        %v1837 = vadd.f32 0.0, %v1836
        %1838 = vmatmul.f32.gmra.mxu0 %v1549
        %v1839 = vpop.f32.mrf.mxu0
        %v1840 = vadd.f32 0.0, %v1839
        %1841 = vmatmul.f32.gmra.mxu0 %v1555
        %v1842 = vpop.f32.mrf.mxu0
        %v1843 = vadd.f32 0.0, %v1842
        %1844 = vmatmul.f32.gmra.mxu0 %v1561
        %v1845 = vpop.f32.mrf.mxu0
        %v1846 = vadd.f32 0.0, %v1845
        %1847 = vmatmul.f32.gmra.mxu0 %v1567
        %v1848 = vpop.f32.mrf.mxu0
        %v1849 = vadd.f32 0.0, %v1848
        %1850 = vmatmul.f32.gmra.mxu0 %v1573
        %v1851 = vpop.f32.mrf.mxu0
        %v1852 = vadd.f32 0.0, %v1851
        %1853 = vmatmul.f32.gmra.mxu0 %v1579
        %v1854 = vpop.f32.mrf.mxu0
        %v1855 = vadd.f32 0.0, %v1854
        %1856 = vmatmul.f32.gmra.mxu0 %v1585
        %v1857 = vpop.f32.mrf.mxu0
        %v1858 = vadd.f32 0.0, %v1857
        %1859 = vmatmul.f32.gmra.mxu0 %v1591
        %v1860 = vpop.f32.mrf.mxu0
        %v1861 = vadd.f32 0.0, %v1860
        %1862 = vmatmul.f32.gmra.mxu0 %v1597
        %v1863 = vpop.f32.mrf.mxu0
        %v1864 = vadd.f32 0.0, %v1863
        %1865 = vmatmul.f32.gmra.mxu0 %v1603
        %v1866 = vpop.f32.mrf.mxu0
        %v1867 = vadd.f32 0.0, %v1866
        %1868 = vmatmul.f32.gmra.mxu0 %v1609
        %v1869 = vpop.f32.mrf.mxu0
        %v1870 = vadd.f32 0.0, %v1869
        %1871 = vdwg.mxu0
        %1872 = vmatpush.msra.mxu0 %v1742
        %1873 = vmatpush.msra.mxu0 %v1741
        %1874 = vmatpush.msra.mxu0 %v1740
        %1875 = vmatpush.msra.mxu0 %v1739
        %1876 = vmatpush.msra.mxu0 %v1738
        %1877 = vmatpush.msra.mxu0 %v1737
        %1878 = vmatpush.msra.mxu0 %v1736
        %1879 = vmatpush.msra.mxu0 %v1735
        %1880 = vmatpush.msra.mxu0 %v1734
        %1881 = vmatpush.msra.mxu0 %v1733
        %1882 = vmatpush.msra.mxu0 %v1732
        %1883 = vmatpush.msra.mxu0 %v1731
        %1884 = vmatpush.msra.mxu0 %v1730
        %1885 = vmatpush.msra.mxu0 %v1729
        %1886 = vmatpush.msra.mxu0 %v1728
        %1887 = vmatpush.msra.mxu0 %v1727
        %1888 = vmatmul.f32.gmra.mxu0 %v1520
        %v1889 = vpop.f32.mrf.mxu0
        %v1890 = vadd.f32 %v1825, %v1889
        %1891 = vmatmul.f32.gmra.mxu0 %v1526
        %v1892 = vpop.f32.mrf.mxu0
        %v1893 = vadd.f32 %v1828, %v1892
        %1894 = vmatmul.f32.gmra.mxu0 %v1532
        %v1895 = vpop.f32.mrf.mxu0
        %v1896 = vadd.f32 %v1831, %v1895
        %1897 = vmatmul.f32.gmra.mxu0 %v1538
        %v1898 = vpop.f32.mrf.mxu0
        %v1899 = vadd.f32 %v1834, %v1898
        %1900 = vmatmul.f32.gmra.mxu0 %v1544
        %v1901 = vpop.f32.mrf.mxu0
        %v1902 = vadd.f32 %v1837, %v1901
        %1903 = vmatmul.f32.gmra.mxu0 %v1550
        %v1904 = vpop.f32.mrf.mxu0
        %v1905 = vadd.f32 %v1840, %v1904
        %1906 = vmatmul.f32.gmra.mxu0 %v1556
        %v1907 = vpop.f32.mrf.mxu0
        %v1908 = vadd.f32 %v1843, %v1907
        %1909 = vmatmul.f32.gmra.mxu0 %v1562
        %v1910 = vpop.f32.mrf.mxu0
        %v1911 = vadd.f32 %v1846, %v1910
        %1912 = vmatmul.f32.gmra.mxu0 %v1568
        %v1913 = vpop.f32.mrf.mxu0
        %v1914 = vadd.f32 %v1849, %v1913
        %1915 = vmatmul.f32.gmra.mxu0 %v1574
        %v1916 = vpop.f32.mrf.mxu0
        %v1917 = vadd.f32 %v1852, %v1916
        %1918 = vmatmul.f32.gmra.mxu0 %v1580
        %v1919 = vpop.f32.mrf.mxu0
        %v1920 = vadd.f32 %v1855, %v1919
        %1921 = vmatmul.f32.gmra.mxu0 %v1586
        %v1922 = vpop.f32.mrf.mxu0
        %v1923 = vadd.f32 %v1858, %v1922
        %1924 = vmatmul.f32.gmra.mxu0 %v1592
        %v1925 = vpop.f32.mrf.mxu0
        %v1926 = vadd.f32 %v1861, %v1925
        %1927 = vmatmul.f32.gmra.mxu0 %v1598
        %v1928 = vpop.f32.mrf.mxu0
        %v1929 = vadd.f32 %v1864, %v1928
        %1930 = vmatmul.f32.gmra.mxu0 %v1604
        %v1931 = vpop.f32.mrf.mxu0
        %v1932 = vadd.f32 %v1867, %v1931
        %1933 = vmatmul.f32.gmra.mxu0 %v1610
        %v1934 = vpop.f32.mrf.mxu0
        %v1935 = vadd.f32 %v1870, %v1934
        %1936 = vdwg.mxu0
        %1937 = vmatpush.msra.mxu0 %v1758
        %1938 = vmatpush.msra.mxu0 %v1757
        %1939 = vmatpush.msra.mxu0 %v1756
        %1940 = vmatpush.msra.mxu0 %v1755
        %1941 = vmatpush.msra.mxu0 %v1754
        %1942 = vmatpush.msra.mxu0 %v1753
        %1943 = vmatpush.msra.mxu0 %v1752
        %1944 = vmatpush.msra.mxu0 %v1751
        %1945 = vmatpush.msra.mxu0 %v1750
        %1946 = vmatpush.msra.mxu0 %v1749
        %1947 = vmatpush.msra.mxu0 %v1748
        %1948 = vmatpush.msra.mxu0 %v1747
        %1949 = vmatpush.msra.mxu0 %v1746
        %1950 = vmatpush.msra.mxu0 %v1745
        %1951 = vmatpush.msra.mxu0 %v1744
        %1952 = vmatpush.msra.mxu0 %v1743
        %1953 = vmatmul.f32.gmra.mxu0 %v1521
        %v1954 = vpop.f32.mrf.mxu0
        %v1955 = vadd.f32 %v1890, %v1954
        %1956 = vmatmul.f32.gmra.mxu0 %v1527
        %v1957 = vpop.f32.mrf.mxu0
        %v1958 = vadd.f32 %v1893, %v1957
        %1959 = vmatmul.f32.gmra.mxu0 %v1533
        %v1960 = vpop.f32.mrf.mxu0
        %v1961 = vadd.f32 %v1896, %v1960
        %1962 = vmatmul.f32.gmra.mxu0 %v1539
        %v1963 = vpop.f32.mrf.mxu0
        %v1964 = vadd.f32 %v1899, %v1963
        %1965 = vmatmul.f32.gmra.mxu0 %v1545
        %v1966 = vpop.f32.mrf.mxu0
        %v1967 = vadd.f32 %v1902, %v1966
        %1968 = vmatmul.f32.gmra.mxu0 %v1551
        %v1969 = vpop.f32.mrf.mxu0
        %v1970 = vadd.f32 %v1905, %v1969
        %1971 = vmatmul.f32.gmra.mxu0 %v1557
        %v1972 = vpop.f32.mrf.mxu0
        %v1973 = vadd.f32 %v1908, %v1972
        %1974 = vmatmul.f32.gmra.mxu0 %v1563
        %v1975 = vpop.f32.mrf.mxu0
        %v1976 = vadd.f32 %v1911, %v1975
        %1977 = vmatmul.f32.gmra.mxu0 %v1569
        %v1978 = vpop.f32.mrf.mxu0
        %v1979 = vadd.f32 %v1914, %v1978
        %1980 = vmatmul.f32.gmra.mxu0 %v1575
        %v1981 = vpop.f32.mrf.mxu0
        %v1982 = vadd.f32 %v1917, %v1981
        %1983 = vmatmul.f32.gmra.mxu0 %v1581
        %v1984 = vpop.f32.mrf.mxu0
        %v1985 = vadd.f32 %v1920, %v1984
        %1986 = vmatmul.f32.gmra.mxu0 %v1587
        %v1987 = vpop.f32.mrf.mxu0
        %v1988 = vadd.f32 %v1923, %v1987
        %1989 = vmatmul.f32.gmra.mxu0 %v1593
        %v1990 = vpop.f32.mrf.mxu0
        %v1991 = vadd.f32 %v1926, %v1990
        %1992 = vmatmul.f32.gmra.mxu0 %v1599
        %v1993 = vpop.f32.mrf.mxu0
        %v1994 = vadd.f32 %v1929, %v1993
        %1995 = vmatmul.f32.gmra.mxu0 %v1605
        %v1996 = vpop.f32.mrf.mxu0
        %v1997 = vadd.f32 %v1932, %v1996
        %1998 = vmatmul.f32.gmra.mxu0 %v1611
        %v1999 = vpop.f32.mrf.mxu0
        %v2000 = vadd.f32 %v1935, %v1999
        %2001 = vdwg.mxu0
        %2002 = vmatpush.msra.mxu0 %v1774
        %2003 = vmatpush.msra.mxu0 %v1773
        %2004 = vmatpush.msra.mxu0 %v1772
        %2005 = vmatpush.msra.mxu0 %v1771
        %2006 = vmatpush.msra.mxu0 %v1770
        %2007 = vmatpush.msra.mxu0 %v1769
        %2008 = vmatpush.msra.mxu0 %v1768
        %2009 = vmatpush.msra.mxu0 %v1767
        %2010 = vmatpush.msra.mxu0 %v1766
        %2011 = vmatpush.msra.mxu0 %v1765
        %2012 = vmatpush.msra.mxu0 %v1764
        %2013 = vmatpush.msra.mxu0 %v1763
        %2014 = vmatpush.msra.mxu0 %v1762
        %2015 = vmatpush.msra.mxu0 %v1761
        %2016 = vmatpush.msra.mxu0 %v1760
        %2017 = vmatpush.msra.mxu0 %v1759
        %2018 = vmatmul.f32.gmra.mxu0 %v1522
        %v2019 = vpop.f32.mrf.mxu0
        %v2020 = vadd.f32 %v1955, %v2019
        %2021 = vmatmul.f32.gmra.mxu0 %v1528
        %v2022 = vpop.f32.mrf.mxu0
        %v2023 = vadd.f32 %v1958, %v2022
        %2024 = vmatmul.f32.gmra.mxu0 %v1534
        %v2025 = vpop.f32.mrf.mxu0
        %v2026 = vadd.f32 %v1961, %v2025
        %2027 = vmatmul.f32.gmra.mxu0 %v1540
        %v2028 = vpop.f32.mrf.mxu0
        %v2029 = vadd.f32 %v1964, %v2028
        %2030 = vmatmul.f32.gmra.mxu0 %v1546
        %v2031 = vpop.f32.mrf.mxu0
        %v2032 = vadd.f32 %v1967, %v2031
        %2033 = vmatmul.f32.gmra.mxu0 %v1552
        %v2034 = vpop.f32.mrf.mxu0
        %v2035 = vadd.f32 %v1970, %v2034
        %2036 = vmatmul.f32.gmra.mxu0 %v1558
        %v2037 = vpop.f32.mrf.mxu0
        %v2038 = vadd.f32 %v1973, %v2037
        %2039 = vmatmul.f32.gmra.mxu0 %v1564
        %v2040 = vpop.f32.mrf.mxu0
        %v2041 = vadd.f32 %v1976, %v2040
        %2042 = vmatmul.f32.gmra.mxu0 %v1570
        %v2043 = vpop.f32.mrf.mxu0
        %v2044 = vadd.f32 %v1979, %v2043
        %2045 = vmatmul.f32.gmra.mxu0 %v1576
        %v2046 = vpop.f32.mrf.mxu0
        %v2047 = vadd.f32 %v1982, %v2046
        %2048 = vmatmul.f32.gmra.mxu0 %v1582
        %v2049 = vpop.f32.mrf.mxu0
        %v2050 = vadd.f32 %v1985, %v2049
        %2051 = vmatmul.f32.gmra.mxu0 %v1588
        %v2052 = vpop.f32.mrf.mxu0
        %v2053 = vadd.f32 %v1988, %v2052
        %2054 = vmatmul.f32.gmra.mxu0 %v1594
        %v2055 = vpop.f32.mrf.mxu0
        %v2056 = vadd.f32 %v1991, %v2055
        %2057 = vmatmul.f32.gmra.mxu0 %v1600
        %v2058 = vpop.f32.mrf.mxu0
        %v2059 = vadd.f32 %v1994, %v2058
        %2060 = vmatmul.f32.gmra.mxu0 %v1606
        %v2061 = vpop.f32.mrf.mxu0
        %v2062 = vadd.f32 %v1997, %v2061
        %2063 = vmatmul.f32.gmra.mxu0 %v1612
        %v2064 = vpop.f32.mrf.mxu0
        %v2065 = vadd.f32 %v2000, %v2064
        %2066 = vdwg.mxu0
        %2067 = vmatpush.msra.mxu0 %v1790
        %2068 = vmatpush.msra.mxu0 %v1789
        %2069 = vmatpush.msra.mxu0 %v1788
        %2070 = vmatpush.msra.mxu0 %v1787
        %2071 = vmatpush.msra.mxu0 %v1786
        %2072 = vmatpush.msra.mxu0 %v1785
        %2073 = vmatpush.msra.mxu0 %v1784
        %2074 = vmatpush.msra.mxu0 %v1783
        %2075 = vmatpush.msra.mxu0 %v1782
        %2076 = vmatpush.msra.mxu0 %v1781
        %2077 = vmatpush.msra.mxu0 %v1780
        %2078 = vmatpush.msra.mxu0 %v1779
        %2079 = vmatpush.msra.mxu0 %v1778
        %2080 = vmatpush.msra.mxu0 %v1777
        %2081 = vmatpush.msra.mxu0 %v1776
        %2082 = vmatpush.msra.mxu0 %v1775
        %2083 = vmatmul.f32.gmra.mxu0 %v1523
        %v2084 = vpop.f32.mrf.mxu0
        %v2085 = vadd.f32 %v2020, %v2084
        %2086 = vmatmul.f32.gmra.mxu0 %v1529
        %v2087 = vpop.f32.mrf.mxu0
        %v2088 = vadd.f32 %v2023, %v2087
        %2089 = vmatmul.f32.gmra.mxu0 %v1535
        %v2090 = vpop.f32.mrf.mxu0
        %v2091 = vadd.f32 %v2026, %v2090
        %2092 = vmatmul.f32.gmra.mxu0 %v1541
        %v2093 = vpop.f32.mrf.mxu0
        %v2094 = vadd.f32 %v2029, %v2093
        %2095 = vmatmul.f32.gmra.mxu0 %v1547
        %v2096 = vpop.f32.mrf.mxu0
        %v2097 = vadd.f32 %v2032, %v2096
        %2098 = vmatmul.f32.gmra.mxu0 %v1553
        %v2099 = vpop.f32.mrf.mxu0
        %v2100 = vadd.f32 %v2035, %v2099
        %2101 = vmatmul.f32.gmra.mxu0 %v1559
        %v2102 = vpop.f32.mrf.mxu0
        %v2103 = vadd.f32 %v2038, %v2102
        %2104 = vmatmul.f32.gmra.mxu0 %v1565
        %v2105 = vpop.f32.mrf.mxu0
        %v2106 = vadd.f32 %v2041, %v2105
        %2107 = vmatmul.f32.gmra.mxu0 %v1571
        %v2108 = vpop.f32.mrf.mxu0
        %v2109 = vadd.f32 %v2044, %v2108
        %2110 = vmatmul.f32.gmra.mxu0 %v1577
        %v2111 = vpop.f32.mrf.mxu0
        %v2112 = vadd.f32 %v2047, %v2111
        %2113 = vmatmul.f32.gmra.mxu0 %v1583
        %v2114 = vpop.f32.mrf.mxu0
        %v2115 = vadd.f32 %v2050, %v2114
        %2116 = vmatmul.f32.gmra.mxu0 %v1589
        %v2117 = vpop.f32.mrf.mxu0
        %v2118 = vadd.f32 %v2053, %v2117
        %2119 = vmatmul.f32.gmra.mxu0 %v1595
        %v2120 = vpop.f32.mrf.mxu0
        %v2121 = vadd.f32 %v2056, %v2120
        %2122 = vmatmul.f32.gmra.mxu0 %v1601
        %v2123 = vpop.f32.mrf.mxu0
        %v2124 = vadd.f32 %v2059, %v2123
        %2125 = vmatmul.f32.gmra.mxu0 %v1607
        %v2126 = vpop.f32.mrf.mxu0
        %v2127 = vadd.f32 %v2062, %v2126
        %2128 = vmatmul.f32.gmra.mxu0 %v1613
        %v2129 = vpop.f32.mrf.mxu0
        %v2130 = vadd.f32 %v2065, %v2129
        %2131 = vdwg.mxu0
        %2132 = vmatpush.msra.mxu0 %v1806
        %2133 = vmatpush.msra.mxu0 %v1805
        %2134 = vmatpush.msra.mxu0 %v1804
        %2135 = vmatpush.msra.mxu0 %v1803
        %2136 = vmatpush.msra.mxu0 %v1802
        %2137 = vmatpush.msra.mxu0 %v1801
        %2138 = vmatpush.msra.mxu0 %v1800
        %2139 = vmatpush.msra.mxu0 %v1799
        %2140 = vmatpush.msra.mxu0 %v1798
        %2141 = vmatpush.msra.mxu0 %v1797
        %2142 = vmatpush.msra.mxu0 %v1796
        %2143 = vmatpush.msra.mxu0 %v1795
        %2144 = vmatpush.msra.mxu0 %v1794
        %2145 = vmatpush.msra.mxu0 %v1793
        %2146 = vmatpush.msra.mxu0 %v1792
        %2147 = vmatpush.msra.mxu0 %v1791
        %2148 = vmatmul.f32.gmra.mxu0 %v1524
        %v2149 = vpop.f32.mrf.mxu0
        %v2150 = vadd.f32 %v2085, %v2149
        %2151 = vmatmul.f32.gmra.mxu0 %v1530
        %v2152 = vpop.f32.mrf.mxu0
        %v2153 = vadd.f32 %v2088, %v2152
        %2154 = vmatmul.f32.gmra.mxu0 %v1536
        %v2155 = vpop.f32.mrf.mxu0
        %v2156 = vadd.f32 %v2091, %v2155
        %2157 = vmatmul.f32.gmra.mxu0 %v1542
        %v2158 = vpop.f32.mrf.mxu0
        %v2159 = vadd.f32 %v2094, %v2158
        %2160 = vmatmul.f32.gmra.mxu0 %v1548
        %v2161 = vpop.f32.mrf.mxu0
        %v2162 = vadd.f32 %v2097, %v2161
        %2163 = vmatmul.f32.gmra.mxu0 %v1554
        %v2164 = vpop.f32.mrf.mxu0
        %v2165 = vadd.f32 %v2100, %v2164
        %2166 = vmatmul.f32.gmra.mxu0 %v1560
        %v2167 = vpop.f32.mrf.mxu0
        %v2168 = vadd.f32 %v2103, %v2167
        %2169 = vmatmul.f32.gmra.mxu0 %v1566
        %v2170 = vpop.f32.mrf.mxu0
        %v2171 = vadd.f32 %v2106, %v2170
        %2172 = vmatmul.f32.gmra.mxu0 %v1572
        %v2173 = vpop.f32.mrf.mxu0
        %v2174 = vadd.f32 %v2109, %v2173
        %2175 = vmatmul.f32.gmra.mxu0 %v1578
        %v2176 = vpop.f32.mrf.mxu0
        %v2177 = vadd.f32 %v2112, %v2176
        %2178 = vmatmul.f32.gmra.mxu0 %v1584
        %v2179 = vpop.f32.mrf.mxu0
        %v2180 = vadd.f32 %v2115, %v2179
        %2181 = vmatmul.f32.gmra.mxu0 %v1590
        %v2182 = vpop.f32.mrf.mxu0
        %v2183 = vadd.f32 %v2118, %v2182
        %2184 = vmatmul.f32.gmra.mxu0 %v1596
        %v2185 = vpop.f32.mrf.mxu0
        %v2186 = vadd.f32 %v2121, %v2185
        %2187 = vmatmul.f32.gmra.mxu0 %v1602
        %v2188 = vpop.f32.mrf.mxu0
        %v2189 = vadd.f32 %v2124, %v2188
        %2190 = vmatmul.f32.gmra.mxu0 %v1608
        %v2191 = vpop.f32.mrf.mxu0
        %v2192 = vadd.f32 %v2127, %v2191
        %2193 = vmatmul.f32.gmra.mxu0 %v1614
        %v2194 = vpop.f32.mrf.mxu0
        %v2195 = vadd.f32 %v2130, %v2194
        %2196 = vdwg.mxu0
        %2197 = vst [vmem:[%s254] sm:$0xff] %v2150
        %2198 = vst [vmem:[%s254 + $0x8] sm:$0xff] %v2153
        %2199 = vst [vmem:[%s254 + $0x10] sm:$0xff] %v2156
        %2200 = vst [vmem:[%s254 + $0x18] sm:$0xff] %v2159
        %2201 = vst [vmem:[%s254 + $0x20] sm:$0xff] %v2162
        %2202 = vst [vmem:[%s254 + $0x28] sm:$0xff] %v2165
        %2203 = vst [vmem:[%s254 + $0x30] sm:$0xff] %v2168
        %2204 = vst [vmem:[%s254 + $0x38] sm:$0xff] %v2171
        %2205 = vst [vmem:[%s254 + $0x40] sm:$0xff] %v2174
        %2206 = vst [vmem:[%s254 + $0x48] sm:$0xff] %v2177
        %2207 = vst [vmem:[%s254 + $0x50] sm:$0xff] %v2180
        %2208 = vst [vmem:[%s254 + $0x58] sm:$0xff] %v2183
        %2209 = vst [vmem:[%s254 + $0x60] sm:$0xff] %v2186
        %2210 = vst [vmem:[%s254 + $0x68] sm:$0xff] %v2189
        %2211 = vst [vmem:[%s254 + $0x70] sm:$0xff] %v2192
        %2212 = vst [vmem:[%s254 + $0x78] sm:$0xff] %v2195
        %s2213 = sand.u32 %s102, 1
        %s2214 = scalar_lea.sflag [#allocation4], %s2213
        %s2215 = sand.u32 %s102, 1
        %s2216 = smul.addr %s2215, 128
        %s2217 = scalar_lea.vmem [#allocation8], %s2216
        %s2218 = sand.u32 %s128, 1
        %s2219 = scalar_lea.sflag [#allocation10], %s2218
        %s2220 = sand.u32 %s128, 1
        %s2221 = smul.addr %s2220, 768
        %s2222 = scalar_lea.vmem [#allocation9], %s2221
        // Predicated region
        $region45: #{tpu_custom_call.1} parent=31 // pred_check
          %p2223 = pneg %p112
        $region46: #{tpu_custom_call.1} parent=31 // pred_check_branch
          %2225 = sbr.rel (%p2223) target = $region48
        $region47: #{tpu_custom_call.1} parent=31 // pred_region
          %s2226 = smul.u32 16, %s26
          %2228 = vsyncadd %s2214, 0
          %s2229 = smul.addr %s2226, 8
          %s2230 = scalar_lea.hbm %s3, %s2229
          %s2231 = sshll.u32 %s2217, 4
          %s2232 = int_to_ptr.vmem [resolvable:$true] %s2231
          %s2233 = sshll.u32 %s2230, 4
          %s2234 = int_to_ptr.hbm [resolvable:$true] %s2233
          %2239 = dma.vmem_to_hbm [thread:$0]  %s2232, 2048, %s2234, %s2214, 128, 128, 8
        $region48: #{tpu_custom_call.1} parent=31 // pred_fallthru
          _
        // Predicated region
        $region49: #{tpu_custom_call.1} parent=31 // pred_check
          %p2240 = pneg %p138
        $region50: #{tpu_custom_call.1} parent=31 // pred_check_branch
          %2242 = sbr.rel (%p2240) target = $region52
        $region51: #{tpu_custom_call.1} parent=31 // pred_region
          %s2243 = smul.u32 16, %s26
          %2245 = vsyncadd %s2219, 0
          %s2246 = smul.addr %s2243, 6
          %s2247 = smul.addr %s2246, 8
          %s2248 = scalar_lea.hbm %s4, %s2247
          %s2249 = sshll.u32 %s2222, 4
          %s2250 = int_to_ptr.vmem [resolvable:$true] %s2249
          %s2251 = sshll.u32 %s2248, 4
          %s2252 = int_to_ptr.hbm [resolvable:$true] %s2251
          %2257 = dma.vmem_to_hbm [thread:$0]  %s2250, 12288, %s2252, %s2219, 768, 768, 48
        $region52: #{tpu_custom_call.1} parent=31 // pred_fallthru
          _
      $region32: #{tpu_custom_call.1} parent=5 // pred_fallthru
        _
      %p2258 = scmp.le.s32.totalorder 2, %s21
      // Predicated region
      $region53: #{tpu_custom_call.1} parent=5 // pred_check
        %p2259 = pneg %p2258
      $region54: #{tpu_custom_call.1} parent=5 // pred_check_branch
        %2261 = sbr.rel (%p2259) target = $region56
      $region55: #{tpu_custom_call.1} parent=5 // pred_region
        %s2262 = ssub.s32 %s21, 2
        // Predicated region
        $region57: #{tpu_custom_call.1} parent=55 // pred_check
          %p2263 = pneg %p118
        $region58: #{tpu_custom_call.1} parent=55 // pred_check_branch
          %2265 = sbr.rel (%p2263) target = $region60
        $region59: #{tpu_custom_call.1} parent=55 // pred_region
          %s2266 = sand.u32 %s103, 1
          %s2267 = scalar_lea.sflag [#allocation4], %s2266
          %s2268 = sand.u32 %s103, 1
          %s2269 = smul.addr %s2268, 128
          %s2270 = scalar_lea.vmem [#allocation8], %s2269
          %2272 = dma.done %s2267, 2048
        $region60: #{tpu_custom_call.1} parent=55 // pred_fallthru
          _
        // Predicated region
        $region61: #{tpu_custom_call.1} parent=55 // pred_check
          %p2273 = pneg %p144
        $region62: #{tpu_custom_call.1} parent=55 // pred_check_branch
          %2275 = sbr.rel (%p2273) target = $region64
        $region63: #{tpu_custom_call.1} parent=55 // pred_region
          %s2276 = sand.u32 %s129, 1
          %s2277 = scalar_lea.sflag [#allocation10], %s2276
          %s2278 = sand.u32 %s129, 1
          %s2279 = smul.addr %s2278, 768
          %s2280 = scalar_lea.vmem [#allocation9], %s2279
          %2282 = dma.done %s2277, 12288
        $region64: #{tpu_custom_call.1} parent=55 // pred_fallthru
          _
      $region56: #{tpu_custom_call.1} parent=5 // pred_fallthru
        _
    $region6: #{tpu_custom_call.1} parent=1 // loop_footer
      %s25 = sadd.s32 1, %s21
    $region7: #{tpu_custom_call.1} parent=1 // loop_footer_branch
      %20 = sbr.rel target = $region3
    $region8: #{tpu_custom_call.1} parent=1 // loop_exit
      _
    %2283 = vsyncpa [#allocation3], 1
    %s2284 = scalar_lea.sflag [#allocation3], 1
    %2285 = vsyncpa %s2284, 1
    %2286 = vsyncpa [#allocation6], 1
    %2287 = vsyncpa [#allocation4], 1
    %s2288 = scalar_lea.sflag [#allocation4], 1
    %2289 = vsyncpa %s2288, 1
    %2290 = vsyncpa [#allocation10], 1
    %s2291 = scalar_lea.sflag [#allocation10], 1
    %2292 = vsyncpa %s2291, 1

</llo_original>
